<compile_context>
chip_gen: v6e
topology: v6e:2x2x1
jax: 0.10.0
libtpu: 0.0.40
codegen_flags: <defaults>
</compile_context>

<pallas_src>
import jax
import jax.numpy as jnp
from jax import lax
from jax.experimental import pallas as pl
from jax.experimental.pallas import tpu as pltpu


def _round_up(n, m):
    return ((n + m - 1) // m) * m


# ----------------------------------------------------------------------------
# Pallas kernel factory: one time-chunk of the tanh recurrence + FC head.
# ----------------------------------------------------------------------------
def _make_kernel(*, Tc, Bp, H, T_real, T_pad):
    need_mask = (T_pad != T_real)   # static: only true when T was padded

    def kernel(x_ref,      # [Tc*Bp, D]  f32  chunk of inputs (time-major, flat)
               h0_ref,     # [Bp, Hp]    f32  initial hidden
               w_ih_ref,   # [D, Hp]     f32  (transposed, zero-padded)
               w_hh_ref,   # [Hp, Hp]    f32  (transposed, zero-padded)
               b_ref,      # [1, Hp]     f32  b_ih + b_hh (zero-padded)
               fc_w_ref,   # [1, Hp]     f32  fc weight row (zero-padded)
               fc_b_ref,   # [1, 1]      f32  fc bias
               xout_ref,   # [Tc*Bp, Hp] f32  out: hidden states (+ y in lane H)
               h_ref,      # VMEM [Bp, Hp]    scratch: hidden carried across chunks
               ):
        # First chunk: seed the persistent hidden-state scratch from h0.
        @pl.when(pl.program_id(0) == 0)
        def _():
            h_ref[...] = h0_ref[...]

        # Hoisted input projection + bias for the WHOLE chunk, staged directly
        # into the output block (each row is read once before it is overwritten
        # with the hidden state).  One MXU matmul, off the serial critical path.
        xout_ref[...] = (
            jnp.dot(x_ref[...], w_ih_ref[...], preferred_element_type=jnp.float32)
            + b_ref[...])

        w_hh = w_hh_ref[...]                 # hoisted load; lives in vregs
        chunk_t0 = pl.program_id(0) * Tc     # global timestep of this chunk's row 0

        def step(t, h):
            r = pl.multiple_of(t * Bp, Bp)   # Bp % 8 == 0 -> aligned sublanes
            h_new = jnp.tanh(
                xout_ref[pl.ds(r, Bp), :]    # reads the staged projection row
                + jnp.dot(h, w_hh, preferred_element_type=jnp.float32))
            xout_ref[pl.ds(r, Bp), :] = h_new   # full 128-lane unmasked store
            if need_mask:
                # Padded (beyond T_real) timesteps must not advance the carry.
                h_new = jnp.where(chunk_t0 + t < T_real, h_new, h)
            return h_new                     # h carried in registers

        unroll = True if Tc <= 32 else 8
        h_fin = lax.fori_loop(0, Tc, step, h_ref[...], unroll=unroll)
        h_ref[...] = h_fin

        # FC + sigmoid head for the whole chunk on VPU + XLU (no N=1 MXU matmul).
        # Merge the result into spare padded lane H of the lane-dense output
        # block with a full-width unmasked store (no narrow/masked writeback).
        xo = xout_ref[...]
        y = jax.nn.sigmoid(
            jnp.sum(xo * fc_w_ref[...], axis=-1, keepdims=True) + fc_b_ref[...])
        lane = lax.broadcasted_iota(jnp.int32, xo.shape, dimension=1)
        xout_ref[...] = jnp.where(lane == H, y, xo)

    return kernel


def _run_kernel(x2d, h0_p, w_ih_p, w_hh_p, b_p, fc_w_p, fc_b_p, *,
                Tc, Bp, H, T_real, T_pad):
    TBp, D = x2d.shape                    # TBp = T_pad * Bp
    Hp = h0_p.shape[1]
    chunk = Tc * Bp
    nt = TBp // chunk

    kernel = _make_kernel(Tc=Tc, Bp=Bp, H=H, T_real=T_real, T_pad=T_pad)

    grid_spec = pltpu.PrefetchScalarGridSpec(
        num_scalar_prefetch=0,
        grid=(nt,),
        in_specs=[
            pl.BlockSpec((chunk, D), lambda t: (t, 0)),   # x chunk
            pl.BlockSpec((Bp, Hp),   lambda t: (0, 0)),   # h0
            pl.BlockSpec((D, Hp),    lambda t: (0, 0)),   # W_ih^T
            pl.BlockSpec((Hp, Hp),   lambda t: (0, 0)),   # W_hh^T
            pl.BlockSpec((1, Hp),    lambda t: (0, 0)),   # bias
            pl.BlockSpec((1, Hp),    lambda t: (0, 0)),   # fc W row
            pl.BlockSpec((1, 1),     lambda t: (0, 0)),   # fc bias
        ],
        # single, fully lane-dense output block (hidden states + y in lane H)
        out_specs=pl.BlockSpec((chunk, Hp), lambda t: (t, 0)),
        scratch_shapes=[
            pltpu.VMEM((Bp, Hp), jnp.float32),  # hidden carried across chunks
        ],
    )
    out_shape = jax.ShapeDtypeStruct((TBp, Hp), jnp.float32)
    return pl.pallas_call(
        kernel,
        out_shape=out_shape,
        grid_spec=grid_spec,
        compiler_params=pltpu.CompilerParams(
            dimension_semantics=("arbitrary",),     # sequential recurrence axis
            vmem_limit_bytes=32 * 1024 * 1024),     # explicit, safe on v5e/v6e/v7x
    )(x2d, h0_p, w_ih_p, w_hh_p, b_p, fc_w_p, fc_b_p)


# ----------------------------------------------------------------------------
# Wrapper reproducing Model.forward(x, h_, t_ind)
# ----------------------------------------------------------------------------
def model_forward(params, x, h_, t_ind, *, time_chunk=None):
    """x: [B, S, D] (batch_first), h_: [1, B, 64], t_ind: python list of ints."""
    B, S, D = x.shape
    H = params["weight_hh"].shape[0]
    Hp = _round_up(H + 1, 128)   # +1 guarantees a spare padded lane for y
    Bp = _round_up(B, 8)         # sublane-aligned batch

    # The PyTorch loop concatenates x[:, t_ind[i]:t_ind[i+1], :]; for monotone
    # t_ind that is exactly x[:, t_ind[0]:t_ind[-1], :] -> skip the HBM copy.
    if all(t_ind[i] <= t_ind[i + 1] for i in range(len(t_ind) - 1)):
        x_cat = x[:, t_ind[0]:t_ind[-1], :]
    else:
        x_cat = jnp.concatenate(
            [x[:, t_ind[i]:t_ind[i + 1], :] for i in range(len(t_ind) - 1)],
            axis=1)
    T = x_cat.shape[1]

    # Large time chunks amortize the ~0.35us/grid-step overhead; T is padded
    # up to a multiple of Tc (padded steps are masked in-kernel), so there is
    # no pathological Tc=1 fallback when T is prime.
    if time_chunk is None:
        time_chunk = max(1, 1024 // Bp)     # ~1024 rows per chunk
    Tc = max(1, min(time_chunk, T))
    nt = -(-T // Tc)
    T_pad = nt * Tc

    f32 = jnp.float32
    # Time-major, batch+time padded, flattened to 2-D: every per-step kernel
    # access becomes an aligned (8,128) tile.
    x_tm = jnp.transpose(x_cat, (1, 0, 2))                        # [T, B, D]
    x_tm = jnp.pad(x_tm, ((0, T_pad - T), (0, Bp - B), (0, 0)))   # [T_pad, Bp, D]
    x2d = x_tm.reshape(T_pad * Bp, D).astype(f32)

    # Zero-padded weights: padded hidden lanes stay exactly 0 through tanh and
    # contribute nothing to the FC head, so results are unchanged.
    w_ih_p = jnp.zeros((D, Hp), f32).at[:, :H].set(params["weight_ih"].T.astype(f32))
    w_hh_p = jnp.zeros((Hp, Hp), f32).at[:H, :H].set(params["weight_hh"].T.astype(f32))
    b_p = jnp.zeros((1, Hp), f32).at[0, :H].set(
        (params["bias_ih"] + params["bias_hh"]).astype(f32))
    fc_w_p = jnp.zeros((1, Hp), f32).at[0, :H].set(params["fc_weight"][0].astype(f32))
    fc_b_p = params["fc_bias"].reshape(1, 1).astype(f32)
    h0_p = jnp.zeros((Bp, Hp), f32).at[:B, :H].set(h_[0].astype(f32))

    out2d = _run_kernel(x2d, h0_p, w_ih_p, w_hh_p, b_p, fc_w_p, fc_b_p,
                        Tc=Tc, Bp=Bp, H=H, T_real=T, T_pad=T_pad)

    out = out2d.reshape(T_pad, Bp, Hp)[:T, :B, :]        # [T, B, Hp]
    x_save = jnp.transpose(out[:, :, :H], (1, 0, 2))     # [B, T, H]
    y = jnp.transpose(out[:, :, H:H + 1], (1, 0, 2))     # [B, T, 1]
    h_save = x_save[:, -1, :][None, :, :]                # final hidden == last output
    return y, x_save, h_save


# ----------------------------------------------------------------------------
# Pure-JAX reference (for correctness check only)
# ----------------------------------------------------------------------------
def reference_forward(params, x, h_, t_ind):
    num_tv = len(t_ind) - 1
    segs = [x[:, t_ind[i]:t_ind[i + 1], :] for i in range(num_tv)]
    x_cat = jnp.concatenate(segs, axis=1)
    h = h_[0]
    b = params["bias_ih"] + params["bias_hh"]

    def step(h, x_t):
        h_new = jnp.tanh(x_t @ params["weight_ih"].T + h @ params["weight_hh"].T + b)
        return h_new, h_new

    h_fin, outs = lax.scan(step, h, jnp.transpose(x_cat, (1, 0, 2)))
    x_save = jnp.transpose(outs, (1, 0, 2))
    y = jax.nn.sigmoid(x_save @ params["fc_weight"].T + params["fc_bias"])
    return y, x_save, h_fin[None]


# ----------------------------------------------------------------------------
if __name__ == "__main__":
    B, S, D, H = 2, 48, 8, 64
    t_ind = [0, 16, 30, 48]   # 3 "time-varying" segments covering the sequence

    key = jax.random.PRNGKey(0)
    ks = jax.random.split(key, 8)
    scale = 1.0 / jnp.sqrt(H)
    params = {
        "weight_ih": jax.random.uniform(ks[0], (H, D), jnp.float32, -scale, scale),
        "weight_hh": jax.random.uniform(ks[1], (H, H), jnp.float32, -scale, scale),
        "bias_ih":   jax.random.uniform(ks[2], (H,), jnp.float32, -scale, scale),
        "bias_hh":   jax.random.uniform(ks[3], (H,), jnp.float32, -scale, scale),
        "fc_weight": jax.random.uniform(ks[4], (1, H), jnp.float32, -scale, scale),
        "fc_bias":   jax.random.uniform(ks[5], (1,), jnp.float32, -scale, scale),
    }
    x = jax.random.normal(ks[6], (B, S, D), jnp.float32)
    h_ = jax.random.normal(ks[7], (1, B, H), jnp.float32)

    y_r, x_r, h_r = reference_forward(params, x, h_, t_ind)

    # Config 1: multi-chunk path with time padding (Tc=20 -> 3 chunks, the last
    # chunk carries 12 masked padded timesteps).
    y, x_save, h_save = model_forward(params, x, h_, t_ind, time_chunk=20)
    jax.block_until_ready((y, x_save, h_save))
    assert y.shape == (B, S, 1) and x_save.shape == (B, S, H) and h_save.shape == (1, B, H)
    assert jnp.allclose(y, y_r, atol=2e-5)
    assert jnp.allclose(x_save, x_r, atol=2e-5)
    assert jnp.allclose(h_save, h_r, atol=2e-5)

    # Config 2: default (large) chunk -> single grid step, no padding.
    y2, x2, h2 = model_forward(params, x, h_, t_ind)
    jax.block_until_ready((y2, x2, h2))
    assert jnp.allclose(y2, y_r, atol=2e-5)
    assert jnp.allclose(x2, x_r, atol=2e-5)
    assert jnp.allclose(h2, h_r, atol=2e-5)

    print("KERNEL_OK")
</pallas_src>

<mosaic_0001>
module attributes {stable_mosaic.version = 11 : i64} {
  func.func @kernel(%arg0: i32, %arg1: memref<160x8xf32, #tpu.memory_space<vmem>>, %arg2: memref<8x128xf32, #tpu.memory_space<vmem>>, %arg3: memref<8x128xf32, #tpu.memory_space<vmem>>, %arg4: memref<128x128xf32, #tpu.memory_space<vmem>>, %arg5: memref<1x128xf32, #tpu.memory_space<vmem>>, %arg6: memref<1x128xf32, #tpu.memory_space<vmem>>, %arg7: memref<1x1xf32, #tpu.memory_space<vmem>>, %arg8: memref<160x128xf32, #tpu.memory_space<vmem>>, %arg9: memref<8x128xf32, #tpu.memory_space<vmem>>) attributes {dimension_semantics = [#tpu.dimension_semantics<arbitrary>], iteration_bounds = array<i64: 3>, scalar_prefetch = 0 : i64, scratch_operands = 1 : i64, tpu.core_type = #tpu.core_type<tc>, window_params = [{transform_indices = @transform_0, window_bounds = array<i64: 160, 8>}, {pipeline_mode = #tpu.pipeline_mode<synchronous>, transform_indices = @transform_1, window_bounds = array<i64: 8, 128>}, {pipeline_mode = #tpu.pipeline_mode<synchronous>, transform_indices = @transform_2, window_bounds = array<i64: 8, 128>}, {pipeline_mode = #tpu.pipeline_mode<synchronous>, transform_indices = @transform_3, window_bounds = array<i64: 128, 128>}, {pipeline_mode = #tpu.pipeline_mode<synchronous>, transform_indices = @transform_4, window_bounds = array<i64: 1, 128>}, {pipeline_mode = #tpu.pipeline_mode<synchronous>, transform_indices = @transform_5, window_bounds = array<i64: 1, 128>}, {pipeline_mode = #tpu.pipeline_mode<synchronous>, transform_indices = @transform_6, window_bounds = array<i64: 1, 1>}, {transform_indices = @transform_7, window_bounds = array<i64: 160, 128>}]} {
    %c0_i32 = arith.constant 0 : i32
    %0 = arith.cmpi eq, %arg0, %c0_i32 : i32
    %1 = arith.extui %0 : i1 to i32
    %c0_i32_0 = arith.constant 0 : i32
    %2 = arith.cmpi ne, %1, %c0_i32_0 : i32
    scf.if %2 {
      %c0_125 = arith.constant 0 : index
      %c0_126 = arith.constant 0 : index
      %275 = vector.load %arg2[%c0_125, %c0_126] : memref<8x128xf32, #tpu.memory_space<vmem>>, vector<8x128xf32>
      %c0_127 = arith.constant 0 : index
      %c0_128 = arith.constant 0 : index
      %276 = vector.load %arg9[%c0_127, %c0_128] : memref<8x128xf32, #tpu.memory_space<vmem>>, vector<8x128xf32>
      tpu.vector_store %arg9[%c0_127, %c0_128], %275 {strides = array<i32>} : memref<8x128xf32, #tpu.memory_space<vmem>>, vector<8x128xf32>,
    } else {
    }
    %c0 = arith.constant 0 : index
    %c0_1 = arith.constant 0 : index
    %3 = vector.load %arg1[%c0, %c0_1] : memref<160x8xf32, #tpu.memory_space<vmem>>, vector<160x8xf32>
    %c0_2 = arith.constant 0 : index
    %c0_3 = arith.constant 0 : index
    %4 = vector.load %arg3[%c0_2, %c0_3] : memref<8x128xf32, #tpu.memory_space<vmem>>, vector<8x128xf32>
    %cst = arith.constant dense<0.000000e+00> : vector<160x128xf32>
    %5 = tpu.matmul %3, %4, %cst {dimension_numbers = #tpu.dot_dimension_numbers<[1], [0], [0], [1], [0, 0, 1, 1], [], []>} : vector<160x8xf32>, vector<8x128xf32>, vector<160x128xf32> -> vector<160x128xf32>
    %c0_4 = arith.constant 0 : index
    %c0_5 = arith.constant 0 : index
    %6 = vector.load %arg5[%c0_4, %c0_5] : memref<1x128xf32, #tpu.memory_space<vmem>>, vector<1x128xf32>
    %7 = vector.broadcast %6 : vector<1x128xf32> to vector<160x128xf32>
    %8 = arith.addf %5, %7 : vector<160x128xf32>
    %c0_6 = arith.constant 0 : index
    %c0_7 = arith.constant 0 : index
    %9 = vector.load %arg8[%c0_6, %c0_7] : memref<160x128xf32, #tpu.memory_space<vmem>>, vector<160x128xf32>
    tpu.vector_store %arg8[%c0_6, %c0_7], %8 {strides = array<i32>} : memref<160x128xf32, #tpu.memory_space<vmem>>, vector<160x128xf32>,
    %c0_8 = arith.constant 0 : index
    %c0_9 = arith.constant 0 : index
    %10 = vector.load %arg4[%c0_8, %c0_9] : memref<128x128xf32, #tpu.memory_space<vmem>>, vector<128x128xf32>
    %c20_i32 = arith.constant 20 : i32
    %11 = arith.muli %arg0, %c20_i32 : i32
    %c0_10 = arith.constant 0 : index
    %c0_11 = arith.constant 0 : index
    %12 = vector.load %arg9[%c0_10, %c0_11] : memref<8x128xf32, #tpu.memory_space<vmem>>, vector<8x128xf32>
    %c0_i32_12 = arith.constant 0 : i32
    %c8_i32 = arith.constant 8 : i32
    %13 = arith.muli %c0_i32_12, %c8_i32 : i32
    %14 = tpu.assume_multiple %13, 8 : i32
    %15 = arith.index_cast %14 : i32 to index
    %c0_13 = arith.constant 0 : index
    %16 = vector.load %arg8[%15, %c0_13] : memref<160x128xf32, #tpu.memory_space<vmem>>, vector<8x128xf32>
    %cst_14 = arith.constant dense<0.000000e+00> : vector<8x128xf32>
    %17 = tpu.matmul %12, %10, %cst_14 {dimension_numbers = #tpu.dot_dimension_numbers<[1], [0], [0], [1], [0, 0, 1, 1], [], []>} : vector<8x128xf32>, vector<128x128xf32>, vector<8x128xf32> -> vector<8x128xf32>
    %18 = arith.addf %16, %17 : vector<8x128xf32>
    %19 = math.tanh %18 : vector<8x128xf32>
    %20 = arith.index_cast %14 : i32 to index
    %c0_15 = arith.constant 0 : index
    %21 = vector.load %arg8[%20, %c0_15] : memref<160x128xf32, #tpu.memory_space<vmem>>, vector<8x128xf32>
    tpu.vector_store %arg8[%20, %c0_15], %19 {strides = array<i32>} : memref<160x128xf32, #tpu.memory_space<vmem>>, vector<8x128xf32>,
    %22 = arith.addi %11, %c0_i32_12 : i32
    %c48_i32 = arith.constant 48 : i32
    %23 = arith.cmpi slt, %22, %c48_i32 : i32
    %24 = arith.select %23, %19, %12 : vector<8x128xf32>
    %c1_i32 = arith.constant 1 : i32
    %c8_i32_16 = arith.constant 8 : i32
    %25 = arith.muli %c1_i32, %c8_i32_16 : i32
    %26 = tpu.assume_multiple %25, 8 : i32
    %27 = arith.index_cast %26 : i32 to index
    %c0_17 = arith.constant 0 : index
    %28 = vector.load %arg8[%27, %c0_17] : memref<160x128xf32, #tpu.memory_space<vmem>>, vector<8x128xf32>
    %cst_18 = arith.constant dense<0.000000e+00> : vector<8x128xf32>
    %29 = tpu.matmul %24, %10, %cst_18 {dimension_numbers = #tpu.dot_dimension_numbers<[1], [0], [0], [1], [0, 0, 1, 1], [], []>} : vector<8x128xf32>, vector<128x128xf32>, vector<8x128xf32> -> vector<8x128xf32>
    %30 = arith.addf %28, %29 : vector<8x128xf32>
    %31 = math.tanh %30 : vector<8x128xf32>
    %32 = arith.index_cast %26 : i32 to index
    %c0_19 = arith.constant 0 : index
    %33 = vector.load %arg8[%32, %c0_19] : memref<160x128xf32, #tpu.memory_space<vmem>>, vector<8x128xf32>
    tpu.vector_store %arg8[%32, %c0_19], %31 {strides = array<i32>} : memref<160x128xf32, #tpu.memory_space<vmem>>, vector<8x128xf32>,
    %34 = arith.addi %11, %c1_i32 : i32
    %c48_i32_20 = arith.constant 48 : i32
    %35 = arith.cmpi slt, %34, %c48_i32_20 : i32
    %36 = arith.select %35, %31, %24 : vector<8x128xf32>
    %c2_i32 = arith.constant 2 : i32
    %c8_i32_21 = arith.constant 8 : i32
    %37 = arith.muli %c2_i32, %c8_i32_21 : i32
    %38 = tpu.assume_multiple %37, 8 : i32
    %39 = arith.index_cast %38 : i32 to index
    %c0_22 = arith.constant 0 : index
    %40 = vector.load %arg8[%39, %c0_22] : memref<160x128xf32, #tpu.memory_space<vmem>>, vector<8x128xf32>
    %cst_23 = arith.constant dense<0.000000e+00> : vector<8x128xf32>
    %41 = tpu.matmul %36, %10, %cst_23 {dimension_numbers = #tpu.dot_dimension_numbers<[1], [0], [0], [1], [0, 0, 1, 1], [], []>} : vector<8x128xf32>, vector<128x128xf32>, vector<8x128xf32> -> vector<8x128xf32>
    %42 = arith.addf %40, %41 : vector<8x128xf32>
    %43 = math.tanh %42 : vector<8x128xf32>
    %44 = arith.index_cast %38 : i32 to index
    %c0_24 = arith.constant 0 : index
    %45 = vector.load %arg8[%44, %c0_24] : memref<160x128xf32, #tpu.memory_space<vmem>>, vector<8x128xf32>
    tpu.vector_store %arg8[%44, %c0_24], %43 {strides = array<i32>} : memref<160x128xf32, #tpu.memory_space<vmem>>, vector<8x128xf32>,
    %46 = arith.addi %11, %c2_i32 : i32
    %c48_i32_25 = arith.constant 48 : i32
    %47 = arith.cmpi slt, %46, %c48_i32_25 : i32
    %48 = arith.select %47, %43, %36 : vector<8x128xf32>
    %c3_i32 = arith.constant 3 : i32
    %c8_i32_26 = arith.constant 8 : i32
    %49 = arith.muli %c3_i32, %c8_i32_26 : i32
    %50 = tpu.assume_multiple %49, 8 : i32
    %51 = arith.index_cast %50 : i32 to index
    %c0_27 = arith.constant 0 : index
    %52 = vector.load %arg8[%51, %c0_27] : memref<160x128xf32, #tpu.memory_space<vmem>>, vector<8x128xf32>
    %cst_28 = arith.constant dense<0.000000e+00> : vector<8x128xf32>
    %53 = tpu.matmul %48, %10, %cst_28 {dimension_numbers = #tpu.dot_dimension_numbers<[1], [0], [0], [1], [0, 0, 1, 1], [], []>} : vector<8x128xf32>, vector<128x128xf32>, vector<8x128xf32> -> vector<8x128xf32>
    %54 = arith.addf %52, %53 : vector<8x128xf32>
    %55 = math.tanh %54 : vector<8x128xf32>
    %56 = arith.index_cast %50 : i32 to index
    %c0_29 = arith.constant 0 : index
    %57 = vector.load %arg8[%56, %c0_29] : memref<160x128xf32, #tpu.memory_space<vmem>>, vector<8x128xf32>
    tpu.vector_store %arg8[%56, %c0_29], %55 {strides = array<i32>} : memref<160x128xf32, #tpu.memory_space<vmem>>, vector<8x128xf32>,
    %58 = arith.addi %11, %c3_i32 : i32
    %c48_i32_30 = arith.constant 48 : i32
    %59 = arith.cmpi slt, %58, %c48_i32_30 : i32
    %60 = arith.select %59, %55, %48 : vector<8x128xf32>
    %c4_i32 = arith.constant 4 : i32
    %c8_i32_31 = arith.constant 8 : i32
    %61 = arith.muli %c4_i32, %c8_i32_31 : i32
    %62 = tpu.assume_multiple %61, 8 : i32
    %63 = arith.index_cast %62 : i32 to index
    %c0_32 = arith.constant 0 : index
    %64 = vector.load %arg8[%63, %c0_32] : memref<160x128xf32, #tpu.memory_space<vmem>>, vector<8x128xf32>
    %cst_33 = arith.constant dense<0.000000e+00> : vector<8x128xf32>
    %65 = tpu.matmul %60, %10, %cst_33 {dimension_numbers = #tpu.dot_dimension_numbers<[1], [0], [0], [1], [0, 0, 1, 1], [], []>} : vector<8x128xf32>, vector<128x128xf32>, vector<8x128xf32> -> vector<8x128xf32>
    %66 = arith.addf %64, %65 : vector<8x128xf32>
    %67 = math.tanh %66 : vector<8x128xf32>
    %68 = arith.index_cast %62 : i32 to index
    %c0_34 = arith.constant 0 : index
    %69 = vector.load %arg8[%68, %c0_34] : memref<160x128xf32, #tpu.memory_space<vmem>>, vector<8x128xf32>
    tpu.vector_store %arg8[%68, %c0_34], %67 {strides = array<i32>} : memref<160x128xf32, #tpu.memory_space<vmem>>, vector<8x128xf32>,
    %70 = arith.addi %11, %c4_i32 : i32
    %c48_i32_35 = arith.constant 48 : i32
    %71 = arith.cmpi slt, %70, %c48_i32_35 : i32
    %72 = arith.select %71, %67, %60 : vector<8x128xf32>
    %c5_i32 = arith.constant 5 : i32
    %c8_i32_36 = arith.constant 8 : i32
    %73 = arith.muli %c5_i32, %c8_i32_36 : i32
    %74 = tpu.assume_multiple %73, 8 : i32
    %75 = arith.index_cast %74 : i32 to index
    %c0_37 = arith.constant 0 : index
    %76 = vector.load %arg8[%75, %c0_37] : memref<160x128xf32, #tpu.memory_space<vmem>>, vector<8x128xf32>
    %cst_38 = arith.constant dense<0.000000e+00> : vector<8x128xf32>
    %77 = tpu.matmul %72, %10, %cst_38 {dimension_numbers = #tpu.dot_dimension_numbers<[1], [0], [0], [1], [0, 0, 1, 1], [], []>} : vector<8x128xf32>, vector<128x128xf32>, vector<8x128xf32> -> vector<8x128xf32>
    %78 = arith.addf %76, %77 : vector<8x128xf32>
    %79 = math.tanh %78 : vector<8x128xf32>
    %80 = arith.index_cast %74 : i32 to index
    %c0_39 = arith.constant 0 : index
    %81 = vector.load %arg8[%80, %c0_39] : memref<160x128xf32, #tpu.memory_space<vmem>>, vector<8x128xf32>
    tpu.vector_store %arg8[%80, %c0_39], %79 {strides = array<i32>} : memref<160x128xf32, #tpu.memory_space<vmem>>, vector<8x128xf32>,
    %82 = arith.addi %11, %c5_i32 : i32
    %c48_i32_40 = arith.constant 48 : i32
    %83 = arith.cmpi slt, %82, %c48_i32_40 : i32
    %84 = arith.select %83, %79, %72 : vector<8x128xf32>
    %c6_i32 = arith.constant 6 : i32
    %c8_i32_41 = arith.constant 8 : i32
    %85 = arith.muli %c6_i32, %c8_i32_41 : i32
    %86 = tpu.assume_multiple %85, 8 : i32
    %87 = arith.index_cast %86 : i32 to index
    %c0_42 = arith.constant 0 : index
    %88 = vector.load %arg8[%87, %c0_42] : memref<160x128xf32, #tpu.memory_space<vmem>>, vector<8x128xf32>
    %cst_43 = arith.constant dense<0.000000e+00> : vector<8x128xf32>
    %89 = tpu.matmul %84, %10, %cst_43 {dimension_numbers = #tpu.dot_dimension_numbers<[1], [0], [0], [1], [0, 0, 1, 1], [], []>} : vector<8x128xf32>, vector<128x128xf32>, vector<8x128xf32> -> vector<8x128xf32>
    %90 = arith.addf %88, %89 : vector<8x128xf32>
    %91 = math.tanh %90 : vector<8x128xf32>
    %92 = arith.index_cast %86 : i32 to index
    %c0_44 = arith.constant 0 : index
    %93 = vector.load %arg8[%92, %c0_44] : memref<160x128xf32, #tpu.memory_space<vmem>>, vector<8x128xf32>
    tpu.vector_store %arg8[%92, %c0_44], %91 {strides = array<i32>} : memref<160x128xf32, #tpu.memory_space<vmem>>, vector<8x128xf32>,
    %94 = arith.addi %11, %c6_i32 : i32
    %c48_i32_45 = arith.constant 48 : i32
    %95 = arith.cmpi slt, %94, %c48_i32_45 : i32
    %96 = arith.select %95, %91, %84 : vector<8x128xf32>
    %c7_i32 = arith.constant 7 : i32
    %c8_i32_46 = arith.constant 8 : i32
    %97 = arith.muli %c7_i32, %c8_i32_46 : i32
    %98 = tpu.assume_multiple %97, 8 : i32
    %99 = arith.index_cast %98 : i32 to index
    %c0_47 = arith.constant 0 : index
    %100 = vector.load %arg8[%99, %c0_47] : memref<160x128xf32, #tpu.memory_space<vmem>>, vector<8x128xf32>
    %cst_48 = arith.constant dense<0.000000e+00> : vector<8x128xf32>
    %101 = tpu.matmul %96, %10, %cst_48 {dimension_numbers = #tpu.dot_dimension_numbers<[1], [0], [0], [1], [0, 0, 1, 1], [], []>} : vector<8x128xf32>, vector<128x128xf32>, vector<8x128xf32> -> vector<8x128xf32>
    %102 = arith.addf %100, %101 : vector<8x128xf32>
    %103 = math.tanh %102 : vector<8x128xf32>
    %104 = arith.index_cast %98 : i32 to index
    %c0_49 = arith.constant 0 : index
    %105 = vector.load %arg8[%104, %c0_49] : memref<160x128xf32, #tpu.memory_space<vmem>>, vector<8x128xf32>
    tpu.vector_store %arg8[%104, %c0_49], %103 {strides = array<i32>} : memref<160x128xf32, #tpu.memory_space<vmem>>, vector<8x128xf32>,
    %106 = arith.addi %11, %c7_i32 : i32
    %c48_i32_50 = arith.constant 48 : i32
    %107 = arith.cmpi slt, %106, %c48_i32_50 : i32
    %108 = arith.select %107, %103, %96 : vector<8x128xf32>
    %c8_i32_51 = arith.constant 8 : i32
    %c8_i32_52 = arith.constant 8 : i32
    %109 = arith.muli %c8_i32_51, %c8_i32_52 : i32
    %110 = tpu.assume_multiple %109, 8 : i32
    %111 = arith.index_cast %110 : i32 to index
    %c0_53 = arith.constant 0 : index
    %112 = vector.load %arg8[%111, %c0_53] : memref<160x128xf32, #tpu.memory_space<vmem>>, vector<8x128xf32>
    %cst_54 = arith.constant dense<0.000000e+00> : vector<8x128xf32>
    %113 = tpu.matmul %108, %10, %cst_54 {dimension_numbers = #tpu.dot_dimension_numbers<[1], [0], [0], [1], [0, 0, 1, 1], [], []>} : vector<8x128xf32>, vector<128x128xf32>, vector<8x128xf32> -> vector<8x128xf32>
    %114 = arith.addf %112, %113 : vector<8x128xf32>
    %115 = math.tanh %114 : vector<8x128xf32>
    %116 = arith.index_cast %110 : i32 to index
    %c0_55 = arith.constant 0 : index
    %117 = vector.load %arg8[%116, %c0_55] : memref<160x128xf32, #tpu.memory_space<vmem>>, vector<8x128xf32>
    tpu.vector_store %arg8[%116, %c0_55], %115 {strides = array<i32>} : memref<160x128xf32, #tpu.memory_space<vmem>>, vector<8x128xf32>,
    %118 = arith.addi %11, %c8_i32_51 : i32
    %c48_i32_56 = arith.constant 48 : i32
    %119 = arith.cmpi slt, %118, %c48_i32_56 : i32
    %120 = arith.select %119, %115, %108 : vector<8x128xf32>
    %c9_i32 = arith.constant 9 : i32
    %c8_i32_57 = arith.constant 8 : i32
    %121 = arith.muli %c9_i32, %c8_i32_57 : i32
    %122 = tpu.assume_multiple %121, 8 : i32
    %123 = arith.index_cast %122 : i32 to index
    %c0_58 = arith.constant 0 : index
    %124 = vector.load %arg8[%123, %c0_58] : memref<160x128xf32, #tpu.memory_space<vmem>>, vector<8x128xf32>
    %cst_59 = arith.constant dense<0.000000e+00> : vector<8x128xf32>
    %125 = tpu.matmul %120, %10, %cst_59 {dimension_numbers = #tpu.dot_dimension_numbers<[1], [0], [0], [1], [0, 0, 1, 1], [], []>} : vector<8x128xf32>, vector<128x128xf32>, vector<8x128xf32> -> vector<8x128xf32>
    %126 = arith.addf %124, %125 : vector<8x128xf32>
    %127 = math.tanh %126 : vector<8x128xf32>
    %128 = arith.index_cast %122 : i32 to index
    %c0_60 = arith.constant 0 : index
    %129 = vector.load %arg8[%128, %c0_60] : memref<160x128xf32, #tpu.memory_space<vmem>>, vector<8x128xf32>
    tpu.vector_store %arg8[%128, %c0_60], %127 {strides = array<i32>} : memref<160x128xf32, #tpu.memory_space<vmem>>, vector<8x128xf32>,
    %130 = arith.addi %11, %c9_i32 : i32
    %c48_i32_61 = arith.constant 48 : i32
    %131 = arith.cmpi slt, %130, %c48_i32_61 : i32
    %132 = arith.select %131, %127, %120 : vector<8x128xf32>
    %c10_i32 = arith.constant 10 : i32
    %c8_i32_62 = arith.constant 8 : i32
    %133 = arith.muli %c10_i32, %c8_i32_62 : i32
    %134 = tpu.assume_multiple %133, 8 : i32
    %135 = arith.index_cast %134 : i32 to index
    %c0_63 = arith.constant 0 : index
    %136 = vector.load %arg8[%135, %c0_63] : memref<160x128xf32, #tpu.memory_space<vmem>>, vector<8x128xf32>
    %cst_64 = arith.constant dense<0.000000e+00> : vector<8x128xf32>
    %137 = tpu.matmul %132, %10, %cst_64 {dimension_numbers = #tpu.dot_dimension_numbers<[1], [0], [0], [1], [0, 0, 1, 1], [], []>} : vector<8x128xf32>, vector<128x128xf32>, vector<8x128xf32> -> vector<8x128xf32>
    %138 = arith.addf %136, %137 : vector<8x128xf32>
    %139 = math.tanh %138 : vector<8x128xf32>
    %140 = arith.index_cast %134 : i32 to index
    %c0_65 = arith.constant 0 : index
    %141 = vector.load %arg8[%140, %c0_65] : memref<160x128xf32, #tpu.memory_space<vmem>>, vector<8x128xf32>
    tpu.vector_store %arg8[%140, %c0_65], %139 {strides = array<i32>} : memref<160x128xf32, #tpu.memory_space<vmem>>, vector<8x128xf32>,
    %142 = arith.addi %11, %c10_i32 : i32
    %c48_i32_66 = arith.constant 48 : i32
    %143 = arith.cmpi slt, %142, %c48_i32_66 : i32
    %144 = arith.select %143, %139, %132 : vector<8x128xf32>
    %c11_i32 = arith.constant 11 : i32
    %c8_i32_67 = arith.constant 8 : i32
    %145 = arith.muli %c11_i32, %c8_i32_67 : i32
    %146 = tpu.assume_multiple %145, 8 : i32
    %147 = arith.index_cast %146 : i32 to index
    %c0_68 = arith.constant 0 : index
    %148 = vector.load %arg8[%147, %c0_68] : memref<160x128xf32, #tpu.memory_space<vmem>>, vector<8x128xf32>
    %cst_69 = arith.constant dense<0.000000e+00> : vector<8x128xf32>
    %149 = tpu.matmul %144, %10, %cst_69 {dimension_numbers = #tpu.dot_dimension_numbers<[1], [0], [0], [1], [0, 0, 1, 1], [], []>} : vector<8x128xf32>, vector<128x128xf32>, vector<8x128xf32> -> vector<8x128xf32>
    %150 = arith.addf %148, %149 : vector<8x128xf32>
    %151 = math.tanh %150 : vector<8x128xf32>
    %152 = arith.index_cast %146 : i32 to index
    %c0_70 = arith.constant 0 : index
    %153 = vector.load %arg8[%152, %c0_70] : memref<160x128xf32, #tpu.memory_space<vmem>>, vector<8x128xf32>
    tpu.vector_store %arg8[%152, %c0_70], %151 {strides = array<i32>} : memref<160x128xf32, #tpu.memory_space<vmem>>, vector<8x128xf32>,
    %154 = arith.addi %11, %c11_i32 : i32
    %c48_i32_71 = arith.constant 48 : i32
    %155 = arith.cmpi slt, %154, %c48_i32_71 : i32
    %156 = arith.select %155, %151, %144 : vector<8x128xf32>
    %c12_i32 = arith.constant 12 : i32
    %c8_i32_72 = arith.constant 8 : i32
    %157 = arith.muli %c12_i32, %c8_i32_72 : i32
    %158 = tpu.assume_multiple %157, 8 : i32
    %159 = arith.index_cast %158 : i32 to index
    %c0_73 = arith.constant 0 : index
    %160 = vector.load %arg8[%159, %c0_73] : memref<160x128xf32, #tpu.memory_space<vmem>>, vector<8x128xf32>
    %cst_74 = arith.constant dense<0.000000e+00> : vector<8x128xf32>
    %161 = tpu.matmul %156, %10, %cst_74 {dimension_numbers = #tpu.dot_dimension_numbers<[1], [0], [0], [1], [0, 0, 1, 1], [], []>} : vector<8x128xf32>, vector<128x128xf32>, vector<8x128xf32> -> vector<8x128xf32>
    %162 = arith.addf %160, %161 : vector<8x128xf32>
    %163 = math.tanh %162 : vector<8x128xf32>
    %164 = arith.index_cast %158 : i32 to index
    %c0_75 = arith.constant 0 : index
    %165 = vector.load %arg8[%164, %c0_75] : memref<160x128xf32, #tpu.memory_space<vmem>>, vector<8x128xf32>
    tpu.vector_store %arg8[%164, %c0_75], %163 {strides = array<i32>} : memref<160x128xf32, #tpu.memory_space<vmem>>, vector<8x128xf32>,
    %166 = arith.addi %11, %c12_i32 : i32
    %c48_i32_76 = arith.constant 48 : i32
    %167 = arith.cmpi slt, %166, %c48_i32_76 : i32
    %168 = arith.select %167, %163, %156 : vector<8x128xf32>
    %c13_i32 = arith.constant 13 : i32
    %c8_i32_77 = arith.constant 8 : i32
    %169 = arith.muli %c13_i32, %c8_i32_77 : i32
    %170 = tpu.assume_multiple %169, 8 : i32
    %171 = arith.index_cast %170 : i32 to index
    %c0_78 = arith.constant 0 : index
    %172 = vector.load %arg8[%171, %c0_78] : memref<160x128xf32, #tpu.memory_space<vmem>>, vector<8x128xf32>
    %cst_79 = arith.constant dense<0.000000e+00> : vector<8x128xf32>
    %173 = tpu.matmul %168, %10, %cst_79 {dimension_numbers = #tpu.dot_dimension_numbers<[1], [0], [0], [1], [0, 0, 1, 1], [], []>} : vector<8x128xf32>, vector<128x128xf32>, vector<8x128xf32> -> vector<8x128xf32>
    %174 = arith.addf %172, %173 : vector<8x128xf32>
    %175 = math.tanh %174 : vector<8x128xf32>
    %176 = arith.index_cast %170 : i32 to index
    %c0_80 = arith.constant 0 : index
    %177 = vector.load %arg8[%176, %c0_80] : memref<160x128xf32, #tpu.memory_space<vmem>>, vector<8x128xf32>
    tpu.vector_store %arg8[%176, %c0_80], %175 {strides = array<i32>} : memref<160x128xf32, #tpu.memory_space<vmem>>, vector<8x128xf32>,
    %178 = arith.addi %11, %c13_i32 : i32
    %c48_i32_81 = arith.constant 48 : i32
    %179 = arith.cmpi slt, %178, %c48_i32_81 : i32
    %180 = arith.select %179, %175, %168 : vector<8x128xf32>
    %c14_i32 = arith.constant 14 : i32
    %c8_i32_82 = arith.constant 8 : i32
    %181 = arith.muli %c14_i32, %c8_i32_82 : i32
    %182 = tpu.assume_multiple %181, 8 : i32
    %183 = arith.index_cast %182 : i32 to index
    %c0_83 = arith.constant 0 : index
    %184 = vector.load %arg8[%183, %c0_83] : memref<160x128xf32, #tpu.memory_space<vmem>>, vector<8x128xf32>
    %cst_84 = arith.constant dense<0.000000e+00> : vector<8x128xf32>
    %185 = tpu.matmul %180, %10, %cst_84 {dimension_numbers = #tpu.dot_dimension_numbers<[1], [0], [0], [1], [0, 0, 1, 1], [], []>} : vector<8x128xf32>, vector<128x128xf32>, vector<8x128xf32> -> vector<8x128xf32>
    %186 = arith.addf %184, %185 : vector<8x128xf32>
    %187 = math.tanh %186 : vector<8x128xf32>
    %188 = arith.index_cast %182 : i32 to index
    %c0_85 = arith.constant 0 : index
    %189 = vector.load %arg8[%188, %c0_85] : memref<160x128xf32, #tpu.memory_space<vmem>>, vector<8x128xf32>
    tpu.vector_store %arg8[%188, %c0_85], %187 {strides = array<i32>} : memref<160x128xf32, #tpu.memory_space<vmem>>, vector<8x128xf32>,
    %190 = arith.addi %11, %c14_i32 : i32
    %c48_i32_86 = arith.constant 48 : i32
    %191 = arith.cmpi slt, %190, %c48_i32_86 : i32
    %192 = arith.select %191, %187, %180 : vector<8x128xf32>
    %c15_i32 = arith.constant 15 : i32
    %c8_i32_87 = arith.constant 8 : i32
    %193 = arith.muli %c15_i32, %c8_i32_87 : i32
    %194 = tpu.assume_multiple %193, 8 : i32
    %195 = arith.index_cast %194 : i32 to index
    %c0_88 = arith.constant 0 : index
    %196 = vector.load %arg8[%195, %c0_88] : memref<160x128xf32, #tpu.memory_space<vmem>>, vector<8x128xf32>
    %cst_89 = arith.constant dense<0.000000e+00> : vector<8x128xf32>
    %197 = tpu.matmul %192, %10, %cst_89 {dimension_numbers = #tpu.dot_dimension_numbers<[1], [0], [0], [1], [0, 0, 1, 1], [], []>} : vector<8x128xf32>, vector<128x128xf32>, vector<8x128xf32> -> vector<8x128xf32>
    %198 = arith.addf %196, %197 : vector<8x128xf32>
    %199 = math.tanh %198 : vector<8x128xf32>
    %200 = arith.index_cast %194 : i32 to index
    %c0_90 = arith.constant 0 : index
    %201 = vector.load %arg8[%200, %c0_90] : memref<160x128xf32, #tpu.memory_space<vmem>>, vector<8x128xf32>
    tpu.vector_store %arg8[%200, %c0_90], %199 {strides = array<i32>} : memref<160x128xf32, #tpu.memory_space<vmem>>, vector<8x128xf32>,
    %202 = arith.addi %11, %c15_i32 : i32
    %c48_i32_91 = arith.constant 48 : i32
    %203 = arith.cmpi slt, %202, %c48_i32_91 : i32
    %204 = arith.select %203, %199, %192 : vector<8x128xf32>
    %c16_i32 = arith.constant 16 : i32
    %c8_i32_92 = arith.constant 8 : i32
    %205 = arith.muli %c16_i32, %c8_i32_92 : i32
    %206 = tpu.assume_multiple %205, 8 : i32
    %207 = arith.index_cast %206 : i32 to index
    %c0_93 = arith.constant 0 : index
    %208 = vector.load %arg8[%207, %c0_93] : memref<160x128xf32, #tpu.memory_space<vmem>>, vector<8x128xf32>
    %cst_94 = arith.constant dense<0.000000e+00> : vector<8x128xf32>
    %209 = tpu.matmul %204, %10, %cst_94 {dimension_numbers = #tpu.dot_dimension_numbers<[1], [0], [0], [1], [0, 0, 1, 1], [], []>} : vector<8x128xf32>, vector<128x128xf32>, vector<8x128xf32> -> vector<8x128xf32>
    %210 = arith.addf %208, %209 : vector<8x128xf32>
    %211 = math.tanh %210 : vector<8x128xf32>
    %212 = arith.index_cast %206 : i32 to index
    %c0_95 = arith.constant 0 : index
    %213 = vector.load %arg8[%212, %c0_95] : memref<160x128xf32, #tpu.memory_space<vmem>>, vector<8x128xf32>
    tpu.vector_store %arg8[%212, %c0_95], %211 {strides = array<i32>} : memref<160x128xf32, #tpu.memory_space<vmem>>, vector<8x128xf32>,
    %214 = arith.addi %11, %c16_i32 : i32
    %c48_i32_96 = arith.constant 48 : i32
    %215 = arith.cmpi slt, %214, %c48_i32_96 : i32
    %216 = arith.select %215, %211, %204 : vector<8x128xf32>
    %c17_i32 = arith.constant 17 : i32
    %c8_i32_97 = arith.constant 8 : i32
    %217 = arith.muli %c17_i32, %c8_i32_97 : i32
    %218 = tpu.assume_multiple %217, 8 : i32
    %219 = arith.index_cast %218 : i32 to index
    %c0_98 = arith.constant 0 : index
    %220 = vector.load %arg8[%219, %c0_98] : memref<160x128xf32, #tpu.memory_space<vmem>>, vector<8x128xf32>
    %cst_99 = arith.constant dense<0.000000e+00> : vector<8x128xf32>
    %221 = tpu.matmul %216, %10, %cst_99 {dimension_numbers = #tpu.dot_dimension_numbers<[1], [0], [0], [1], [0, 0, 1, 1], [], []>} : vector<8x128xf32>, vector<128x128xf32>, vector<8x128xf32> -> vector<8x128xf32>
    %222 = arith.addf %220, %221 : vector<8x128xf32>
    %223 = math.tanh %222 : vector<8x128xf32>
    %224 = arith.index_cast %218 : i32 to index
    %c0_100 = arith.constant 0 : index
    %225 = vector.load %arg8[%224, %c0_100] : memref<160x128xf32, #tpu.memory_space<vmem>>, vector<8x128xf32>
    tpu.vector_store %arg8[%224, %c0_100], %223 {strides = array<i32>} : memref<160x128xf32, #tpu.memory_space<vmem>>, vector<8x128xf32>,
    %226 = arith.addi %11, %c17_i32 : i32
    %c48_i32_101 = arith.constant 48 : i32
    %227 = arith.cmpi slt, %226, %c48_i32_101 : i32
    %228 = arith.select %227, %223, %216 : vector<8x128xf32>
    %c18_i32 = arith.constant 18 : i32
    %c8_i32_102 = arith.constant 8 : i32
    %229 = arith.muli %c18_i32, %c8_i32_102 : i32
    %230 = tpu.assume_multiple %229, 8 : i32
    %231 = arith.index_cast %230 : i32 to index
    %c0_103 = arith.constant 0 : index
    %232 = vector.load %arg8[%231, %c0_103] : memref<160x128xf32, #tpu.memory_space<vmem>>, vector<8x128xf32>
    %cst_104 = arith.constant dense<0.000000e+00> : vector<8x128xf32>
    %233 = tpu.matmul %228, %10, %cst_104 {dimension_numbers = #tpu.dot_dimension_numbers<[1], [0], [0], [1], [0, 0, 1, 1], [], []>} : vector<8x128xf32>, vector<128x128xf32>, vector<8x128xf32> -> vector<8x128xf32>
    %234 = arith.addf %232, %233 : vector<8x128xf32>
    %235 = math.tanh %234 : vector<8x128xf32>
    %236 = arith.index_cast %230 : i32 to index
    %c0_105 = arith.constant 0 : index
    %237 = vector.load %arg8[%236, %c0_105] : memref<160x128xf32, #tpu.memory_space<vmem>>, vector<8x128xf32>
    tpu.vector_store %arg8[%236, %c0_105], %235 {strides = array<i32>} : memref<160x128xf32, #tpu.memory_space<vmem>>, vector<8x128xf32>,
    %238 = arith.addi %11, %c18_i32 : i32
    %c48_i32_106 = arith.constant 48 : i32
    %239 = arith.cmpi slt, %238, %c48_i32_106 : i32
    %240 = arith.select %239, %235, %228 : vector<8x128xf32>
    %c19_i32 = arith.constant 19 : i32
    %c8_i32_107 = arith.constant 8 : i32
    %241 = arith.muli %c19_i32, %c8_i32_107 : i32
    %242 = tpu.assume_multiple %241, 8 : i32
    %243 = arith.index_cast %242 : i32 to index
    %c0_108 = arith.constant 0 : index
    %244 = vector.load %arg8[%243, %c0_108] : memref<160x128xf32, #tpu.memory_space<vmem>>, vector<8x128xf32>
    %cst_109 = arith.constant dense<0.000000e+00> : vector<8x128xf32>
    %245 = tpu.matmul %240, %10, %cst_109 {dimension_numbers = #tpu.dot_dimension_numbers<[1], [0], [0], [1], [0, 0, 1, 1], [], []>} : vector<8x128xf32>, vector<128x128xf32>, vector<8x128xf32> -> vector<8x128xf32>
    %246 = arith.addf %244, %245 : vector<8x128xf32>
    %247 = math.tanh %246 : vector<8x128xf32>
    %248 = arith.index_cast %242 : i32 to index
    %c0_110 = arith.constant 0 : index
    %249 = vector.load %arg8[%248, %c0_110] : memref<160x128xf32, #tpu.memory_space<vmem>>, vector<8x128xf32>
    tpu.vector_store %arg8[%248, %c0_110], %247 {strides = array<i32>} : memref<160x128xf32, #tpu.memory_space<vmem>>, vector<8x128xf32>,
    %250 = arith.addi %11, %c19_i32 : i32
    %c48_i32_111 = arith.constant 48 : i32
    %251 = arith.cmpi slt, %250, %c48_i32_111 : i32
    %252 = arith.select %251, %247, %240 : vector<8x128xf32>
    %c20_i32_112 = arith.constant 20 : i32
    %c0_113 = arith.constant 0 : index
    %c0_114 = arith.constant 0 : index
    %253 = vector.load %arg9[%c0_113, %c0_114] : memref<8x128xf32, #tpu.memory_space<vmem>>, vector<8x128xf32>
    tpu.vector_store %arg9[%c0_113, %c0_114], %252 {strides = array<i32>} : memref<8x128xf32, #tpu.memory_space<vmem>>, vector<8x128xf32>,
    %c0_115 = arith.constant 0 : index
    %c0_116 = arith.constant 0 : index
    %254 = vector.load %arg8[%c0_115, %c0_116] : memref<160x128xf32, #tpu.memory_space<vmem>>, vector<160x128xf32>
    %c0_117 = arith.constant 0 : index
    %c0_118 = arith.constant 0 : index
    %255 = vector.load %arg6[%c0_117, %c0_118] : memref<1x128xf32, #tpu.memory_space<vmem>>, vector<1x128xf32>
    %256 = vector.broadcast %255 : vector<1x128xf32> to vector<160x128xf32>
    %257 = arith.mulf %254, %256 : vector<160x128xf32>
    %cst_119 = arith.constant dense<0.000000e+00> : vector<160xf32>
    %258 = vector.multi_reduction <add>, %257, %cst_119 [1] : vector<160x128xf32> to vector<160xf32>
    %259 = vector.shape_cast %258 : vector<160xf32> to vector<160x1xf32>
    %c0_120 = arith.constant 0 : index
    %c0_121 = arith.constant 0 : index
    %260 = vector.load %arg7[%c0_120, %c0_121] : memref<1x1xf32, #tpu.memory_space<vmem>>, vector<1x1xf32>
    %261 = vector.broadcast %260 : vector<1x1xf32> to vector<160x1xf32>
    %262 = arith.addf %259, %261 : vector<160x1xf32>
    %263 = arith.negf %262 : vector<160x1xf32>
    %264 = math.exp %263 : vector<160x1xf32>
    %cst_122 = arith.constant 1.000000e+00 : f32
    %265 = vector.broadcast %cst_122 : f32 to vector<160x1xf32>
    %266 = arith.addf %265, %264 : vector<160x1xf32>
    %267 = arith.divf %265, %266 : vector<160x1xf32>
    %268 = tpu.iota {dimensions = array<i32: 1>} : vector<160x128xi32>
    %c64_i32 = arith.constant 64 : i32
    %269 = vector.broadcast %c64_i32 : i32 to vector<160x128xi32>
    %270 = arith.cmpi eq, %268, %269 : vector<160x128xi32>
    %271 = vector.shape_cast %267 : vector<160x1xf32> to vector<160x1xf32>
    %272 = vector.broadcast %271 : vector<160x1xf32> to vector<160x128xf32>
    %273 = arith.select %270, %272, %254 : vector<160x128xi1>, vector<160x128xf32>
    %c0_123 = arith.constant 0 : index
    %c0_124 = arith.constant 0 : index
    %274 = vector.load %arg8[%c0_123, %c0_124] : memref<160x128xf32, #tpu.memory_space<vmem>>, vector<160x128xf32>
    tpu.vector_store %arg8[%c0_123, %c0_124], %273 {strides = array<i32>} : memref<160x128xf32, #tpu.memory_space<vmem>>, vector<160x128xf32>,
    return
  }
  func.func @transform_0(%arg0: i32) -> (i32, i32) {
    %c0_i32 = arith.constant 0 : i32
    %c0_i32_0 = arith.constant 0 : i32
    return %arg0, %c0_i32 : i32, i32
  }
  func.func @transform_1(%arg0: i32) -> (i32, i32) {
    %c0_i32 = arith.constant 0 : i32
    %c0_i32_0 = arith.constant 0 : i32
    %c0_i32_1 = arith.constant 0 : i32
    return %c0_i32, %c0_i32_0 : i32, i32
  }
  func.func @transform_2(%arg0: i32) -> (i32, i32) {
    %c0_i32 = arith.constant 0 : i32
    %c0_i32_0 = arith.constant 0 : i32
    %c0_i32_1 = arith.constant 0 : i32
    return %c0_i32, %c0_i32_0 : i32, i32
  }
  func.func @transform_3(%arg0: i32) -> (i32, i32) {
    %c0_i32 = arith.constant 0 : i32
    %c0_i32_0 = arith.constant 0 : i32
    %c0_i32_1 = arith.constant 0 : i32
    return %c0_i32, %c0_i32_0 : i32, i32
  }
  func.func @transform_4(%arg0: i32) -> (i32, i32) {
    %c0_i32 = arith.constant 0 : i32
    %c0_i32_0 = arith.constant 0 : i32
    %c0_i32_1 = arith.constant 0 : i32
    return %c0_i32, %c0_i32_0 : i32, i32
  }
  func.func @transform_5(%arg0: i32) -> (i32, i32) {
    %c0_i32 = arith.constant 0 : i32
    %c0_i32_0 = arith.constant 0 : i32
    %c0_i32_1 = arith.constant 0 : i32
    return %c0_i32, %c0_i32_0 : i32, i32
  }
  func.func @transform_6(%arg0: i32) -> (i32, i32) {
    %c0_i32 = arith.constant 0 : i32
    %c0_i32_0 = arith.constant 0 : i32
    %c0_i32_1 = arith.constant 0 : i32
    return %c0_i32, %c0_i32_0 : i32, i32
  }
  func.func @transform_7(%arg0: i32) -> (i32, i32) {
    %c0_i32 = arith.constant 0 : i32
    %c0_i32_0 = arith.constant 0 : i32
    return %arg0, %c0_i32 : i32, i32
  }
}

</mosaic_0001>

<llo_original>
// kernel: tpu_custom_call.1
$region0: #{tpu_custom_call.1}
  #allocation0 [shape = 'u32[]', space=smem, size = 0x4, offset = 0x4, fixed_abs, tag = 'smem constant byte address 0x4 - core index']
  #allocation1 [shape = 'u32[144,128]{1,0:T(1,128)}', space=vmem, size = 0x12000, scoped, tag = 'internal scratch']
  #allocation2 [shape = 'f32[8,128]{1,0:T(8,128)}', space=vmem, size = 0x1000, scoped, tag = 'scratch operand']
  #allocation3 [shape = 'f32[1,1]{1,0:T(1,128)S(1)}', space=vmem, size = 0x200, scoped, tag = 'scoped memory for tpu_custom_call.1']
  %s0 = inlined_call_operand.vmem [shape: f32[480,8], index: 0, kind: input, shape index: {}]
  %s1 = inlined_call_operand.vmem [shape: f32[8,128], index: 1, kind: input, shape index: {}]
  %s2 = inlined_call_operand.vmem [shape: f32[8,128], index: 2, kind: input, shape index: {}]
  %s3 = inlined_call_operand.vmem [shape: f32[128,128], index: 3, kind: input, shape index: {}]
  %s4 = inlined_call_operand.vmem [shape: f32[1,128], index: 4, kind: input, shape index: {}]
  %s5 = inlined_call_operand.vmem [shape: f32[1,128], index: 5, kind: input, shape index: {}]
  %s6 = inlined_call_operand.<no memory space> [shape: f32[1,1], index: 6, kind: input, shape index: {}]
  %s7 = inlined_call_operand.hbm [shape: f32[480,128], index: 7, kind: output, shape index: {}]
  %s8 = sld [smem:[#allocation0]]
  $region65: #{tpu_custom_call.1} parent=0
    _
  %s10 = ssub.s32 1, %s8
  %s11 = scalar_select 0, %s10, %s8
  %v12 = vstv %s6
  %13 = vst [vmem:[#allocation3] sm:$0x1] %v12
  $region1: #{tpu_custom_call.1} parent=0
    #allocation4 [shape = 'u8[163840]{0}', space=vmem, size = 0x28000, scoped, tag = 'output window, operand 0']
    #allocation5 [shape = 's32[2]{0}', space=sflag, size = 0x8, scoped, tag = 'scoped memory for tpu_custom_call.1']
    %14 = vsyncpa [#allocation5], 0
    %s15 = scalar_lea.sflag [#allocation5], 1
    %16 = vsyncpa %s15, 0
    loop: start=0, step=1, limit=5
    $region2: #{tpu_custom_call.1} parent=1 // loop_pre_header
      _
    $region3: #{tpu_custom_call.1} parent=1 // loop_header
      %s18 = sphi 0, %s22
      %p19 = scmp.ge.s32.totalorder %s18, 5
      %s28 = sphi 0, %s30
      %s31 = sphi 0, %s28
      %s32 = sphi 0, %s31
      %s48 = sphi 0, %s32
      %s52 = sphi 0, %s52
      %s54 = sphi 0, %s52
      %s55 = sphi 0, %s54
      %s69 = sphi 0, %s55
      %s73 = sphi 0, %s73
      %s75 = sphi 0, %s73
      %s76 = sphi 0, %s75
      %s90 = sphi 0, %s76
      %s94 = sphi 0, %s94
      %s96 = sphi 0, %s94
      %s97 = sphi 0, %s96
      %s111 = sphi 0, %s97
      %s115 = sphi 0, %s115
      %s117 = sphi 0, %s115
      %s118 = sphi 0, %s117
      %s132 = sphi 0, %s118
      %s136 = sphi 0, %s136
      %s138 = sphi 0, %s136
      %s139 = sphi 0, %s138
      %s153 = sphi 0, %s139
      %s157 = sphi 0, %s157
      %s159 = sphi 0, %s157
      %s160 = sphi 0, %s159
      %s174 = sphi 0, %s160
      %s180 = sphi 0, %s182
      %s183 = sphi 0, %s180
      %s184 = sphi 0, %s183
      %s200 = sphi 0, %s184
    $region4: #{tpu_custom_call.1} parent=1 // loop_header_branch
      %21 = sbr.rel (%p19) target = $region8
    $region5: #{tpu_custom_call.1} parent=1 // loop_body
      %s23 = ssub.s32 %s18, 1
      %s24 = ssub.s32 %s18, 2
      %s25 = sadd.s32 %s18, 1
      %s26 = ssub.s32 %s18, %s25
      %p27 = scmp.eq.s32.totalorder %s26, 0
      %s29 = sadd.s32 %s28, 1
      %s30 = scalar_select %p27, %s28, %s29
      %p33 = pneg %p27
      %p34 = scmp.eq.s32.totalorder %s18, 2
      %p35 = por %p33, %p34
      %p36 = scmp.ne.s32.totalorder %s28, %s31
      %p37 = scmp.eq.s32.totalorder %s18, 0
      %p38 = por %p36, %p37
      %p39 = scmp.ne.s32.totalorder %s28, %s31
      %p40 = scmp.eq.s32.totalorder %s23, 2
      %p41 = por %p39, %p40
      %p42 = scmp.ne.s32.totalorder %s31, %s32
      %p43 = scmp.eq.s32.totalorder %s23, 0
      %p44 = por %p42, %p43
      %p45 = scmp.ne.s32.totalorder %s31, %s32
      %p46 = scmp.eq.s32.totalorder %s24, 2
      %p47 = por %p45, %p46
      %p49 = scmp.ne.s32.totalorder %s32, %s48
      %p50 = scmp.eq.s32.totalorder %s24, 0
      %p51 = por %p49, %p50
      %s53 = sadd.s32 %s52, 1
      %p56 = scmp.eq.s32.totalorder %s18, 2
      %p57 = scmp.ne.s32.totalorder %s52, %s54
      %p58 = scmp.eq.s32.totalorder %s18, 0
      %p59 = por %p57, %p58
      %p60 = scmp.ne.s32.totalorder %s52, %s54
      %p61 = scmp.eq.s32.totalorder %s23, 2
      %p62 = por %p60, %p61
      %p63 = scmp.ne.s32.totalorder %s54, %s55
      %p64 = scmp.eq.s32.totalorder %s23, 0
      %p65 = por %p63, %p64
      %p66 = scmp.ne.s32.totalorder %s54, %s55
      %p67 = scmp.eq.s32.totalorder %s24, 2
      %p68 = por %p66, %p67
      %p70 = scmp.ne.s32.totalorder %s55, %s69
      %p71 = scmp.eq.s32.totalorder %s24, 0
      %p72 = por %p70, %p71
      %s74 = sadd.s32 %s73, 1
      %p77 = scmp.eq.s32.totalorder %s18, 2
      %p78 = scmp.ne.s32.totalorder %s73, %s75
      %p79 = scmp.eq.s32.totalorder %s18, 0
      %p80 = por %p78, %p79
      %p81 = scmp.ne.s32.totalorder %s73, %s75
      %p82 = scmp.eq.s32.totalorder %s23, 2
      %p83 = por %p81, %p82
      %p84 = scmp.ne.s32.totalorder %s75, %s76
      %p85 = scmp.eq.s32.totalorder %s23, 0
      %p86 = por %p84, %p85
      %p87 = scmp.ne.s32.totalorder %s75, %s76
      %p88 = scmp.eq.s32.totalorder %s24, 2
      %p89 = por %p87, %p88
      %p91 = scmp.ne.s32.totalorder %s76, %s90
      %p92 = scmp.eq.s32.totalorder %s24, 0
      %p93 = por %p91, %p92
      %s95 = sadd.s32 %s94, 1
      %p98 = scmp.eq.s32.totalorder %s18, 2
      %p99 = scmp.ne.s32.totalorder %s94, %s96
      %p100 = scmp.eq.s32.totalorder %s18, 0
      %p101 = por %p99, %p100
      %p102 = scmp.ne.s32.totalorder %s94, %s96
      %p103 = scmp.eq.s32.totalorder %s23, 2
      %p104 = por %p102, %p103
      %p105 = scmp.ne.s32.totalorder %s96, %s97
      %p106 = scmp.eq.s32.totalorder %s23, 0
      %p107 = por %p105, %p106
      %p108 = scmp.ne.s32.totalorder %s96, %s97
      %p109 = scmp.eq.s32.totalorder %s24, 2
      %p110 = por %p108, %p109
      %p112 = scmp.ne.s32.totalorder %s97, %s111
      %p113 = scmp.eq.s32.totalorder %s24, 0
      %p114 = por %p112, %p113
      %s116 = sadd.s32 %s115, 1
      %p119 = scmp.eq.s32.totalorder %s18, 2
      %p120 = scmp.ne.s32.totalorder %s115, %s117
      %p121 = scmp.eq.s32.totalorder %s18, 0
      %p122 = por %p120, %p121
      %p123 = scmp.ne.s32.totalorder %s115, %s117
      %p124 = scmp.eq.s32.totalorder %s23, 2
      %p125 = por %p123, %p124
      %p126 = scmp.ne.s32.totalorder %s117, %s118
      %p127 = scmp.eq.s32.totalorder %s23, 0
      %p128 = por %p126, %p127
      %p129 = scmp.ne.s32.totalorder %s117, %s118
      %p130 = scmp.eq.s32.totalorder %s24, 2
      %p131 = por %p129, %p130
      %p133 = scmp.ne.s32.totalorder %s118, %s132
      %p134 = scmp.eq.s32.totalorder %s24, 0
      %p135 = por %p133, %p134
      %s137 = sadd.s32 %s136, 1
      %p140 = scmp.eq.s32.totalorder %s18, 2
      %p141 = scmp.ne.s32.totalorder %s136, %s138
      %p142 = scmp.eq.s32.totalorder %s18, 0
      %p143 = por %p141, %p142
      %p144 = scmp.ne.s32.totalorder %s136, %s138
      %p145 = scmp.eq.s32.totalorder %s23, 2
      %p146 = por %p144, %p145
      %p147 = scmp.ne.s32.totalorder %s138, %s139
      %p148 = scmp.eq.s32.totalorder %s23, 0
      %p149 = por %p147, %p148
      %p150 = scmp.ne.s32.totalorder %s138, %s139
      %p151 = scmp.eq.s32.totalorder %s24, 2
      %p152 = por %p150, %p151
      %p154 = scmp.ne.s32.totalorder %s139, %s153
      %p155 = scmp.eq.s32.totalorder %s24, 0
      %p156 = por %p154, %p155
      %s158 = sadd.s32 %s157, 1
      %p161 = scmp.eq.s32.totalorder %s18, 2
      %p162 = scmp.ne.s32.totalorder %s157, %s159
      %p163 = scmp.eq.s32.totalorder %s18, 0
      %p164 = por %p162, %p163
      %p165 = scmp.ne.s32.totalorder %s157, %s159
      %p166 = scmp.eq.s32.totalorder %s23, 2
      %p167 = por %p165, %p166
      %p168 = scmp.ne.s32.totalorder %s159, %s160
      %p169 = scmp.eq.s32.totalorder %s23, 0
      %p170 = por %p168, %p169
      %p171 = scmp.ne.s32.totalorder %s159, %s160
      %p172 = scmp.eq.s32.totalorder %s24, 2
      %p173 = por %p171, %p172
      %p175 = scmp.ne.s32.totalorder %s160, %s174
      %p176 = scmp.eq.s32.totalorder %s24, 0
      %p177 = por %p175, %p176
      %s178 = ssub.s32 %s18, %s25
      %p179 = scmp.eq.s32.totalorder %s178, 0
      %s181 = sadd.s32 %s180, 1
      %s182 = scalar_select %p179, %s180, %s181
      %p185 = pneg %p179
      %p186 = scmp.eq.s32.totalorder %s18, 2
      %p187 = por %p185, %p186
      %p188 = scmp.ne.s32.totalorder %s180, %s183
      %p189 = scmp.eq.s32.totalorder %s18, 0
      %p190 = por %p188, %p189
      %p191 = scmp.ne.s32.totalorder %s180, %s183
      %p192 = scmp.eq.s32.totalorder %s23, 2
      %p193 = por %p191, %p192
      %p194 = scmp.ne.s32.totalorder %s183, %s184
      %p195 = scmp.eq.s32.totalorder %s23, 0
      %p196 = por %p194, %p195
      %p197 = scmp.ne.s32.totalorder %s183, %s184
      %p198 = scmp.eq.s32.totalorder %s24, 2
      %p199 = por %p197, %p198
      %p201 = scmp.ne.s32.totalorder %s184, %s200
      %p202 = scmp.eq.s32.totalorder %s24, 0
      %p203 = por %p201, %p202
      %p204 = scmp.le.s32.totalorder 1, %s18
      %p205 = scmp.lt.s32.totalorder %s18, 4
      %p206 = pnand %p204, %p205
      %p207 = pneg %p206
      // Predicated region
      $region9: #{tpu_custom_call.1} parent=5 // pred_check
        _
      $region10: #{tpu_custom_call.1} parent=5 // pred_check_branch
        %209 = sbr.rel (%p206) target = $region12
      $region11: #{tpu_custom_call.1} parent=5 // pred_region
        %s210 = ssub.s32 %s18, 1
        // Predicated region
        $region13: #{tpu_custom_call.1} parent=11 // pred_check
          %p211 = pneg %p65
        $region14: #{tpu_custom_call.1} parent=11 // pred_check_branch
          %213 = sbr.rel (%p211) target = $region16
        $region15: #{tpu_custom_call.1} parent=11 // pred_region
          _
        $region16: #{tpu_custom_call.1} parent=11 // pred_fallthru
          _
        // Predicated region
        $region17: #{tpu_custom_call.1} parent=11 // pred_check
          %p214 = pneg %p86
        $region18: #{tpu_custom_call.1} parent=11 // pred_check_branch
          %216 = sbr.rel (%p214) target = $region20
        $region19: #{tpu_custom_call.1} parent=11 // pred_region
          _
        $region20: #{tpu_custom_call.1} parent=11 // pred_fallthru
          _
        // Predicated region
        $region21: #{tpu_custom_call.1} parent=11 // pred_check
          %p217 = pneg %p107
        $region22: #{tpu_custom_call.1} parent=11 // pred_check_branch
          %219 = sbr.rel (%p217) target = $region24
        $region23: #{tpu_custom_call.1} parent=11 // pred_region
          _
        $region24: #{tpu_custom_call.1} parent=11 // pred_fallthru
          _
        // Predicated region
        $region25: #{tpu_custom_call.1} parent=11 // pred_check
          %p220 = pneg %p128
        $region26: #{tpu_custom_call.1} parent=11 // pred_check_branch
          %222 = sbr.rel (%p220) target = $region28
        $region27: #{tpu_custom_call.1} parent=11 // pred_region
          _
        $region28: #{tpu_custom_call.1} parent=11 // pred_fallthru
          _
        // Predicated region
        $region29: #{tpu_custom_call.1} parent=11 // pred_check
          %p223 = pneg %p149
        $region30: #{tpu_custom_call.1} parent=11 // pred_check_branch
          %225 = sbr.rel (%p223) target = $region32
        $region31: #{tpu_custom_call.1} parent=11 // pred_region
          _
        $region32: #{tpu_custom_call.1} parent=11 // pred_fallthru
          _
        // Predicated region
        $region33: #{tpu_custom_call.1} parent=11 // pred_check
          %p226 = pneg %p170
        $region34: #{tpu_custom_call.1} parent=11 // pred_check_branch
          %228 = sbr.rel (%p226) target = $region36
        $region35: #{tpu_custom_call.1} parent=11 // pred_region
          _
        $region36: #{tpu_custom_call.1} parent=11 // pred_fallthru
          _
      $region12: #{tpu_custom_call.1} parent=5 // pred_fallthru
        _
      %p229 = scmp.lt.s32.totalorder %s18, 3
      // Predicated region
      $region37: #{tpu_custom_call.1} parent=5 // pred_check
        %p230 = pneg %p229
      $region38: #{tpu_custom_call.1} parent=5 // pred_check_branch
        %232 = sbr.rel (%p230) target = $region40
      $region39: #{tpu_custom_call.1} parent=5 // pred_region
        // Predicated region
        $region41: #{tpu_custom_call.1} parent=39 // pred_check
          %p233 = pneg %p38
        $region42: #{tpu_custom_call.1} parent=39 // pred_check_branch
          %235 = sbr.rel (%p233) target = $region44
        $region43: #{tpu_custom_call.1} parent=39 // pred_region
          %s236 = smul.u32 20, %s18
          %p237 = scmp.lt.s32.totalorder %s236, 59
          %s238 = scalar_select %p237, %s236, 59
          %s239 = smul.addr %s238, 8
          %s240 = scalar_lea.vmem %s0, %s239
          %s241 = smul.u32 20, %s18
        $region44: #{tpu_custom_call.1} parent=39 // pred_fallthru
          _
      $region40: #{tpu_custom_call.1} parent=5 // pred_fallthru
        _
      %p242 = scmp.le.s32.totalorder 1, %s18
      %p243 = scmp.lt.s32.totalorder %s18, 4
      %p244 = pnand %p242, %p243
      %p245 = pneg %p244
      // Predicated region
      $region45: #{tpu_custom_call.1} parent=5 // pred_check
        _
      $region46: #{tpu_custom_call.1} parent=5 // pred_check_branch
        %247 = sbr.rel (%p244) target = $region48
      $region47: #{tpu_custom_call.1} parent=5 // pred_region
        %s248 = ssub.s32 %s18, 1
        %s249 = smul.u32 20, %s23
        %p250 = scmp.lt.s32.totalorder %s249, 59
        %s251 = scalar_select %p250, %s249, 59
        %s252 = smul.addr %s251, 8
        %s253 = scalar_lea.vmem %s0, %s252
        %p254 = pneg %p44
        %p255 = pneg %p41
        %p256 = pneg %p65
        %p257 = pneg %p62
        %p258 = pneg %p86
        %p259 = pneg %p83
        %p260 = pneg %p107
        %p261 = pneg %p104
        %p262 = pneg %p128
        %p263 = pneg %p125
        %p264 = pneg %p149
        %p265 = pneg %p146
        %p266 = pneg %p170
        %p267 = pneg %p167
        %p268 = pneg %p196
        %p269 = pneg %p193
        %s270 = sand.u32 %s183, 1
        %s271 = scalar_lea.sflag [#allocation5], %s270
        %s272 = sand.u32 %s183, 1
        %s273 = smul.addr %s272, 160
        %s274 = scalar_lea.vmem [#allocation4], %s273
        %s275 = smul.u32 20, %s23
        %p276 = scmp.lt.s32.totalorder %s275, 59
        %s277 = scalar_select %p276, %s275, 59
        %s278 = smul.addr %s277, 8
        %s279 = scalar_lea.vmem %s0, %s278
        %s280 = smul.u32 20, %s23
        %s281 = smul.u32 20, %s23
        %p282 = scmp.eq.s32.totalorder %s23, 0
        // Predicated region
        $region49: #{tpu_custom_call.1} parent=47 // pred_check
          %p283 = pneg %p282
        $region50: #{tpu_custom_call.1} parent=47 // pred_check_branch
          %285 = sbr.rel (%p283) target = $region52
        $region51: #{tpu_custom_call.1} parent=47 // pred_region
          %v286 = vld [vmem:[%s1] sm:$0xff]
          %287 = vst [vmem:[#allocation2] sm:$0xff] %v286
        $region52: #{tpu_custom_call.1} parent=47 // pred_fallthru
          _
        %v288 = vld [vmem:[%s279] sm:$0xff]
        %v289 = vld [vmem:[%s279 + $0x8] sm:$0xff]
        %v290 = vld [vmem:[%s279 + $0x10] sm:$0xff]
        %v291 = vld [vmem:[%s279 + $0x18] sm:$0xff]
        %v292 = vld [vmem:[%s279 + $0x20] sm:$0xff]
        %v293 = vld [vmem:[%s279 + $0x28] sm:$0xff]
        %v294 = vld [vmem:[%s279 + $0x30] sm:$0xff]
        %v295 = vld [vmem:[%s279 + $0x38] sm:$0xff]
        %v296 = vld [vmem:[%s279 + $0x40] sm:$0xff]
        %v297 = vld [vmem:[%s279 + $0x48] sm:$0xff]
        %v298 = vld [vmem:[%s279 + $0x50] sm:$0xff]
        %v299 = vld [vmem:[%s279 + $0x58] sm:$0xff]
        %v300 = vld [vmem:[%s279 + $0x60] sm:$0xff]
        %v301 = vld [vmem:[%s279 + $0x68] sm:$0xff]
        %v302 = vld [vmem:[%s279 + $0x70] sm:$0xff]
        %v303 = vld [vmem:[%s279 + $0x78] sm:$0xff]
        %v304 = vld [vmem:[%s279 + $0x80] sm:$0xff]
        %v305 = vld [vmem:[%s279 + $0x88] sm:$0xff]
        %v306 = vld [vmem:[%s279 + $0x90] sm:$0xff]
        %v307 = vld [vmem:[%s279 + $0x98] sm:$0xff]
        %v308 = vld [vmem:[%s2] sm:$0xff]
        %v309 = vld [vmem:[%s4] sm:$0x1]
        %v311 = vlaneseq
        %v312 = vshrl.u32 %v311, 7
        %v313 = vsub.s32 0, %v312
        %v314 = vrot.slane %v309, %v313
        %vm316 = vcmask 64512
        %v318 = vsel %vm316, %v288, 0
        %v321 = vsel %vm316, %v289, 0
        %v324 = vsel %vm316, %v290, 0
        %v327 = vsel %vm316, %v291, 0
        %v330 = vsel %vm316, %v292, 0
        %v333 = vsel %vm316, %v293, 0
        %v336 = vsel %vm316, %v294, 0
        %v339 = vsel %vm316, %v295, 0
        %v342 = vsel %vm316, %v296, 0
        %v345 = vsel %vm316, %v297, 0
        %v348 = vsel %vm316, %v298, 0
        %v351 = vsel %vm316, %v299, 0
        %v354 = vsel %vm316, %v300, 0
        %v357 = vsel %vm316, %v301, 0
        %v360 = vsel %vm316, %v302, 0
        %v363 = vsel %vm316, %v303, 0
        %v366 = vsel %vm316, %v304, 0
        %v369 = vsel %vm316, %v305, 0
        %v372 = vsel %vm316, %v306, 0
        %v375 = vsel %vm316, %v307, 0
        %377 = vmatprep.subr.mxu0 0.0
        %378 = vmatpush1.msra.mxu0 0.0
        %379 = vmatprep.subr.mxu0 0.0
        %380 = vmatpush1.msra.mxu0 0.0
        %381 = vmatprep.subr.mxu0 0.0
        %382 = vmatpush1.msra.mxu0 0.0
        %383 = vmatprep.subr.mxu0 0.0
        %384 = vmatpush1.msra.mxu0 0.0
        %385 = vmatprep.subr.mxu0 0.0
        %386 = vmatpush1.msra.mxu0 0.0
        %387 = vmatprep.subr.mxu0 0.0
        %388 = vmatpush1.msra.mxu0 0.0
        %389 = vmatprep.subr.mxu0 0.0
        %390 = vmatpush1.msra.mxu0 0.0
        %391 = vmatprep.subr.mxu0 0.0
        %392 = vmatpush1.msra.mxu0 0.0
        %393 = vmatprep.subr.mxu0 0.0
        %394 = vmatpush1.msra.mxu0 0.0
        %395 = vmatprep.subr.mxu0 0.0
        %396 = vmatpush1.msra.mxu0 0.0
        %397 = vmatprep.subr.mxu0 0.0
        %398 = vmatpush1.msra.mxu0 0.0
        %399 = vmatprep.subr.mxu0 0.0
        %400 = vmatpush1.msra.mxu0 0.0
        %401 = vmatprep.subr.mxu0 0.0
        %402 = vmatpush1.msra.mxu0 0.0
        %403 = vmatprep.subr.mxu0 0.0
        %404 = vmatpush1.msra.mxu0 0.0
        %405 = vmatprep.subr.mxu0 0.0
        %406 = vmatpush1.msra.mxu0 0.0
        %407 = vmatprep.subr.mxu0 0.0
        %408 = vmatpush1.msra.mxu0 %v308
        %409 = vmatprep.subr.mxu0 0.0
        %410 = vmatpush2.msra.mxu0 0.0
        %411 = vmatprep.subr.mxu0 0.0
        %412 = vmatpush2.msra.mxu0 0.0
        %413 = vmatprep.subr.mxu0 0.0
        %414 = vmatpush2.msra.mxu0 0.0
        %415 = vmatprep.subr.mxu0 0.0
        %416 = vmatpush2.msra.mxu0 0.0
        %417 = vmatprep.subr.mxu0 0.0
        %418 = vmatpush2.msra.mxu0 0.0
        %419 = vmatprep.subr.mxu0 0.0
        %420 = vmatpush2.msra.mxu0 0.0
        %421 = vmatprep.subr.mxu0 0.0
        %422 = vmatpush2.msra.mxu0 0.0
        %423 = vmatprep.subr.mxu0 0.0
        %424 = vmatpush2.msra.mxu0 0.0
        %425 = vmatprep.subr.mxu0 0.0
        %426 = vmatpush2.msra.mxu0 0.0
        %427 = vmatprep.subr.mxu0 0.0
        %428 = vmatpush2.msra.mxu0 0.0
        %429 = vmatprep.subr.mxu0 0.0
        %430 = vmatpush2.msra.mxu0 0.0
        %431 = vmatprep.subr.mxu0 0.0
        %432 = vmatpush2.msra.mxu0 0.0
        %433 = vmatprep.subr.mxu0 0.0
        %434 = vmatpush2.msra.mxu0 0.0
        %435 = vmatprep.subr.mxu0 0.0
        %436 = vmatpush2.msra.mxu0 0.0
        %437 = vmatprep.subr.mxu0 0.0
        %438 = vmatpush2.msra.mxu0 0.0
        %439 = vmatprep.subr.mxu0 0.0
        %440 = vmatpush2.msra.mxu0 0.0
        %441 = vmatprep.mubr.f32.mxu0 0.0
        %442 = vmatmul.mubr.f32.gmra.mxu0 %v318
        %v443 = vpop.f32.mrf.mxu0
        %v444 = vadd.f32 %v314, %v443
        %v445 = vpop.f32.mrf.mxu0
        %446 = vmatprep.mubr.f32.mxu0 0.0
        %447 = vmatmul.mubr.f32.gmra.mxu0 %v321
        %v448 = vpop.f32.mrf.mxu0
        %v449 = vadd.f32 %v314, %v448
        %v450 = vpop.f32.mrf.mxu0
        %451 = vmatprep.mubr.f32.mxu0 0.0
        %452 = vmatmul.mubr.f32.gmra.mxu0 %v324
        %v453 = vpop.f32.mrf.mxu0
        %v454 = vadd.f32 %v314, %v453
        %v455 = vpop.f32.mrf.mxu0
        %456 = vmatprep.mubr.f32.mxu0 0.0
        %457 = vmatmul.mubr.f32.gmra.mxu0 %v327
        %v458 = vpop.f32.mrf.mxu0
        %v459 = vadd.f32 %v314, %v458
        %v460 = vpop.f32.mrf.mxu0
        %461 = vmatprep.mubr.f32.mxu0 0.0
        %462 = vmatmul.mubr.f32.gmra.mxu0 %v330
        %v463 = vpop.f32.mrf.mxu0
        %v464 = vadd.f32 %v314, %v463
        %v465 = vpop.f32.mrf.mxu0
        %466 = vmatprep.mubr.f32.mxu0 0.0
        %467 = vmatmul.mubr.f32.gmra.mxu0 %v333
        %v468 = vpop.f32.mrf.mxu0
        %v469 = vadd.f32 %v314, %v468
        %v470 = vpop.f32.mrf.mxu0
        %471 = vmatprep.mubr.f32.mxu0 0.0
        %472 = vmatmul.mubr.f32.gmra.mxu0 %v336
        %v473 = vpop.f32.mrf.mxu0
        %v474 = vadd.f32 %v314, %v473
        %v475 = vpop.f32.mrf.mxu0
        %476 = vmatprep.mubr.f32.mxu0 0.0
        %477 = vmatmul.mubr.f32.gmra.mxu0 %v339
        %v478 = vpop.f32.mrf.mxu0
        %v479 = vadd.f32 %v314, %v478
        %v480 = vpop.f32.mrf.mxu0
        %481 = vmatprep.mubr.f32.mxu0 0.0
        %482 = vmatmul.mubr.f32.gmra.mxu0 %v342
        %v483 = vpop.f32.mrf.mxu0
        %v484 = vadd.f32 %v314, %v483
        %v485 = vpop.f32.mrf.mxu0
        %486 = vmatprep.mubr.f32.mxu0 0.0
        %487 = vmatmul.mubr.f32.gmra.mxu0 %v345
        %v488 = vpop.f32.mrf.mxu0
        %v489 = vadd.f32 %v314, %v488
        %v490 = vpop.f32.mrf.mxu0
        %491 = vmatprep.mubr.f32.mxu0 0.0
        %492 = vmatmul.mubr.f32.gmra.mxu0 %v348
        %v493 = vpop.f32.mrf.mxu0
        %v494 = vadd.f32 %v314, %v493
        %v495 = vpop.f32.mrf.mxu0
        %496 = vmatprep.mubr.f32.mxu0 0.0
        %497 = vmatmul.mubr.f32.gmra.mxu0 %v351
        %v498 = vpop.f32.mrf.mxu0
        %v499 = vadd.f32 %v314, %v498
        %v500 = vpop.f32.mrf.mxu0
        %501 = vmatprep.mubr.f32.mxu0 0.0
        %502 = vmatmul.mubr.f32.gmra.mxu0 %v354
        %v503 = vpop.f32.mrf.mxu0
        %v504 = vadd.f32 %v314, %v503
        %v505 = vpop.f32.mrf.mxu0
        %506 = vmatprep.mubr.f32.mxu0 0.0
        %507 = vmatmul.mubr.f32.gmra.mxu0 %v357
        %v508 = vpop.f32.mrf.mxu0
        %v509 = vadd.f32 %v314, %v508
        %v510 = vpop.f32.mrf.mxu0
        %511 = vmatprep.mubr.f32.mxu0 0.0
        %512 = vmatmul.mubr.f32.gmra.mxu0 %v360
        %v513 = vpop.f32.mrf.mxu0
        %v514 = vadd.f32 %v314, %v513
        %v515 = vpop.f32.mrf.mxu0
        %516 = vmatprep.mubr.f32.mxu0 0.0
        %517 = vmatmul.mubr.f32.gmra.mxu0 %v363
        %v518 = vpop.f32.mrf.mxu0
        %v519 = vadd.f32 %v314, %v518
        %v520 = vpop.f32.mrf.mxu0
        %521 = vmatprep.mubr.f32.mxu0 0.0
        %522 = vmatmul.mubr.f32.gmra.mxu0 %v366
        %v523 = vpop.f32.mrf.mxu0
        %v524 = vadd.f32 %v314, %v523
        %v525 = vpop.f32.mrf.mxu0
        %526 = vmatprep.mubr.f32.mxu0 0.0
        %527 = vmatmul.mubr.f32.gmra.mxu0 %v369
        %v528 = vpop.f32.mrf.mxu0
        %v529 = vadd.f32 %v314, %v528
        %v530 = vpop.f32.mrf.mxu0
        %531 = vmatprep.mubr.f32.mxu0 0.0
        %532 = vmatmul.mubr.f32.gmra.mxu0 %v372
        %v533 = vpop.f32.mrf.mxu0
        %v534 = vadd.f32 %v314, %v533
        %v535 = vpop.f32.mrf.mxu0
        %536 = vmatprep.mubr.f32.mxu0 0.0
        %537 = vmatmul.mubr.f32.gmra.mxu0 %v375
        %v538 = vpop.f32.mrf.mxu0
        %v539 = vadd.f32 %v314, %v538
        %v540 = vpop.f32.mrf.mxu0
        %541 = vdwg.mxu0
        %542 = vst [vmem:[%s274] sm:$0xff] %v444
        %543 = vst [vmem:[%s274 + $0x8] sm:$0xff] %v449
        %544 = vst [vmem:[%s274 + $0x10] sm:$0xff] %v454
        %545 = vst [vmem:[%s274 + $0x18] sm:$0xff] %v459
        %546 = vst [vmem:[%s274 + $0x20] sm:$0xff] %v464
        %547 = vst [vmem:[%s274 + $0x28] sm:$0xff] %v469
        %548 = vst [vmem:[%s274 + $0x30] sm:$0xff] %v474
        %549 = vst [vmem:[%s274 + $0x38] sm:$0xff] %v479
        %550 = vst [vmem:[%s274 + $0x40] sm:$0xff] %v484
        %551 = vst [vmem:[%s274 + $0x48] sm:$0xff] %v489
        %552 = vst [vmem:[%s274 + $0x50] sm:$0xff] %v494
        %553 = vst [vmem:[%s274 + $0x58] sm:$0xff] %v499
        %554 = vst [vmem:[%s274 + $0x60] sm:$0xff] %v504
        %555 = vst [vmem:[%s274 + $0x68] sm:$0xff] %v509
        %556 = vst [vmem:[%s274 + $0x70] sm:$0xff] %v514
        %557 = vst [vmem:[%s274 + $0x78] sm:$0xff] %v519
        %558 = vst [vmem:[%s274 + $0x80] sm:$0xff] %v524
        %559 = vst [vmem:[%s274 + $0x88] sm:$0xff] %v529
        %560 = vst [vmem:[%s274 + $0x90] sm:$0xff] %v534
        %561 = vst [vmem:[%s274 + $0x98] sm:$0xff] %v539
        %v562 = vld [vmem:[%s3] sm:$0xff]
        %v563 = vld [vmem:[%s3 + $0x8] sm:$0xff]
        %v564 = vld [vmem:[%s3 + $0x10] sm:$0xff]
        %v565 = vld [vmem:[%s3 + $0x18] sm:$0xff]
        %v566 = vld [vmem:[%s3 + $0x20] sm:$0xff]
        %v567 = vld [vmem:[%s3 + $0x28] sm:$0xff]
        %v568 = vld [vmem:[%s3 + $0x30] sm:$0xff]
        %v569 = vld [vmem:[%s3 + $0x38] sm:$0xff]
        %v570 = vld [vmem:[%s3 + $0x40] sm:$0xff]
        %v571 = vld [vmem:[%s3 + $0x48] sm:$0xff]
        %v572 = vld [vmem:[%s3 + $0x50] sm:$0xff]
        %v573 = vld [vmem:[%s3 + $0x58] sm:$0xff]
        %v574 = vld [vmem:[%s3 + $0x60] sm:$0xff]
        %v575 = vld [vmem:[%s3 + $0x68] sm:$0xff]
        %v576 = vld [vmem:[%s3 + $0x70] sm:$0xff]
        %v577 = vld [vmem:[%s3 + $0x78] sm:$0xff]
        %s578 = smul.u32 %s23, 20
        %v579 = vld [vmem:[#allocation2] sm:$0xff]
        %v580 = vld [vmem:[%s274] sm:$0xff]
        %581 = vmatprep.subr.mxu0 0.0
        %582 = vmatpush1.msra.mxu0 %v577
        %583 = vmatprep.subr.mxu0 0.0
        %584 = vmatpush1.msra.mxu0 %v576
        %585 = vmatprep.subr.mxu0 0.0
        %586 = vmatpush1.msra.mxu0 %v575
        %587 = vmatprep.subr.mxu0 0.0
        %588 = vmatpush1.msra.mxu0 %v574
        %589 = vmatprep.subr.mxu0 0.0
        %590 = vmatpush1.msra.mxu0 %v573
        %591 = vmatprep.subr.mxu0 0.0
        %592 = vmatpush1.msra.mxu0 %v572
        %593 = vmatprep.subr.mxu0 0.0
        %594 = vmatpush1.msra.mxu0 %v571
        %595 = vmatprep.subr.mxu0 0.0
        %596 = vmatpush1.msra.mxu0 %v570
        %597 = vmatprep.subr.mxu0 0.0
        %598 = vmatpush1.msra.mxu0 %v569
        %599 = vmatprep.subr.mxu0 0.0
        %600 = vmatpush1.msra.mxu0 %v568
        %601 = vmatprep.subr.mxu0 0.0
        %602 = vmatpush1.msra.mxu0 %v567
        %603 = vmatprep.subr.mxu0 0.0
        %604 = vmatpush1.msra.mxu0 %v566
        %605 = vmatprep.subr.mxu0 0.0
        %606 = vmatpush1.msra.mxu0 %v565
        %607 = vmatprep.subr.mxu0 0.0
        %608 = vmatpush1.msra.mxu0 %v564
        %609 = vmatprep.subr.mxu0 0.0
        %610 = vmatpush1.msra.mxu0 %v563
        %611 = vmatprep.subr.mxu0 0.0
        %612 = vmatpush1.msra.mxu0 %v562
        %613 = vmatprep.subr.mxu0 0.0
        %614 = vmatpush2.msra.mxu0 0.0
        %615 = vmatprep.subr.mxu0 0.0
        %616 = vmatpush2.msra.mxu0 0.0
        %617 = vmatprep.subr.mxu0 0.0
        %618 = vmatpush2.msra.mxu0 0.0
        %619 = vmatprep.subr.mxu0 0.0
        %620 = vmatpush2.msra.mxu0 0.0
        %621 = vmatprep.subr.mxu0 0.0
        %622 = vmatpush2.msra.mxu0 0.0
        %623 = vmatprep.subr.mxu0 0.0
        %624 = vmatpush2.msra.mxu0 0.0
        %625 = vmatprep.subr.mxu0 0.0
        %626 = vmatpush2.msra.mxu0 0.0
        %627 = vmatprep.subr.mxu0 0.0
        %628 = vmatpush2.msra.mxu0 0.0
        %629 = vmatprep.subr.mxu0 0.0
        %630 = vmatpush2.msra.mxu0 0.0
        %631 = vmatprep.subr.mxu0 0.0
        %632 = vmatpush2.msra.mxu0 0.0
        %633 = vmatprep.subr.mxu0 0.0
        %634 = vmatpush2.msra.mxu0 0.0
        %635 = vmatprep.subr.mxu0 0.0
        %636 = vmatpush2.msra.mxu0 0.0
        %637 = vmatprep.subr.mxu0 0.0
        %638 = vmatpush2.msra.mxu0 0.0
        %639 = vmatprep.subr.mxu0 0.0
        %640 = vmatpush2.msra.mxu0 0.0
        %641 = vmatprep.subr.mxu0 0.0
        %642 = vmatpush2.msra.mxu0 0.0
        %643 = vmatprep.subr.mxu0 0.0
        %644 = vmatpush2.msra.mxu0 0.0
        %645 = vmatprep.mubr.f32.mxu0 0.0
        %646 = vmatmul.mubr.f32.gmra.mxu0 %v579
        %v647 = vpop.f32.mrf.mxu0
        %v648 = vadd.f32 0.0, %v647
        %v649 = vpop.f32.mrf.mxu0
        %650 = vdwg.mxu0
        %v651 = vadd.f32 %v580, %v648
        %v652 = vtanh.pop %v651
        %653 = vst [vmem:[%s274] sm:$0xff] %v652
        %p654 = scmp.lt.s32.totalorder %s578, 48
        %s655 = scalar_select %p654, 1, 0
        %v656 = vstv %s655
        %vm657 = vcmp.eq.s32.totalorder %v656, 1
        %v658 = vsel %vm657, %v652, %v579
        %s659 = scalar_lea.vmem %s274, 8 [#allocation4]
        %v660 = vld [vmem:[%s659] sm:$0xff]
        %661 = vmatprep.subr.mxu0 0.0
        %662 = vmatpush1.msra.mxu0 %v577
        %663 = vmatprep.subr.mxu0 0.0
        %664 = vmatpush1.msra.mxu0 %v576
        %665 = vmatprep.subr.mxu0 0.0
        %666 = vmatpush1.msra.mxu0 %v575
        %667 = vmatprep.subr.mxu0 0.0
        %668 = vmatpush1.msra.mxu0 %v574
        %669 = vmatprep.subr.mxu0 0.0
        %670 = vmatpush1.msra.mxu0 %v573
        %671 = vmatprep.subr.mxu0 0.0
        %672 = vmatpush1.msra.mxu0 %v572
        %673 = vmatprep.subr.mxu0 0.0
        %674 = vmatpush1.msra.mxu0 %v571
        %675 = vmatprep.subr.mxu0 0.0
        %676 = vmatpush1.msra.mxu0 %v570
        %677 = vmatprep.subr.mxu0 0.0
        %678 = vmatpush1.msra.mxu0 %v569
        %679 = vmatprep.subr.mxu0 0.0
        %680 = vmatpush1.msra.mxu0 %v568
        %681 = vmatprep.subr.mxu0 0.0
        %682 = vmatpush1.msra.mxu0 %v567
        %683 = vmatprep.subr.mxu0 0.0
        %684 = vmatpush1.msra.mxu0 %v566
        %685 = vmatprep.subr.mxu0 0.0
        %686 = vmatpush1.msra.mxu0 %v565
        %687 = vmatprep.subr.mxu0 0.0
        %688 = vmatpush1.msra.mxu0 %v564
        %689 = vmatprep.subr.mxu0 0.0
        %690 = vmatpush1.msra.mxu0 %v563
        %691 = vmatprep.subr.mxu0 0.0
        %692 = vmatpush1.msra.mxu0 %v562
        %693 = vmatprep.subr.mxu0 0.0
        %694 = vmatpush2.msra.mxu0 0.0
        %695 = vmatprep.subr.mxu0 0.0
        %696 = vmatpush2.msra.mxu0 0.0
        %697 = vmatprep.subr.mxu0 0.0
        %698 = vmatpush2.msra.mxu0 0.0
        %699 = vmatprep.subr.mxu0 0.0
        %700 = vmatpush2.msra.mxu0 0.0
        %701 = vmatprep.subr.mxu0 0.0
        %702 = vmatpush2.msra.mxu0 0.0
        %703 = vmatprep.subr.mxu0 0.0
        %704 = vmatpush2.msra.mxu0 0.0
        %705 = vmatprep.subr.mxu0 0.0
        %706 = vmatpush2.msra.mxu0 0.0
        %707 = vmatprep.subr.mxu0 0.0
        %708 = vmatpush2.msra.mxu0 0.0
        %709 = vmatprep.subr.mxu0 0.0
        %710 = vmatpush2.msra.mxu0 0.0
        %711 = vmatprep.subr.mxu0 0.0
        %712 = vmatpush2.msra.mxu0 0.0
        %713 = vmatprep.subr.mxu0 0.0
        %714 = vmatpush2.msra.mxu0 0.0
        %715 = vmatprep.subr.mxu0 0.0
        %716 = vmatpush2.msra.mxu0 0.0
        %717 = vmatprep.subr.mxu0 0.0
        %718 = vmatpush2.msra.mxu0 0.0
        %719 = vmatprep.subr.mxu0 0.0
        %720 = vmatpush2.msra.mxu0 0.0
        %721 = vmatprep.subr.mxu0 0.0
        %722 = vmatpush2.msra.mxu0 0.0
        %723 = vmatprep.subr.mxu0 0.0
        %724 = vmatpush2.msra.mxu0 0.0
        %725 = vmatprep.mubr.f32.mxu0 0.0
        %726 = vmatmul.mubr.f32.gmra.mxu0 %v658
        %v727 = vpop.f32.mrf.mxu0
        %v728 = vadd.f32 0.0, %v727
        %v729 = vpop.f32.mrf.mxu0
        %730 = vdwg.mxu0
        %v731 = vadd.f32 %v660, %v728
        %v732 = vtanh.pop %v731
        %733 = vst [vmem:[%s659] sm:$0xff] %v732
        %s734 = sadd.s32 %s578, 1
        %p735 = scmp.lt.s32.totalorder %s734, 48
        %s736 = scalar_select %p735, 1, 0
        %v737 = vstv %s736
        %vm738 = vcmp.eq.s32.totalorder %v737, 1
        %v739 = vsel %vm738, %v732, %v658
        %s740 = scalar_lea.vmem %s274, 16 [#allocation4]
        %v741 = vld [vmem:[%s740] sm:$0xff]
        %742 = vmatprep.subr.mxu0 0.0
        %743 = vmatpush1.msra.mxu0 %v577
        %744 = vmatprep.subr.mxu0 0.0
        %745 = vmatpush1.msra.mxu0 %v576
        %746 = vmatprep.subr.mxu0 0.0
        %747 = vmatpush1.msra.mxu0 %v575
        %748 = vmatprep.subr.mxu0 0.0
        %749 = vmatpush1.msra.mxu0 %v574
        %750 = vmatprep.subr.mxu0 0.0
        %751 = vmatpush1.msra.mxu0 %v573
        %752 = vmatprep.subr.mxu0 0.0
        %753 = vmatpush1.msra.mxu0 %v572
        %754 = vmatprep.subr.mxu0 0.0
        %755 = vmatpush1.msra.mxu0 %v571
        %756 = vmatprep.subr.mxu0 0.0
        %757 = vmatpush1.msra.mxu0 %v570
        %758 = vmatprep.subr.mxu0 0.0
        %759 = vmatpush1.msra.mxu0 %v569
        %760 = vmatprep.subr.mxu0 0.0
        %761 = vmatpush1.msra.mxu0 %v568
        %762 = vmatprep.subr.mxu0 0.0
        %763 = vmatpush1.msra.mxu0 %v567
        %764 = vmatprep.subr.mxu0 0.0
        %765 = vmatpush1.msra.mxu0 %v566
        %766 = vmatprep.subr.mxu0 0.0
        %767 = vmatpush1.msra.mxu0 %v565
        %768 = vmatprep.subr.mxu0 0.0
        %769 = vmatpush1.msra.mxu0 %v564
        %770 = vmatprep.subr.mxu0 0.0
        %771 = vmatpush1.msra.mxu0 %v563
        %772 = vmatprep.subr.mxu0 0.0
        %773 = vmatpush1.msra.mxu0 %v562
        %774 = vmatprep.subr.mxu0 0.0
        %775 = vmatpush2.msra.mxu0 0.0
        %776 = vmatprep.subr.mxu0 0.0
        %777 = vmatpush2.msra.mxu0 0.0
        %778 = vmatprep.subr.mxu0 0.0
        %779 = vmatpush2.msra.mxu0 0.0
        %780 = vmatprep.subr.mxu0 0.0
        %781 = vmatpush2.msra.mxu0 0.0
        %782 = vmatprep.subr.mxu0 0.0
        %783 = vmatpush2.msra.mxu0 0.0
        %784 = vmatprep.subr.mxu0 0.0
        %785 = vmatpush2.msra.mxu0 0.0
        %786 = vmatprep.subr.mxu0 0.0
        %787 = vmatpush2.msra.mxu0 0.0
        %788 = vmatprep.subr.mxu0 0.0
        %789 = vmatpush2.msra.mxu0 0.0
        %790 = vmatprep.subr.mxu0 0.0
        %791 = vmatpush2.msra.mxu0 0.0
        %792 = vmatprep.subr.mxu0 0.0
        %793 = vmatpush2.msra.mxu0 0.0
        %794 = vmatprep.subr.mxu0 0.0
        %795 = vmatpush2.msra.mxu0 0.0
        %796 = vmatprep.subr.mxu0 0.0
        %797 = vmatpush2.msra.mxu0 0.0
        %798 = vmatprep.subr.mxu0 0.0
        %799 = vmatpush2.msra.mxu0 0.0
        %800 = vmatprep.subr.mxu0 0.0
        %801 = vmatpush2.msra.mxu0 0.0
        %802 = vmatprep.subr.mxu0 0.0
        %803 = vmatpush2.msra.mxu0 0.0
        %804 = vmatprep.subr.mxu0 0.0
        %805 = vmatpush2.msra.mxu0 0.0
        %806 = vmatprep.mubr.f32.mxu0 0.0
        %807 = vmatmul.mubr.f32.gmra.mxu0 %v739
        %v808 = vpop.f32.mrf.mxu0
        %v809 = vadd.f32 0.0, %v808
        %v810 = vpop.f32.mrf.mxu0
        %811 = vdwg.mxu0
        %v812 = vadd.f32 %v741, %v809
        %v813 = vtanh.pop %v812
        %814 = vst [vmem:[%s740] sm:$0xff] %v813
        %s815 = sadd.s32 %s578, 2
        %p816 = scmp.lt.s32.totalorder %s815, 48
        %s817 = scalar_select %p816, 1, 0
        %v818 = vstv %s817
        %vm819 = vcmp.eq.s32.totalorder %v818, 1
        %v820 = vsel %vm819, %v813, %v739
        %s821 = scalar_lea.vmem %s274, 24 [#allocation4]
        %v822 = vld [vmem:[%s821] sm:$0xff]
        %823 = vmatprep.subr.mxu0 0.0
        %824 = vmatpush1.msra.mxu0 %v577
        %825 = vmatprep.subr.mxu0 0.0
        %826 = vmatpush1.msra.mxu0 %v576
        %827 = vmatprep.subr.mxu0 0.0
        %828 = vmatpush1.msra.mxu0 %v575
        %829 = vmatprep.subr.mxu0 0.0
        %830 = vmatpush1.msra.mxu0 %v574
        %831 = vmatprep.subr.mxu0 0.0
        %832 = vmatpush1.msra.mxu0 %v573
        %833 = vmatprep.subr.mxu0 0.0
        %834 = vmatpush1.msra.mxu0 %v572
        %835 = vmatprep.subr.mxu0 0.0
        %836 = vmatpush1.msra.mxu0 %v571
        %837 = vmatprep.subr.mxu0 0.0
        %838 = vmatpush1.msra.mxu0 %v570
        %839 = vmatprep.subr.mxu0 0.0
        %840 = vmatpush1.msra.mxu0 %v569
        %841 = vmatprep.subr.mxu0 0.0
        %842 = vmatpush1.msra.mxu0 %v568
        %843 = vmatprep.subr.mxu0 0.0
        %844 = vmatpush1.msra.mxu0 %v567
        %845 = vmatprep.subr.mxu0 0.0
        %846 = vmatpush1.msra.mxu0 %v566
        %847 = vmatprep.subr.mxu0 0.0
        %848 = vmatpush1.msra.mxu0 %v565
        %849 = vmatprep.subr.mxu0 0.0
        %850 = vmatpush1.msra.mxu0 %v564
        %851 = vmatprep.subr.mxu0 0.0
        %852 = vmatpush1.msra.mxu0 %v563
        %853 = vmatprep.subr.mxu0 0.0
        %854 = vmatpush1.msra.mxu0 %v562
        %855 = vmatprep.subr.mxu0 0.0
        %856 = vmatpush2.msra.mxu0 0.0
        %857 = vmatprep.subr.mxu0 0.0
        %858 = vmatpush2.msra.mxu0 0.0
        %859 = vmatprep.subr.mxu0 0.0
        %860 = vmatpush2.msra.mxu0 0.0
        %861 = vmatprep.subr.mxu0 0.0
        %862 = vmatpush2.msra.mxu0 0.0
        %863 = vmatprep.subr.mxu0 0.0
        %864 = vmatpush2.msra.mxu0 0.0
        %865 = vmatprep.subr.mxu0 0.0
        %866 = vmatpush2.msra.mxu0 0.0
        %867 = vmatprep.subr.mxu0 0.0
        %868 = vmatpush2.msra.mxu0 0.0
        %869 = vmatprep.subr.mxu0 0.0
        %870 = vmatpush2.msra.mxu0 0.0
        %871 = vmatprep.subr.mxu0 0.0
        %872 = vmatpush2.msra.mxu0 0.0
        %873 = vmatprep.subr.mxu0 0.0
        %874 = vmatpush2.msra.mxu0 0.0
        %875 = vmatprep.subr.mxu0 0.0
        %876 = vmatpush2.msra.mxu0 0.0
        %877 = vmatprep.subr.mxu0 0.0
        %878 = vmatpush2.msra.mxu0 0.0
        %879 = vmatprep.subr.mxu0 0.0
        %880 = vmatpush2.msra.mxu0 0.0
        %881 = vmatprep.subr.mxu0 0.0
        %882 = vmatpush2.msra.mxu0 0.0
        %883 = vmatprep.subr.mxu0 0.0
        %884 = vmatpush2.msra.mxu0 0.0
        %885 = vmatprep.subr.mxu0 0.0
        %886 = vmatpush2.msra.mxu0 0.0
        %887 = vmatprep.mubr.f32.mxu0 0.0
        %888 = vmatmul.mubr.f32.gmra.mxu0 %v820
        %v889 = vpop.f32.mrf.mxu0
        %v890 = vadd.f32 0.0, %v889
        %v891 = vpop.f32.mrf.mxu0
        %892 = vdwg.mxu0
        %v893 = vadd.f32 %v822, %v890
        %v894 = vtanh.pop %v893
        %895 = vst [vmem:[%s821] sm:$0xff] %v894
        %s896 = sadd.s32 %s578, 3
        %p897 = scmp.lt.s32.totalorder %s896, 48
        %s898 = scalar_select %p897, 1, 0
        %v899 = vstv %s898
        %vm900 = vcmp.eq.s32.totalorder %v899, 1
        %v901 = vsel %vm900, %v894, %v820
        %s902 = scalar_lea.vmem %s274, 32 [#allocation4]
        %v903 = vld [vmem:[%s902] sm:$0xff]
        %904 = vmatprep.subr.mxu0 0.0
        %905 = vmatpush1.msra.mxu0 %v577
        %906 = vmatprep.subr.mxu0 0.0
        %907 = vmatpush1.msra.mxu0 %v576
        %908 = vmatprep.subr.mxu0 0.0
        %909 = vmatpush1.msra.mxu0 %v575
        %910 = vmatprep.subr.mxu0 0.0
        %911 = vmatpush1.msra.mxu0 %v574
        %912 = vmatprep.subr.mxu0 0.0
        %913 = vmatpush1.msra.mxu0 %v573
        %914 = vmatprep.subr.mxu0 0.0
        %915 = vmatpush1.msra.mxu0 %v572
        %916 = vmatprep.subr.mxu0 0.0
        %917 = vmatpush1.msra.mxu0 %v571
        %918 = vmatprep.subr.mxu0 0.0
        %919 = vmatpush1.msra.mxu0 %v570
        %920 = vmatprep.subr.mxu0 0.0
        %921 = vmatpush1.msra.mxu0 %v569
        %922 = vmatprep.subr.mxu0 0.0
        %923 = vmatpush1.msra.mxu0 %v568
        %924 = vmatprep.subr.mxu0 0.0
        %925 = vmatpush1.msra.mxu0 %v567
        %926 = vmatprep.subr.mxu0 0.0
        %927 = vmatpush1.msra.mxu0 %v566
        %928 = vmatprep.subr.mxu0 0.0
        %929 = vmatpush1.msra.mxu0 %v565
        %930 = vmatprep.subr.mxu0 0.0
        %931 = vmatpush1.msra.mxu0 %v564
        %932 = vmatprep.subr.mxu0 0.0
        %933 = vmatpush1.msra.mxu0 %v563
        %934 = vmatprep.subr.mxu0 0.0
        %935 = vmatpush1.msra.mxu0 %v562
        %936 = vmatprep.subr.mxu0 0.0
        %937 = vmatpush2.msra.mxu0 0.0
        %938 = vmatprep.subr.mxu0 0.0
        %939 = vmatpush2.msra.mxu0 0.0
        %940 = vmatprep.subr.mxu0 0.0
        %941 = vmatpush2.msra.mxu0 0.0
        %942 = vmatprep.subr.mxu0 0.0
        %943 = vmatpush2.msra.mxu0 0.0
        %944 = vmatprep.subr.mxu0 0.0
        %945 = vmatpush2.msra.mxu0 0.0
        %946 = vmatprep.subr.mxu0 0.0
        %947 = vmatpush2.msra.mxu0 0.0
        %948 = vmatprep.subr.mxu0 0.0
        %949 = vmatpush2.msra.mxu0 0.0
        %950 = vmatprep.subr.mxu0 0.0
        %951 = vmatpush2.msra.mxu0 0.0
        %952 = vmatprep.subr.mxu0 0.0
        %953 = vmatpush2.msra.mxu0 0.0
        %954 = vmatprep.subr.mxu0 0.0
        %955 = vmatpush2.msra.mxu0 0.0
        %956 = vmatprep.subr.mxu0 0.0
        %957 = vmatpush2.msra.mxu0 0.0
        %958 = vmatprep.subr.mxu0 0.0
        %959 = vmatpush2.msra.mxu0 0.0
        %960 = vmatprep.subr.mxu0 0.0
        %961 = vmatpush2.msra.mxu0 0.0
        %962 = vmatprep.subr.mxu0 0.0
        %963 = vmatpush2.msra.mxu0 0.0
        %964 = vmatprep.subr.mxu0 0.0
        %965 = vmatpush2.msra.mxu0 0.0
        %966 = vmatprep.subr.mxu0 0.0
        %967 = vmatpush2.msra.mxu0 0.0
        %968 = vmatprep.mubr.f32.mxu0 0.0
        %969 = vmatmul.mubr.f32.gmra.mxu0 %v901
        %v970 = vpop.f32.mrf.mxu0
        %v971 = vadd.f32 0.0, %v970
        %v972 = vpop.f32.mrf.mxu0
        %973 = vdwg.mxu0
        %v974 = vadd.f32 %v903, %v971
        %v975 = vtanh.pop %v974
        %976 = vst [vmem:[%s902] sm:$0xff] %v975
        %s977 = sadd.s32 %s578, 4
        %p978 = scmp.lt.s32.totalorder %s977, 48
        %s979 = scalar_select %p978, 1, 0
        %v980 = vstv %s979
        %vm981 = vcmp.eq.s32.totalorder %v980, 1
        %v982 = vsel %vm981, %v975, %v901
        %s983 = scalar_lea.vmem %s274, 40 [#allocation4]
        %v984 = vld [vmem:[%s983] sm:$0xff]
        %985 = vmatprep.subr.mxu0 0.0
        %986 = vmatpush1.msra.mxu0 %v577
        %987 = vmatprep.subr.mxu0 0.0
        %988 = vmatpush1.msra.mxu0 %v576
        %989 = vmatprep.subr.mxu0 0.0
        %990 = vmatpush1.msra.mxu0 %v575
        %991 = vmatprep.subr.mxu0 0.0
        %992 = vmatpush1.msra.mxu0 %v574
        %993 = vmatprep.subr.mxu0 0.0
        %994 = vmatpush1.msra.mxu0 %v573
        %995 = vmatprep.subr.mxu0 0.0
        %996 = vmatpush1.msra.mxu0 %v572
        %997 = vmatprep.subr.mxu0 0.0
        %998 = vmatpush1.msra.mxu0 %v571
        %999 = vmatprep.subr.mxu0 0.0
        %1000 = vmatpush1.msra.mxu0 %v570
        %1001 = vmatprep.subr.mxu0 0.0
        %1002 = vmatpush1.msra.mxu0 %v569
        %1003 = vmatprep.subr.mxu0 0.0
        %1004 = vmatpush1.msra.mxu0 %v568
        %1005 = vmatprep.subr.mxu0 0.0
        %1006 = vmatpush1.msra.mxu0 %v567
        %1007 = vmatprep.subr.mxu0 0.0
        %1008 = vmatpush1.msra.mxu0 %v566
        %1009 = vmatprep.subr.mxu0 0.0
        %1010 = vmatpush1.msra.mxu0 %v565
        %1011 = vmatprep.subr.mxu0 0.0
        %1012 = vmatpush1.msra.mxu0 %v564
        %1013 = vmatprep.subr.mxu0 0.0
        %1014 = vmatpush1.msra.mxu0 %v563
        %1015 = vmatprep.subr.mxu0 0.0
        %1016 = vmatpush1.msra.mxu0 %v562
        %1017 = vmatprep.subr.mxu0 0.0
        %1018 = vmatpush2.msra.mxu0 0.0
        %1019 = vmatprep.subr.mxu0 0.0
        %1020 = vmatpush2.msra.mxu0 0.0
        %1021 = vmatprep.subr.mxu0 0.0
        %1022 = vmatpush2.msra.mxu0 0.0
        %1023 = vmatprep.subr.mxu0 0.0
        %1024 = vmatpush2.msra.mxu0 0.0
        %1025 = vmatprep.subr.mxu0 0.0
        %1026 = vmatpush2.msra.mxu0 0.0
        %1027 = vmatprep.subr.mxu0 0.0
        %1028 = vmatpush2.msra.mxu0 0.0
        %1029 = vmatprep.subr.mxu0 0.0
        %1030 = vmatpush2.msra.mxu0 0.0
        %1031 = vmatprep.subr.mxu0 0.0
        %1032 = vmatpush2.msra.mxu0 0.0
        %1033 = vmatprep.subr.mxu0 0.0
        %1034 = vmatpush2.msra.mxu0 0.0
        %1035 = vmatprep.subr.mxu0 0.0
        %1036 = vmatpush2.msra.mxu0 0.0
        %1037 = vmatprep.subr.mxu0 0.0
        %1038 = vmatpush2.msra.mxu0 0.0
        %1039 = vmatprep.subr.mxu0 0.0
        %1040 = vmatpush2.msra.mxu0 0.0
        %1041 = vmatprep.subr.mxu0 0.0
        %1042 = vmatpush2.msra.mxu0 0.0
        %1043 = vmatprep.subr.mxu0 0.0
        %1044 = vmatpush2.msra.mxu0 0.0
        %1045 = vmatprep.subr.mxu0 0.0
        %1046 = vmatpush2.msra.mxu0 0.0
        %1047 = vmatprep.subr.mxu0 0.0
        %1048 = vmatpush2.msra.mxu0 0.0
        %1049 = vmatprep.mubr.f32.mxu0 0.0
        %1050 = vmatmul.mubr.f32.gmra.mxu0 %v982
        %v1051 = vpop.f32.mrf.mxu0
        %v1052 = vadd.f32 0.0, %v1051
        %v1053 = vpop.f32.mrf.mxu0
        %1054 = vdwg.mxu0
        %v1055 = vadd.f32 %v984, %v1052
        %v1056 = vtanh.pop %v1055
        %1057 = vst [vmem:[%s983] sm:$0xff] %v1056
        %s1058 = sadd.s32 %s578, 5
        %p1059 = scmp.lt.s32.totalorder %s1058, 48
        %s1060 = scalar_select %p1059, 1, 0
        %v1061 = vstv %s1060
        %vm1062 = vcmp.eq.s32.totalorder %v1061, 1
        %v1063 = vsel %vm1062, %v1056, %v982
        %s1064 = scalar_lea.vmem %s274, 48 [#allocation4]
        %v1065 = vld [vmem:[%s1064] sm:$0xff]
        %1066 = vmatprep.subr.mxu0 0.0
        %1067 = vmatpush1.msra.mxu0 %v577
        %1068 = vmatprep.subr.mxu0 0.0
        %1069 = vmatpush1.msra.mxu0 %v576
        %1070 = vmatprep.subr.mxu0 0.0
        %1071 = vmatpush1.msra.mxu0 %v575
        %1072 = vmatprep.subr.mxu0 0.0
        %1073 = vmatpush1.msra.mxu0 %v574
        %1074 = vmatprep.subr.mxu0 0.0
        %1075 = vmatpush1.msra.mxu0 %v573
        %1076 = vmatprep.subr.mxu0 0.0
        %1077 = vmatpush1.msra.mxu0 %v572
        %1078 = vmatprep.subr.mxu0 0.0
        %1079 = vmatpush1.msra.mxu0 %v571
        %1080 = vmatprep.subr.mxu0 0.0
        %1081 = vmatpush1.msra.mxu0 %v570
        %1082 = vmatprep.subr.mxu0 0.0
        %1083 = vmatpush1.msra.mxu0 %v569
        %1084 = vmatprep.subr.mxu0 0.0
        %1085 = vmatpush1.msra.mxu0 %v568
        %1086 = vmatprep.subr.mxu0 0.0
        %1087 = vmatpush1.msra.mxu0 %v567
        %1088 = vmatprep.subr.mxu0 0.0
        %1089 = vmatpush1.msra.mxu0 %v566
        %1090 = vmatprep.subr.mxu0 0.0
        %1091 = vmatpush1.msra.mxu0 %v565
        %1092 = vmatprep.subr.mxu0 0.0
        %1093 = vmatpush1.msra.mxu0 %v564
        %1094 = vmatprep.subr.mxu0 0.0
        %1095 = vmatpush1.msra.mxu0 %v563
        %1096 = vmatprep.subr.mxu0 0.0
        %1097 = vmatpush1.msra.mxu0 %v562
        %1098 = vmatprep.subr.mxu0 0.0
        %1099 = vmatpush2.msra.mxu0 0.0
        %1100 = vmatprep.subr.mxu0 0.0
        %1101 = vmatpush2.msra.mxu0 0.0
        %1102 = vmatprep.subr.mxu0 0.0
        %1103 = vmatpush2.msra.mxu0 0.0
        %1104 = vmatprep.subr.mxu0 0.0
        %1105 = vmatpush2.msra.mxu0 0.0
        %1106 = vmatprep.subr.mxu0 0.0
        %1107 = vmatpush2.msra.mxu0 0.0
        %1108 = vmatprep.subr.mxu0 0.0
        %1109 = vmatpush2.msra.mxu0 0.0
        %1110 = vmatprep.subr.mxu0 0.0
        %1111 = vmatpush2.msra.mxu0 0.0
        %1112 = vmatprep.subr.mxu0 0.0
        %1113 = vmatpush2.msra.mxu0 0.0
        %1114 = vmatprep.subr.mxu0 0.0
        %1115 = vmatpush2.msra.mxu0 0.0
        %1116 = vmatprep.subr.mxu0 0.0
        %1117 = vmatpush2.msra.mxu0 0.0
        %1118 = vmatprep.subr.mxu0 0.0
        %1119 = vmatpush2.msra.mxu0 0.0
        %1120 = vmatprep.subr.mxu0 0.0
        %1121 = vmatpush2.msra.mxu0 0.0
        %1122 = vmatprep.subr.mxu0 0.0
        %1123 = vmatpush2.msra.mxu0 0.0
        %1124 = vmatprep.subr.mxu0 0.0
        %1125 = vmatpush2.msra.mxu0 0.0
        %1126 = vmatprep.subr.mxu0 0.0
        %1127 = vmatpush2.msra.mxu0 0.0
        %1128 = vmatprep.subr.mxu0 0.0
        %1129 = vmatpush2.msra.mxu0 0.0
        %1130 = vmatprep.mubr.f32.mxu0 0.0
        %1131 = vmatmul.mubr.f32.gmra.mxu0 %v1063
        %v1132 = vpop.f32.mrf.mxu0
        %v1133 = vadd.f32 0.0, %v1132
        %v1134 = vpop.f32.mrf.mxu0
        %1135 = vdwg.mxu0
        %v1136 = vadd.f32 %v1065, %v1133
        %v1137 = vtanh.pop %v1136
        %1138 = vst [vmem:[%s1064] sm:$0xff] %v1137
        %s1139 = sadd.s32 %s578, 6
        %p1140 = scmp.lt.s32.totalorder %s1139, 48
        %s1141 = scalar_select %p1140, 1, 0
        %v1142 = vstv %s1141
        %vm1143 = vcmp.eq.s32.totalorder %v1142, 1
        %v1144 = vsel %vm1143, %v1137, %v1063
        %s1145 = scalar_lea.vmem %s274, 56 [#allocation4]
        %v1146 = vld [vmem:[%s1145] sm:$0xff]
        %1147 = vmatprep.subr.mxu0 0.0
        %1148 = vmatpush1.msra.mxu0 %v577
        %1149 = vmatprep.subr.mxu0 0.0
        %1150 = vmatpush1.msra.mxu0 %v576
        %1151 = vmatprep.subr.mxu0 0.0
        %1152 = vmatpush1.msra.mxu0 %v575
        %1153 = vmatprep.subr.mxu0 0.0
        %1154 = vmatpush1.msra.mxu0 %v574
        %1155 = vmatprep.subr.mxu0 0.0
        %1156 = vmatpush1.msra.mxu0 %v573
        %1157 = vmatprep.subr.mxu0 0.0
        %1158 = vmatpush1.msra.mxu0 %v572
        %1159 = vmatprep.subr.mxu0 0.0
        %1160 = vmatpush1.msra.mxu0 %v571
        %1161 = vmatprep.subr.mxu0 0.0
        %1162 = vmatpush1.msra.mxu0 %v570
        %1163 = vmatprep.subr.mxu0 0.0
        %1164 = vmatpush1.msra.mxu0 %v569
        %1165 = vmatprep.subr.mxu0 0.0
        %1166 = vmatpush1.msra.mxu0 %v568
        %1167 = vmatprep.subr.mxu0 0.0
        %1168 = vmatpush1.msra.mxu0 %v567
        %1169 = vmatprep.subr.mxu0 0.0
        %1170 = vmatpush1.msra.mxu0 %v566
        %1171 = vmatprep.subr.mxu0 0.0
        %1172 = vmatpush1.msra.mxu0 %v565
        %1173 = vmatprep.subr.mxu0 0.0
        %1174 = vmatpush1.msra.mxu0 %v564
        %1175 = vmatprep.subr.mxu0 0.0
        %1176 = vmatpush1.msra.mxu0 %v563
        %1177 = vmatprep.subr.mxu0 0.0
        %1178 = vmatpush1.msra.mxu0 %v562
        %1179 = vmatprep.subr.mxu0 0.0
        %1180 = vmatpush2.msra.mxu0 0.0
        %1181 = vmatprep.subr.mxu0 0.0
        %1182 = vmatpush2.msra.mxu0 0.0
        %1183 = vmatprep.subr.mxu0 0.0
        %1184 = vmatpush2.msra.mxu0 0.0
        %1185 = vmatprep.subr.mxu0 0.0
        %1186 = vmatpush2.msra.mxu0 0.0
        %1187 = vmatprep.subr.mxu0 0.0
        %1188 = vmatpush2.msra.mxu0 0.0
        %1189 = vmatprep.subr.mxu0 0.0
        %1190 = vmatpush2.msra.mxu0 0.0
        %1191 = vmatprep.subr.mxu0 0.0
        %1192 = vmatpush2.msra.mxu0 0.0
        %1193 = vmatprep.subr.mxu0 0.0
        %1194 = vmatpush2.msra.mxu0 0.0
        %1195 = vmatprep.subr.mxu0 0.0
        %1196 = vmatpush2.msra.mxu0 0.0
        %1197 = vmatprep.subr.mxu0 0.0
        %1198 = vmatpush2.msra.mxu0 0.0
        %1199 = vmatprep.subr.mxu0 0.0
        %1200 = vmatpush2.msra.mxu0 0.0
        %1201 = vmatprep.subr.mxu0 0.0
        %1202 = vmatpush2.msra.mxu0 0.0
        %1203 = vmatprep.subr.mxu0 0.0
        %1204 = vmatpush2.msra.mxu0 0.0
        %1205 = vmatprep.subr.mxu0 0.0
        %1206 = vmatpush2.msra.mxu0 0.0
        %1207 = vmatprep.subr.mxu0 0.0
        %1208 = vmatpush2.msra.mxu0 0.0
        %1209 = vmatprep.subr.mxu0 0.0
        %1210 = vmatpush2.msra.mxu0 0.0
        %1211 = vmatprep.mubr.f32.mxu0 0.0
        %1212 = vmatmul.mubr.f32.gmra.mxu0 %v1144
        %v1213 = vpop.f32.mrf.mxu0
        %v1214 = vadd.f32 0.0, %v1213
        %v1215 = vpop.f32.mrf.mxu0
        %1216 = vdwg.mxu0
        %v1217 = vadd.f32 %v1146, %v1214
        %v1218 = vtanh.pop %v1217
        %1219 = vst [vmem:[%s1145] sm:$0xff] %v1218
        %s1220 = sadd.s32 %s578, 7
        %p1221 = scmp.lt.s32.totalorder %s1220, 48
        %s1222 = scalar_select %p1221, 1, 0
        %v1223 = vstv %s1222
        %vm1224 = vcmp.eq.s32.totalorder %v1223, 1
        %v1225 = vsel %vm1224, %v1218, %v1144
        %s1226 = scalar_lea.vmem %s274, 64 [#allocation4]
        %v1227 = vld [vmem:[%s1226] sm:$0xff]
        %1228 = vmatprep.subr.mxu0 0.0
        %1229 = vmatpush1.msra.mxu0 %v577
        %1230 = vmatprep.subr.mxu0 0.0
        %1231 = vmatpush1.msra.mxu0 %v576
        %1232 = vmatprep.subr.mxu0 0.0
        %1233 = vmatpush1.msra.mxu0 %v575
        %1234 = vmatprep.subr.mxu0 0.0
        %1235 = vmatpush1.msra.mxu0 %v574
        %1236 = vmatprep.subr.mxu0 0.0
        %1237 = vmatpush1.msra.mxu0 %v573
        %1238 = vmatprep.subr.mxu0 0.0
        %1239 = vmatpush1.msra.mxu0 %v572
        %1240 = vmatprep.subr.mxu0 0.0
        %1241 = vmatpush1.msra.mxu0 %v571
        %1242 = vmatprep.subr.mxu0 0.0
        %1243 = vmatpush1.msra.mxu0 %v570
        %1244 = vmatprep.subr.mxu0 0.0
        %1245 = vmatpush1.msra.mxu0 %v569
        %1246 = vmatprep.subr.mxu0 0.0
        %1247 = vmatpush1.msra.mxu0 %v568
        %1248 = vmatprep.subr.mxu0 0.0
        %1249 = vmatpush1.msra.mxu0 %v567
        %1250 = vmatprep.subr.mxu0 0.0
        %1251 = vmatpush1.msra.mxu0 %v566
        %1252 = vmatprep.subr.mxu0 0.0
        %1253 = vmatpush1.msra.mxu0 %v565
        %1254 = vmatprep.subr.mxu0 0.0
        %1255 = vmatpush1.msra.mxu0 %v564
        %1256 = vmatprep.subr.mxu0 0.0
        %1257 = vmatpush1.msra.mxu0 %v563
        %1258 = vmatprep.subr.mxu0 0.0
        %1259 = vmatpush1.msra.mxu0 %v562
        %1260 = vmatprep.subr.mxu0 0.0
        %1261 = vmatpush2.msra.mxu0 0.0
        %1262 = vmatprep.subr.mxu0 0.0
        %1263 = vmatpush2.msra.mxu0 0.0
        %1264 = vmatprep.subr.mxu0 0.0
        %1265 = vmatpush2.msra.mxu0 0.0
        %1266 = vmatprep.subr.mxu0 0.0
        %1267 = vmatpush2.msra.mxu0 0.0
        %1268 = vmatprep.subr.mxu0 0.0
        %1269 = vmatpush2.msra.mxu0 0.0
        %1270 = vmatprep.subr.mxu0 0.0
        %1271 = vmatpush2.msra.mxu0 0.0
        %1272 = vmatprep.subr.mxu0 0.0
        %1273 = vmatpush2.msra.mxu0 0.0
        %1274 = vmatprep.subr.mxu0 0.0
        %1275 = vmatpush2.msra.mxu0 0.0
        %1276 = vmatprep.subr.mxu0 0.0
        %1277 = vmatpush2.msra.mxu0 0.0
        %1278 = vmatprep.subr.mxu0 0.0
        %1279 = vmatpush2.msra.mxu0 0.0
        %1280 = vmatprep.subr.mxu0 0.0
        %1281 = vmatpush2.msra.mxu0 0.0
        %1282 = vmatprep.subr.mxu0 0.0
        %1283 = vmatpush2.msra.mxu0 0.0
        %1284 = vmatprep.subr.mxu0 0.0
        %1285 = vmatpush2.msra.mxu0 0.0
        %1286 = vmatprep.subr.mxu0 0.0
        %1287 = vmatpush2.msra.mxu0 0.0
        %1288 = vmatprep.subr.mxu0 0.0
        %1289 = vmatpush2.msra.mxu0 0.0
        %1290 = vmatprep.subr.mxu0 0.0
        %1291 = vmatpush2.msra.mxu0 0.0
        %1292 = vmatprep.mubr.f32.mxu0 0.0
        %1293 = vmatmul.mubr.f32.gmra.mxu0 %v1225
        %v1294 = vpop.f32.mrf.mxu0
        %v1295 = vadd.f32 0.0, %v1294
        %v1296 = vpop.f32.mrf.mxu0
        %1297 = vdwg.mxu0
        %v1298 = vadd.f32 %v1227, %v1295
        %v1299 = vtanh.pop %v1298
        %1300 = vst [vmem:[%s1226] sm:$0xff] %v1299
        %s1301 = sadd.s32 %s578, 8
        %p1302 = scmp.lt.s32.totalorder %s1301, 48
        %s1303 = scalar_select %p1302, 1, 0
        %v1304 = vstv %s1303
        %vm1305 = vcmp.eq.s32.totalorder %v1304, 1
        %v1306 = vsel %vm1305, %v1299, %v1225
        %s1307 = scalar_lea.vmem %s274, 72 [#allocation4]
        %v1308 = vld [vmem:[%s1307] sm:$0xff]
        %1309 = vmatprep.subr.mxu0 0.0
        %1310 = vmatpush1.msra.mxu0 %v577
        %1311 = vmatprep.subr.mxu0 0.0
        %1312 = vmatpush1.msra.mxu0 %v576
        %1313 = vmatprep.subr.mxu0 0.0
        %1314 = vmatpush1.msra.mxu0 %v575
        %1315 = vmatprep.subr.mxu0 0.0
        %1316 = vmatpush1.msra.mxu0 %v574
        %1317 = vmatprep.subr.mxu0 0.0
        %1318 = vmatpush1.msra.mxu0 %v573
        %1319 = vmatprep.subr.mxu0 0.0
        %1320 = vmatpush1.msra.mxu0 %v572
        %1321 = vmatprep.subr.mxu0 0.0
        %1322 = vmatpush1.msra.mxu0 %v571
        %1323 = vmatprep.subr.mxu0 0.0
        %1324 = vmatpush1.msra.mxu0 %v570
        %1325 = vmatprep.subr.mxu0 0.0
        %1326 = vmatpush1.msra.mxu0 %v569
        %1327 = vmatprep.subr.mxu0 0.0
        %1328 = vmatpush1.msra.mxu0 %v568
        %1329 = vmatprep.subr.mxu0 0.0
        %1330 = vmatpush1.msra.mxu0 %v567
        %1331 = vmatprep.subr.mxu0 0.0
        %1332 = vmatpush1.msra.mxu0 %v566
        %1333 = vmatprep.subr.mxu0 0.0
        %1334 = vmatpush1.msra.mxu0 %v565
        %1335 = vmatprep.subr.mxu0 0.0
        %1336 = vmatpush1.msra.mxu0 %v564
        %1337 = vmatprep.subr.mxu0 0.0
        %1338 = vmatpush1.msra.mxu0 %v563
        %1339 = vmatprep.subr.mxu0 0.0
        %1340 = vmatpush1.msra.mxu0 %v562
        %1341 = vmatprep.subr.mxu0 0.0
        %1342 = vmatpush2.msra.mxu0 0.0
        %1343 = vmatprep.subr.mxu0 0.0
        %1344 = vmatpush2.msra.mxu0 0.0
        %1345 = vmatprep.subr.mxu0 0.0
        %1346 = vmatpush2.msra.mxu0 0.0
        %1347 = vmatprep.subr.mxu0 0.0
        %1348 = vmatpush2.msra.mxu0 0.0
        %1349 = vmatprep.subr.mxu0 0.0
        %1350 = vmatpush2.msra.mxu0 0.0
        %1351 = vmatprep.subr.mxu0 0.0
        %1352 = vmatpush2.msra.mxu0 0.0
        %1353 = vmatprep.subr.mxu0 0.0
        %1354 = vmatpush2.msra.mxu0 0.0
        %1355 = vmatprep.subr.mxu0 0.0
        %1356 = vmatpush2.msra.mxu0 0.0
        %1357 = vmatprep.subr.mxu0 0.0
        %1358 = vmatpush2.msra.mxu0 0.0
        %1359 = vmatprep.subr.mxu0 0.0
        %1360 = vmatpush2.msra.mxu0 0.0
        %1361 = vmatprep.subr.mxu0 0.0
        %1362 = vmatpush2.msra.mxu0 0.0
        %1363 = vmatprep.subr.mxu0 0.0
        %1364 = vmatpush2.msra.mxu0 0.0
        %1365 = vmatprep.subr.mxu0 0.0
        %1366 = vmatpush2.msra.mxu0 0.0
        %1367 = vmatprep.subr.mxu0 0.0
        %1368 = vmatpush2.msra.mxu0 0.0
        %1369 = vmatprep.subr.mxu0 0.0
        %1370 = vmatpush2.msra.mxu0 0.0
        %1371 = vmatprep.subr.mxu0 0.0
        %1372 = vmatpush2.msra.mxu0 0.0
        %1373 = vmatprep.mubr.f32.mxu0 0.0
        %1374 = vmatmul.mubr.f32.gmra.mxu0 %v1306
        %v1375 = vpop.f32.mrf.mxu0
        %v1376 = vadd.f32 0.0, %v1375
        %v1377 = vpop.f32.mrf.mxu0
        %1378 = vdwg.mxu0
        %v1379 = vadd.f32 %v1308, %v1376
        %v1380 = vtanh.pop %v1379
        %1381 = vst [vmem:[%s1307] sm:$0xff] %v1380
        %s1382 = sadd.s32 %s578, 9
        %p1383 = scmp.lt.s32.totalorder %s1382, 48
        %s1384 = scalar_select %p1383, 1, 0
        %v1385 = vstv %s1384
        %vm1386 = vcmp.eq.s32.totalorder %v1385, 1
        %v1387 = vsel %vm1386, %v1380, %v1306
        %s1388 = scalar_lea.vmem %s274, 80 [#allocation4]
        %v1389 = vld [vmem:[%s1388] sm:$0xff]
        %1390 = vmatprep.subr.mxu0 0.0
        %1391 = vmatpush1.msra.mxu0 %v577
        %1392 = vmatprep.subr.mxu0 0.0
        %1393 = vmatpush1.msra.mxu0 %v576
        %1394 = vmatprep.subr.mxu0 0.0
        %1395 = vmatpush1.msra.mxu0 %v575
        %1396 = vmatprep.subr.mxu0 0.0
        %1397 = vmatpush1.msra.mxu0 %v574
        %1398 = vmatprep.subr.mxu0 0.0
        %1399 = vmatpush1.msra.mxu0 %v573
        %1400 = vmatprep.subr.mxu0 0.0
        %1401 = vmatpush1.msra.mxu0 %v572
        %1402 = vmatprep.subr.mxu0 0.0
        %1403 = vmatpush1.msra.mxu0 %v571
        %1404 = vmatprep.subr.mxu0 0.0
        %1405 = vmatpush1.msra.mxu0 %v570
        %1406 = vmatprep.subr.mxu0 0.0
        %1407 = vmatpush1.msra.mxu0 %v569
        %1408 = vmatprep.subr.mxu0 0.0
        %1409 = vmatpush1.msra.mxu0 %v568
        %1410 = vmatprep.subr.mxu0 0.0
        %1411 = vmatpush1.msra.mxu0 %v567
        %1412 = vmatprep.subr.mxu0 0.0
        %1413 = vmatpush1.msra.mxu0 %v566
        %1414 = vmatprep.subr.mxu0 0.0
        %1415 = vmatpush1.msra.mxu0 %v565
        %1416 = vmatprep.subr.mxu0 0.0
        %1417 = vmatpush1.msra.mxu0 %v564
        %1418 = vmatprep.subr.mxu0 0.0
        %1419 = vmatpush1.msra.mxu0 %v563
        %1420 = vmatprep.subr.mxu0 0.0
        %1421 = vmatpush1.msra.mxu0 %v562
        %1422 = vmatprep.subr.mxu0 0.0
        %1423 = vmatpush2.msra.mxu0 0.0
        %1424 = vmatprep.subr.mxu0 0.0
        %1425 = vmatpush2.msra.mxu0 0.0
        %1426 = vmatprep.subr.mxu0 0.0
        %1427 = vmatpush2.msra.mxu0 0.0
        %1428 = vmatprep.subr.mxu0 0.0
        %1429 = vmatpush2.msra.mxu0 0.0
        %1430 = vmatprep.subr.mxu0 0.0
        %1431 = vmatpush2.msra.mxu0 0.0
        %1432 = vmatprep.subr.mxu0 0.0
        %1433 = vmatpush2.msra.mxu0 0.0
        %1434 = vmatprep.subr.mxu0 0.0
        %1435 = vmatpush2.msra.mxu0 0.0
        %1436 = vmatprep.subr.mxu0 0.0
        %1437 = vmatpush2.msra.mxu0 0.0
        %1438 = vmatprep.subr.mxu0 0.0
        %1439 = vmatpush2.msra.mxu0 0.0
        %1440 = vmatprep.subr.mxu0 0.0
        %1441 = vmatpush2.msra.mxu0 0.0
        %1442 = vmatprep.subr.mxu0 0.0
        %1443 = vmatpush2.msra.mxu0 0.0
        %1444 = vmatprep.subr.mxu0 0.0
        %1445 = vmatpush2.msra.mxu0 0.0
        %1446 = vmatprep.subr.mxu0 0.0
        %1447 = vmatpush2.msra.mxu0 0.0
        %1448 = vmatprep.subr.mxu0 0.0
        %1449 = vmatpush2.msra.mxu0 0.0
        %1450 = vmatprep.subr.mxu0 0.0
        %1451 = vmatpush2.msra.mxu0 0.0
        %1452 = vmatprep.subr.mxu0 0.0
        %1453 = vmatpush2.msra.mxu0 0.0
        %1454 = vmatprep.mubr.f32.mxu0 0.0
        %1455 = vmatmul.mubr.f32.gmra.mxu0 %v1387
        %v1456 = vpop.f32.mrf.mxu0
        %v1457 = vadd.f32 0.0, %v1456
        %v1458 = vpop.f32.mrf.mxu0
        %1459 = vdwg.mxu0
        %v1460 = vadd.f32 %v1389, %v1457
        %v1461 = vtanh.pop %v1460
        %1462 = vst [vmem:[%s1388] sm:$0xff] %v1461
        %s1463 = sadd.s32 %s578, 10
        %p1464 = scmp.lt.s32.totalorder %s1463, 48
        %s1465 = scalar_select %p1464, 1, 0
        %v1466 = vstv %s1465
        %vm1467 = vcmp.eq.s32.totalorder %v1466, 1
        %v1468 = vsel %vm1467, %v1461, %v1387
        %s1469 = scalar_lea.vmem %s274, 88 [#allocation4]
        %v1470 = vld [vmem:[%s1469] sm:$0xff]
        %1471 = vmatprep.subr.mxu0 0.0
        %1472 = vmatpush1.msra.mxu0 %v577
        %1473 = vmatprep.subr.mxu0 0.0
        %1474 = vmatpush1.msra.mxu0 %v576
        %1475 = vmatprep.subr.mxu0 0.0
        %1476 = vmatpush1.msra.mxu0 %v575
        %1477 = vmatprep.subr.mxu0 0.0
        %1478 = vmatpush1.msra.mxu0 %v574
        %1479 = vmatprep.subr.mxu0 0.0
        %1480 = vmatpush1.msra.mxu0 %v573
        %1481 = vmatprep.subr.mxu0 0.0
        %1482 = vmatpush1.msra.mxu0 %v572
        %1483 = vmatprep.subr.mxu0 0.0
        %1484 = vmatpush1.msra.mxu0 %v571
        %1485 = vmatprep.subr.mxu0 0.0
        %1486 = vmatpush1.msra.mxu0 %v570
        %1487 = vmatprep.subr.mxu0 0.0
        %1488 = vmatpush1.msra.mxu0 %v569
        %1489 = vmatprep.subr.mxu0 0.0
        %1490 = vmatpush1.msra.mxu0 %v568
        %1491 = vmatprep.subr.mxu0 0.0
        %1492 = vmatpush1.msra.mxu0 %v567
        %1493 = vmatprep.subr.mxu0 0.0
        %1494 = vmatpush1.msra.mxu0 %v566
        %1495 = vmatprep.subr.mxu0 0.0
        %1496 = vmatpush1.msra.mxu0 %v565
        %1497 = vmatprep.subr.mxu0 0.0
        %1498 = vmatpush1.msra.mxu0 %v564
        %1499 = vmatprep.subr.mxu0 0.0
        %1500 = vmatpush1.msra.mxu0 %v563
        %1501 = vmatprep.subr.mxu0 0.0
        %1502 = vmatpush1.msra.mxu0 %v562
        %1503 = vmatprep.subr.mxu0 0.0
        %1504 = vmatpush2.msra.mxu0 0.0
        %1505 = vmatprep.subr.mxu0 0.0
        %1506 = vmatpush2.msra.mxu0 0.0
        %1507 = vmatprep.subr.mxu0 0.0
        %1508 = vmatpush2.msra.mxu0 0.0
        %1509 = vmatprep.subr.mxu0 0.0
        %1510 = vmatpush2.msra.mxu0 0.0
        %1511 = vmatprep.subr.mxu0 0.0
        %1512 = vmatpush2.msra.mxu0 0.0
        %1513 = vmatprep.subr.mxu0 0.0
        %1514 = vmatpush2.msra.mxu0 0.0
        %1515 = vmatprep.subr.mxu0 0.0
        %1516 = vmatpush2.msra.mxu0 0.0
        %1517 = vmatprep.subr.mxu0 0.0
        %1518 = vmatpush2.msra.mxu0 0.0
        %1519 = vmatprep.subr.mxu0 0.0
        %1520 = vmatpush2.msra.mxu0 0.0
        %1521 = vmatprep.subr.mxu0 0.0
        %1522 = vmatpush2.msra.mxu0 0.0
        %1523 = vmatprep.subr.mxu0 0.0
        %1524 = vmatpush2.msra.mxu0 0.0
        %1525 = vmatprep.subr.mxu0 0.0
        %1526 = vmatpush2.msra.mxu0 0.0
        %1527 = vmatprep.subr.mxu0 0.0
        %1528 = vmatpush2.msra.mxu0 0.0
        %1529 = vmatprep.subr.mxu0 0.0
        %1530 = vmatpush2.msra.mxu0 0.0
        %1531 = vmatprep.subr.mxu0 0.0
        %1532 = vmatpush2.msra.mxu0 0.0
        %1533 = vmatprep.subr.mxu0 0.0
        %1534 = vmatpush2.msra.mxu0 0.0
        %1535 = vmatprep.mubr.f32.mxu0 0.0
        %1536 = vmatmul.mubr.f32.gmra.mxu0 %v1468
        %v1537 = vpop.f32.mrf.mxu0
        %v1538 = vadd.f32 0.0, %v1537
        %v1539 = vpop.f32.mrf.mxu0
        %1540 = vdwg.mxu0
        %v1541 = vadd.f32 %v1470, %v1538
        %v1542 = vtanh.pop %v1541
        %1543 = vst [vmem:[%s1469] sm:$0xff] %v1542
        %s1544 = sadd.s32 %s578, 11
        %p1545 = scmp.lt.s32.totalorder %s1544, 48
        %s1546 = scalar_select %p1545, 1, 0
        %v1547 = vstv %s1546
        %vm1548 = vcmp.eq.s32.totalorder %v1547, 1
        %v1549 = vsel %vm1548, %v1542, %v1468
        %s1550 = scalar_lea.vmem %s274, 96 [#allocation4]
        %v1551 = vld [vmem:[%s1550] sm:$0xff]
        %1552 = vmatprep.subr.mxu0 0.0
        %1553 = vmatpush1.msra.mxu0 %v577
        %1554 = vmatprep.subr.mxu0 0.0
        %1555 = vmatpush1.msra.mxu0 %v576
        %1556 = vmatprep.subr.mxu0 0.0
        %1557 = vmatpush1.msra.mxu0 %v575
        %1558 = vmatprep.subr.mxu0 0.0
        %1559 = vmatpush1.msra.mxu0 %v574
        %1560 = vmatprep.subr.mxu0 0.0
        %1561 = vmatpush1.msra.mxu0 %v573
        %1562 = vmatprep.subr.mxu0 0.0
        %1563 = vmatpush1.msra.mxu0 %v572
        %1564 = vmatprep.subr.mxu0 0.0
        %1565 = vmatpush1.msra.mxu0 %v571
        %1566 = vmatprep.subr.mxu0 0.0
        %1567 = vmatpush1.msra.mxu0 %v570
        %1568 = vmatprep.subr.mxu0 0.0
        %1569 = vmatpush1.msra.mxu0 %v569
        %1570 = vmatprep.subr.mxu0 0.0
        %1571 = vmatpush1.msra.mxu0 %v568
        %1572 = vmatprep.subr.mxu0 0.0
        %1573 = vmatpush1.msra.mxu0 %v567
        %1574 = vmatprep.subr.mxu0 0.0
        %1575 = vmatpush1.msra.mxu0 %v566
        %1576 = vmatprep.subr.mxu0 0.0
        %1577 = vmatpush1.msra.mxu0 %v565
        %1578 = vmatprep.subr.mxu0 0.0
        %1579 = vmatpush1.msra.mxu0 %v564
        %1580 = vmatprep.subr.mxu0 0.0
        %1581 = vmatpush1.msra.mxu0 %v563
        %1582 = vmatprep.subr.mxu0 0.0
        %1583 = vmatpush1.msra.mxu0 %v562
        %1584 = vmatprep.subr.mxu0 0.0
        %1585 = vmatpush2.msra.mxu0 0.0
        %1586 = vmatprep.subr.mxu0 0.0
        %1587 = vmatpush2.msra.mxu0 0.0
        %1588 = vmatprep.subr.mxu0 0.0
        %1589 = vmatpush2.msra.mxu0 0.0
        %1590 = vmatprep.subr.mxu0 0.0
        %1591 = vmatpush2.msra.mxu0 0.0
        %1592 = vmatprep.subr.mxu0 0.0
        %1593 = vmatpush2.msra.mxu0 0.0
        %1594 = vmatprep.subr.mxu0 0.0
        %1595 = vmatpush2.msra.mxu0 0.0
        %1596 = vmatprep.subr.mxu0 0.0
        %1597 = vmatpush2.msra.mxu0 0.0
        %1598 = vmatprep.subr.mxu0 0.0
        %1599 = vmatpush2.msra.mxu0 0.0
        %1600 = vmatprep.subr.mxu0 0.0
        %1601 = vmatpush2.msra.mxu0 0.0
        %1602 = vmatprep.subr.mxu0 0.0
        %1603 = vmatpush2.msra.mxu0 0.0
        %1604 = vmatprep.subr.mxu0 0.0
        %1605 = vmatpush2.msra.mxu0 0.0
        %1606 = vmatprep.subr.mxu0 0.0
        %1607 = vmatpush2.msra.mxu0 0.0
        %1608 = vmatprep.subr.mxu0 0.0
        %1609 = vmatpush2.msra.mxu0 0.0
        %1610 = vmatprep.subr.mxu0 0.0
        %1611 = vmatpush2.msra.mxu0 0.0
        %1612 = vmatprep.subr.mxu0 0.0
        %1613 = vmatpush2.msra.mxu0 0.0
        %1614 = vmatprep.subr.mxu0 0.0
        %1615 = vmatpush2.msra.mxu0 0.0
        %1616 = vmatprep.mubr.f32.mxu0 0.0
        %1617 = vmatmul.mubr.f32.gmra.mxu0 %v1549
        %v1618 = vpop.f32.mrf.mxu0
        %v1619 = vadd.f32 0.0, %v1618
        %v1620 = vpop.f32.mrf.mxu0
        %1621 = vdwg.mxu0
        %v1622 = vadd.f32 %v1551, %v1619
        %v1623 = vtanh.pop %v1622
        %1624 = vst [vmem:[%s1550] sm:$0xff] %v1623
        %s1625 = sadd.s32 %s578, 12
        %p1626 = scmp.lt.s32.totalorder %s1625, 48
        %s1627 = scalar_select %p1626, 1, 0
        %v1628 = vstv %s1627
        %vm1629 = vcmp.eq.s32.totalorder %v1628, 1
        %v1630 = vsel %vm1629, %v1623, %v1549
        %s1631 = scalar_lea.vmem %s274, 104 [#allocation4]
        %v1632 = vld [vmem:[%s1631] sm:$0xff]
        %1633 = vmatprep.subr.mxu0 0.0
        %1634 = vmatpush1.msra.mxu0 %v577
        %1635 = vmatprep.subr.mxu0 0.0
        %1636 = vmatpush1.msra.mxu0 %v576
        %1637 = vmatprep.subr.mxu0 0.0
        %1638 = vmatpush1.msra.mxu0 %v575
        %1639 = vmatprep.subr.mxu0 0.0
        %1640 = vmatpush1.msra.mxu0 %v574
        %1641 = vmatprep.subr.mxu0 0.0
        %1642 = vmatpush1.msra.mxu0 %v573
        %1643 = vmatprep.subr.mxu0 0.0
        %1644 = vmatpush1.msra.mxu0 %v572
        %1645 = vmatprep.subr.mxu0 0.0
        %1646 = vmatpush1.msra.mxu0 %v571
        %1647 = vmatprep.subr.mxu0 0.0
        %1648 = vmatpush1.msra.mxu0 %v570
        %1649 = vmatprep.subr.mxu0 0.0
        %1650 = vmatpush1.msra.mxu0 %v569
        %1651 = vmatprep.subr.mxu0 0.0
        %1652 = vmatpush1.msra.mxu0 %v568
        %1653 = vmatprep.subr.mxu0 0.0
        %1654 = vmatpush1.msra.mxu0 %v567
        %1655 = vmatprep.subr.mxu0 0.0
        %1656 = vmatpush1.msra.mxu0 %v566
        %1657 = vmatprep.subr.mxu0 0.0
        %1658 = vmatpush1.msra.mxu0 %v565
        %1659 = vmatprep.subr.mxu0 0.0
        %1660 = vmatpush1.msra.mxu0 %v564
        %1661 = vmatprep.subr.mxu0 0.0
        %1662 = vmatpush1.msra.mxu0 %v563
        %1663 = vmatprep.subr.mxu0 0.0
        %1664 = vmatpush1.msra.mxu0 %v562
        %1665 = vmatprep.subr.mxu0 0.0
        %1666 = vmatpush2.msra.mxu0 0.0
        %1667 = vmatprep.subr.mxu0 0.0
        %1668 = vmatpush2.msra.mxu0 0.0
        %1669 = vmatprep.subr.mxu0 0.0
        %1670 = vmatpush2.msra.mxu0 0.0
        %1671 = vmatprep.subr.mxu0 0.0
        %1672 = vmatpush2.msra.mxu0 0.0
        %1673 = vmatprep.subr.mxu0 0.0
        %1674 = vmatpush2.msra.mxu0 0.0
        %1675 = vmatprep.subr.mxu0 0.0
        %1676 = vmatpush2.msra.mxu0 0.0
        %1677 = vmatprep.subr.mxu0 0.0
        %1678 = vmatpush2.msra.mxu0 0.0
        %1679 = vmatprep.subr.mxu0 0.0
        %1680 = vmatpush2.msra.mxu0 0.0
        %1681 = vmatprep.subr.mxu0 0.0
        %1682 = vmatpush2.msra.mxu0 0.0
        %1683 = vmatprep.subr.mxu0 0.0
        %1684 = vmatpush2.msra.mxu0 0.0
        %1685 = vmatprep.subr.mxu0 0.0
        %1686 = vmatpush2.msra.mxu0 0.0
        %1687 = vmatprep.subr.mxu0 0.0
        %1688 = vmatpush2.msra.mxu0 0.0
        %1689 = vmatprep.subr.mxu0 0.0
        %1690 = vmatpush2.msra.mxu0 0.0
        %1691 = vmatprep.subr.mxu0 0.0
        %1692 = vmatpush2.msra.mxu0 0.0
        %1693 = vmatprep.subr.mxu0 0.0
        %1694 = vmatpush2.msra.mxu0 0.0
        %1695 = vmatprep.subr.mxu0 0.0
        %1696 = vmatpush2.msra.mxu0 0.0
        %1697 = vmatprep.mubr.f32.mxu0 0.0
        %1698 = vmatmul.mubr.f32.gmra.mxu0 %v1630
        %v1699 = vpop.f32.mrf.mxu0
        %v1700 = vadd.f32 0.0, %v1699
        %v1701 = vpop.f32.mrf.mxu0
        %1702 = vdwg.mxu0
        %v1703 = vadd.f32 %v1632, %v1700
        %v1704 = vtanh.pop %v1703
        %1705 = vst [vmem:[%s1631] sm:$0xff] %v1704
        %s1706 = sadd.s32 %s578, 13
        %p1707 = scmp.lt.s32.totalorder %s1706, 48
        %s1708 = scalar_select %p1707, 1, 0
        %v1709 = vstv %s1708
        %vm1710 = vcmp.eq.s32.totalorder %v1709, 1
        %v1711 = vsel %vm1710, %v1704, %v1630
        %s1712 = scalar_lea.vmem %s274, 112 [#allocation4]
        %v1713 = vld [vmem:[%s1712] sm:$0xff]
        %1714 = vmatprep.subr.mxu0 0.0
        %1715 = vmatpush1.msra.mxu0 %v577
        %1716 = vmatprep.subr.mxu0 0.0
        %1717 = vmatpush1.msra.mxu0 %v576
        %1718 = vmatprep.subr.mxu0 0.0
        %1719 = vmatpush1.msra.mxu0 %v575
        %1720 = vmatprep.subr.mxu0 0.0
        %1721 = vmatpush1.msra.mxu0 %v574
        %1722 = vmatprep.subr.mxu0 0.0
        %1723 = vmatpush1.msra.mxu0 %v573
        %1724 = vmatprep.subr.mxu0 0.0
        %1725 = vmatpush1.msra.mxu0 %v572
        %1726 = vmatprep.subr.mxu0 0.0
        %1727 = vmatpush1.msra.mxu0 %v571
        %1728 = vmatprep.subr.mxu0 0.0
        %1729 = vmatpush1.msra.mxu0 %v570
        %1730 = vmatprep.subr.mxu0 0.0
        %1731 = vmatpush1.msra.mxu0 %v569
        %1732 = vmatprep.subr.mxu0 0.0
        %1733 = vmatpush1.msra.mxu0 %v568
        %1734 = vmatprep.subr.mxu0 0.0
        %1735 = vmatpush1.msra.mxu0 %v567
        %1736 = vmatprep.subr.mxu0 0.0
        %1737 = vmatpush1.msra.mxu0 %v566
        %1738 = vmatprep.subr.mxu0 0.0
        %1739 = vmatpush1.msra.mxu0 %v565
        %1740 = vmatprep.subr.mxu0 0.0
        %1741 = vmatpush1.msra.mxu0 %v564
        %1742 = vmatprep.subr.mxu0 0.0
        %1743 = vmatpush1.msra.mxu0 %v563
        %1744 = vmatprep.subr.mxu0 0.0
        %1745 = vmatpush1.msra.mxu0 %v562
        %1746 = vmatprep.subr.mxu0 0.0
        %1747 = vmatpush2.msra.mxu0 0.0
        %1748 = vmatprep.subr.mxu0 0.0
        %1749 = vmatpush2.msra.mxu0 0.0
        %1750 = vmatprep.subr.mxu0 0.0
        %1751 = vmatpush2.msra.mxu0 0.0
        %1752 = vmatprep.subr.mxu0 0.0
        %1753 = vmatpush2.msra.mxu0 0.0
        %1754 = vmatprep.subr.mxu0 0.0
        %1755 = vmatpush2.msra.mxu0 0.0
        %1756 = vmatprep.subr.mxu0 0.0
        %1757 = vmatpush2.msra.mxu0 0.0
        %1758 = vmatprep.subr.mxu0 0.0
        %1759 = vmatpush2.msra.mxu0 0.0
        %1760 = vmatprep.subr.mxu0 0.0
        %1761 = vmatpush2.msra.mxu0 0.0
        %1762 = vmatprep.subr.mxu0 0.0
        %1763 = vmatpush2.msra.mxu0 0.0
        %1764 = vmatprep.subr.mxu0 0.0
        %1765 = vmatpush2.msra.mxu0 0.0
        %1766 = vmatprep.subr.mxu0 0.0
        %1767 = vmatpush2.msra.mxu0 0.0
        %1768 = vmatprep.subr.mxu0 0.0
        %1769 = vmatpush2.msra.mxu0 0.0
        %1770 = vmatprep.subr.mxu0 0.0
        %1771 = vmatpush2.msra.mxu0 0.0
        %1772 = vmatprep.subr.mxu0 0.0
        %1773 = vmatpush2.msra.mxu0 0.0
        %1774 = vmatprep.subr.mxu0 0.0
        %1775 = vmatpush2.msra.mxu0 0.0
        %1776 = vmatprep.subr.mxu0 0.0
        %1777 = vmatpush2.msra.mxu0 0.0
        %1778 = vmatprep.mubr.f32.mxu0 0.0
        %1779 = vmatmul.mubr.f32.gmra.mxu0 %v1711
        %v1780 = vpop.f32.mrf.mxu0
        %v1781 = vadd.f32 0.0, %v1780
        %v1782 = vpop.f32.mrf.mxu0
        %1783 = vdwg.mxu0
        %v1784 = vadd.f32 %v1713, %v1781
        %v1785 = vtanh.pop %v1784
        %1786 = vst [vmem:[%s1712] sm:$0xff] %v1785
        %s1787 = sadd.s32 %s578, 14
        %p1788 = scmp.lt.s32.totalorder %s1787, 48
        %s1789 = scalar_select %p1788, 1, 0
        %v1790 = vstv %s1789
        %vm1791 = vcmp.eq.s32.totalorder %v1790, 1
        %v1792 = vsel %vm1791, %v1785, %v1711
        %s1793 = scalar_lea.vmem %s274, 120 [#allocation4]
        %v1794 = vld [vmem:[%s1793] sm:$0xff]
        %1795 = vmatprep.subr.mxu0 0.0
        %1796 = vmatpush1.msra.mxu0 %v577
        %1797 = vmatprep.subr.mxu0 0.0
        %1798 = vmatpush1.msra.mxu0 %v576
        %1799 = vmatprep.subr.mxu0 0.0
        %1800 = vmatpush1.msra.mxu0 %v575
        %1801 = vmatprep.subr.mxu0 0.0
        %1802 = vmatpush1.msra.mxu0 %v574
        %1803 = vmatprep.subr.mxu0 0.0
        %1804 = vmatpush1.msra.mxu0 %v573
        %1805 = vmatprep.subr.mxu0 0.0
        %1806 = vmatpush1.msra.mxu0 %v572
        %1807 = vmatprep.subr.mxu0 0.0
        %1808 = vmatpush1.msra.mxu0 %v571
        %1809 = vmatprep.subr.mxu0 0.0
        %1810 = vmatpush1.msra.mxu0 %v570
        %1811 = vmatprep.subr.mxu0 0.0
        %1812 = vmatpush1.msra.mxu0 %v569
        %1813 = vmatprep.subr.mxu0 0.0
        %1814 = vmatpush1.msra.mxu0 %v568
        %1815 = vmatprep.subr.mxu0 0.0
        %1816 = vmatpush1.msra.mxu0 %v567
        %1817 = vmatprep.subr.mxu0 0.0
        %1818 = vmatpush1.msra.mxu0 %v566
        %1819 = vmatprep.subr.mxu0 0.0
        %1820 = vmatpush1.msra.mxu0 %v565
        %1821 = vmatprep.subr.mxu0 0.0
        %1822 = vmatpush1.msra.mxu0 %v564
        %1823 = vmatprep.subr.mxu0 0.0
        %1824 = vmatpush1.msra.mxu0 %v563
        %1825 = vmatprep.subr.mxu0 0.0
        %1826 = vmatpush1.msra.mxu0 %v562
        %1827 = vmatprep.subr.mxu0 0.0
        %1828 = vmatpush2.msra.mxu0 0.0
        %1829 = vmatprep.subr.mxu0 0.0
        %1830 = vmatpush2.msra.mxu0 0.0
        %1831 = vmatprep.subr.mxu0 0.0
        %1832 = vmatpush2.msra.mxu0 0.0
        %1833 = vmatprep.subr.mxu0 0.0
        %1834 = vmatpush2.msra.mxu0 0.0
        %1835 = vmatprep.subr.mxu0 0.0
        %1836 = vmatpush2.msra.mxu0 0.0
        %1837 = vmatprep.subr.mxu0 0.0
        %1838 = vmatpush2.msra.mxu0 0.0
        %1839 = vmatprep.subr.mxu0 0.0
        %1840 = vmatpush2.msra.mxu0 0.0
        %1841 = vmatprep.subr.mxu0 0.0
        %1842 = vmatpush2.msra.mxu0 0.0
        %1843 = vmatprep.subr.mxu0 0.0
        %1844 = vmatpush2.msra.mxu0 0.0
        %1845 = vmatprep.subr.mxu0 0.0
        %1846 = vmatpush2.msra.mxu0 0.0
        %1847 = vmatprep.subr.mxu0 0.0
        %1848 = vmatpush2.msra.mxu0 0.0
        %1849 = vmatprep.subr.mxu0 0.0
        %1850 = vmatpush2.msra.mxu0 0.0
        %1851 = vmatprep.subr.mxu0 0.0
        %1852 = vmatpush2.msra.mxu0 0.0
        %1853 = vmatprep.subr.mxu0 0.0
        %1854 = vmatpush2.msra.mxu0 0.0
        %1855 = vmatprep.subr.mxu0 0.0
        %1856 = vmatpush2.msra.mxu0 0.0
        %1857 = vmatprep.subr.mxu0 0.0
        %1858 = vmatpush2.msra.mxu0 0.0
        %1859 = vmatprep.mubr.f32.mxu0 0.0
        %1860 = vmatmul.mubr.f32.gmra.mxu0 %v1792
        %v1861 = vpop.f32.mrf.mxu0
        %v1862 = vadd.f32 0.0, %v1861
        %v1863 = vpop.f32.mrf.mxu0
        %1864 = vdwg.mxu0
        %v1865 = vadd.f32 %v1794, %v1862
        %v1866 = vtanh.pop %v1865
        %1867 = vst [vmem:[%s1793] sm:$0xff] %v1866
        %s1868 = sadd.s32 %s578, 15
        %p1869 = scmp.lt.s32.totalorder %s1868, 48
        %s1870 = scalar_select %p1869, 1, 0
        %v1871 = vstv %s1870
        %vm1872 = vcmp.eq.s32.totalorder %v1871, 1
        %v1873 = vsel %vm1872, %v1866, %v1792
        %s1874 = scalar_lea.vmem %s274, 128 [#allocation4]
        %v1875 = vld [vmem:[%s1874] sm:$0xff]
        %1876 = vmatprep.subr.mxu0 0.0
        %1877 = vmatpush1.msra.mxu0 %v577
        %1878 = vmatprep.subr.mxu0 0.0
        %1879 = vmatpush1.msra.mxu0 %v576
        %1880 = vmatprep.subr.mxu0 0.0
        %1881 = vmatpush1.msra.mxu0 %v575
        %1882 = vmatprep.subr.mxu0 0.0
        %1883 = vmatpush1.msra.mxu0 %v574
        %1884 = vmatprep.subr.mxu0 0.0
        %1885 = vmatpush1.msra.mxu0 %v573
        %1886 = vmatprep.subr.mxu0 0.0
        %1887 = vmatpush1.msra.mxu0 %v572
        %1888 = vmatprep.subr.mxu0 0.0
        %1889 = vmatpush1.msra.mxu0 %v571
        %1890 = vmatprep.subr.mxu0 0.0
        %1891 = vmatpush1.msra.mxu0 %v570
        %1892 = vmatprep.subr.mxu0 0.0
        %1893 = vmatpush1.msra.mxu0 %v569
        %1894 = vmatprep.subr.mxu0 0.0
        %1895 = vmatpush1.msra.mxu0 %v568
        %1896 = vmatprep.subr.mxu0 0.0
        %1897 = vmatpush1.msra.mxu0 %v567
        %1898 = vmatprep.subr.mxu0 0.0
        %1899 = vmatpush1.msra.mxu0 %v566
        %1900 = vmatprep.subr.mxu0 0.0
        %1901 = vmatpush1.msra.mxu0 %v565
        %1902 = vmatprep.subr.mxu0 0.0
        %1903 = vmatpush1.msra.mxu0 %v564
        %1904 = vmatprep.subr.mxu0 0.0
        %1905 = vmatpush1.msra.mxu0 %v563
        %1906 = vmatprep.subr.mxu0 0.0
        %1907 = vmatpush1.msra.mxu0 %v562
        %1908 = vmatprep.subr.mxu0 0.0
        %1909 = vmatpush2.msra.mxu0 0.0
        %1910 = vmatprep.subr.mxu0 0.0
        %1911 = vmatpush2.msra.mxu0 0.0
        %1912 = vmatprep.subr.mxu0 0.0
        %1913 = vmatpush2.msra.mxu0 0.0
        %1914 = vmatprep.subr.mxu0 0.0
        %1915 = vmatpush2.msra.mxu0 0.0
        %1916 = vmatprep.subr.mxu0 0.0
        %1917 = vmatpush2.msra.mxu0 0.0
        %1918 = vmatprep.subr.mxu0 0.0
        %1919 = vmatpush2.msra.mxu0 0.0
        %1920 = vmatprep.subr.mxu0 0.0
        %1921 = vmatpush2.msra.mxu0 0.0
        %1922 = vmatprep.subr.mxu0 0.0
        %1923 = vmatpush2.msra.mxu0 0.0
        %1924 = vmatprep.subr.mxu0 0.0
        %1925 = vmatpush2.msra.mxu0 0.0
        %1926 = vmatprep.subr.mxu0 0.0
        %1927 = vmatpush2.msra.mxu0 0.0
        %1928 = vmatprep.subr.mxu0 0.0
        %1929 = vmatpush2.msra.mxu0 0.0
        %1930 = vmatprep.subr.mxu0 0.0
        %1931 = vmatpush2.msra.mxu0 0.0
        %1932 = vmatprep.subr.mxu0 0.0
        %1933 = vmatpush2.msra.mxu0 0.0
        %1934 = vmatprep.subr.mxu0 0.0
        %1935 = vmatpush2.msra.mxu0 0.0
        %1936 = vmatprep.subr.mxu0 0.0
        %1937 = vmatpush2.msra.mxu0 0.0
        %1938 = vmatprep.subr.mxu0 0.0
        %1939 = vmatpush2.msra.mxu0 0.0
        %1940 = vmatprep.mubr.f32.mxu0 0.0
        %1941 = vmatmul.mubr.f32.gmra.mxu0 %v1873
        %v1942 = vpop.f32.mrf.mxu0
        %v1943 = vadd.f32 0.0, %v1942
        %v1944 = vpop.f32.mrf.mxu0
        %1945 = vdwg.mxu0
        %v1946 = vadd.f32 %v1875, %v1943
        %v1947 = vtanh.pop %v1946
        %1948 = vst [vmem:[%s1874] sm:$0xff] %v1947
        %s1949 = sadd.s32 %s578, 16
        %p1950 = scmp.lt.s32.totalorder %s1949, 48
        %s1951 = scalar_select %p1950, 1, 0
        %v1952 = vstv %s1951
        %vm1953 = vcmp.eq.s32.totalorder %v1952, 1
        %v1954 = vsel %vm1953, %v1947, %v1873
        %s1955 = scalar_lea.vmem %s274, 136 [#allocation4]
        %v1956 = vld [vmem:[%s1955] sm:$0xff]
        %1957 = vmatprep.subr.mxu0 0.0
        %1958 = vmatpush1.msra.mxu0 %v577
        %1959 = vmatprep.subr.mxu0 0.0
        %1960 = vmatpush1.msra.mxu0 %v576
        %1961 = vmatprep.subr.mxu0 0.0
        %1962 = vmatpush1.msra.mxu0 %v575
        %1963 = vmatprep.subr.mxu0 0.0
        %1964 = vmatpush1.msra.mxu0 %v574
        %1965 = vmatprep.subr.mxu0 0.0
        %1966 = vmatpush1.msra.mxu0 %v573
        %1967 = vmatprep.subr.mxu0 0.0
        %1968 = vmatpush1.msra.mxu0 %v572
        %1969 = vmatprep.subr.mxu0 0.0
        %1970 = vmatpush1.msra.mxu0 %v571
        %1971 = vmatprep.subr.mxu0 0.0
        %1972 = vmatpush1.msra.mxu0 %v570
        %1973 = vmatprep.subr.mxu0 0.0
        %1974 = vmatpush1.msra.mxu0 %v569
        %1975 = vmatprep.subr.mxu0 0.0
        %1976 = vmatpush1.msra.mxu0 %v568
        %1977 = vmatprep.subr.mxu0 0.0
        %1978 = vmatpush1.msra.mxu0 %v567
        %1979 = vmatprep.subr.mxu0 0.0
        %1980 = vmatpush1.msra.mxu0 %v566
        %1981 = vmatprep.subr.mxu0 0.0
        %1982 = vmatpush1.msra.mxu0 %v565
        %1983 = vmatprep.subr.mxu0 0.0
        %1984 = vmatpush1.msra.mxu0 %v564
        %1985 = vmatprep.subr.mxu0 0.0
        %1986 = vmatpush1.msra.mxu0 %v563
        %1987 = vmatprep.subr.mxu0 0.0
        %1988 = vmatpush1.msra.mxu0 %v562
        %1989 = vmatprep.subr.mxu0 0.0
        %1990 = vmatpush2.msra.mxu0 0.0
        %1991 = vmatprep.subr.mxu0 0.0
        %1992 = vmatpush2.msra.mxu0 0.0
        %1993 = vmatprep.subr.mxu0 0.0
        %1994 = vmatpush2.msra.mxu0 0.0
        %1995 = vmatprep.subr.mxu0 0.0
        %1996 = vmatpush2.msra.mxu0 0.0
        %1997 = vmatprep.subr.mxu0 0.0
        %1998 = vmatpush2.msra.mxu0 0.0
        %1999 = vmatprep.subr.mxu0 0.0
        %2000 = vmatpush2.msra.mxu0 0.0
        %2001 = vmatprep.subr.mxu0 0.0
        %2002 = vmatpush2.msra.mxu0 0.0
        %2003 = vmatprep.subr.mxu0 0.0
        %2004 = vmatpush2.msra.mxu0 0.0
        %2005 = vmatprep.subr.mxu0 0.0
        %2006 = vmatpush2.msra.mxu0 0.0
        %2007 = vmatprep.subr.mxu0 0.0
        %2008 = vmatpush2.msra.mxu0 0.0
        %2009 = vmatprep.subr.mxu0 0.0
        %2010 = vmatpush2.msra.mxu0 0.0
        %2011 = vmatprep.subr.mxu0 0.0
        %2012 = vmatpush2.msra.mxu0 0.0
        %2013 = vmatprep.subr.mxu0 0.0
        %2014 = vmatpush2.msra.mxu0 0.0
        %2015 = vmatprep.subr.mxu0 0.0
        %2016 = vmatpush2.msra.mxu0 0.0
        %2017 = vmatprep.subr.mxu0 0.0
        %2018 = vmatpush2.msra.mxu0 0.0
        %2019 = vmatprep.subr.mxu0 0.0
        %2020 = vmatpush2.msra.mxu0 0.0
        %2021 = vmatprep.mubr.f32.mxu0 0.0
        %2022 = vmatmul.mubr.f32.gmra.mxu0 %v1954
        %v2023 = vpop.f32.mrf.mxu0
        %v2024 = vadd.f32 0.0, %v2023
        %v2025 = vpop.f32.mrf.mxu0
        %2026 = vdwg.mxu0
        %v2027 = vadd.f32 %v1956, %v2024
        %v2028 = vtanh.pop %v2027
        %2029 = vst [vmem:[%s1955] sm:$0xff] %v2028
        %s2030 = sadd.s32 %s578, 17
        %p2031 = scmp.lt.s32.totalorder %s2030, 48
        %s2032 = scalar_select %p2031, 1, 0
        %v2033 = vstv %s2032
        %vm2034 = vcmp.eq.s32.totalorder %v2033, 1
        %v2035 = vsel %vm2034, %v2028, %v1954
        %s2036 = scalar_lea.vmem %s274, 144 [#allocation4]
        %v2037 = vld [vmem:[%s2036] sm:$0xff]
        %2038 = vmatprep.subr.mxu0 0.0
        %2039 = vmatpush1.msra.mxu0 %v577
        %2040 = vmatprep.subr.mxu0 0.0
        %2041 = vmatpush1.msra.mxu0 %v576
        %2042 = vmatprep.subr.mxu0 0.0
        %2043 = vmatpush1.msra.mxu0 %v575
        %2044 = vmatprep.subr.mxu0 0.0
        %2045 = vmatpush1.msra.mxu0 %v574
        %2046 = vmatprep.subr.mxu0 0.0
        %2047 = vmatpush1.msra.mxu0 %v573
        %2048 = vmatprep.subr.mxu0 0.0
        %2049 = vmatpush1.msra.mxu0 %v572
        %2050 = vmatprep.subr.mxu0 0.0
        %2051 = vmatpush1.msra.mxu0 %v571
        %2052 = vmatprep.subr.mxu0 0.0
        %2053 = vmatpush1.msra.mxu0 %v570
        %2054 = vmatprep.subr.mxu0 0.0
        %2055 = vmatpush1.msra.mxu0 %v569
        %2056 = vmatprep.subr.mxu0 0.0
        %2057 = vmatpush1.msra.mxu0 %v568
        %2058 = vmatprep.subr.mxu0 0.0
        %2059 = vmatpush1.msra.mxu0 %v567
        %2060 = vmatprep.subr.mxu0 0.0
        %2061 = vmatpush1.msra.mxu0 %v566
        %2062 = vmatprep.subr.mxu0 0.0
        %2063 = vmatpush1.msra.mxu0 %v565
        %2064 = vmatprep.subr.mxu0 0.0
        %2065 = vmatpush1.msra.mxu0 %v564
        %2066 = vmatprep.subr.mxu0 0.0
        %2067 = vmatpush1.msra.mxu0 %v563
        %2068 = vmatprep.subr.mxu0 0.0
        %2069 = vmatpush1.msra.mxu0 %v562
        %2070 = vmatprep.subr.mxu0 0.0
        %2071 = vmatpush2.msra.mxu0 0.0
        %2072 = vmatprep.subr.mxu0 0.0
        %2073 = vmatpush2.msra.mxu0 0.0
        %2074 = vmatprep.subr.mxu0 0.0
        %2075 = vmatpush2.msra.mxu0 0.0
        %2076 = vmatprep.subr.mxu0 0.0
        %2077 = vmatpush2.msra.mxu0 0.0
        %2078 = vmatprep.subr.mxu0 0.0
        %2079 = vmatpush2.msra.mxu0 0.0
        %2080 = vmatprep.subr.mxu0 0.0
        %2081 = vmatpush2.msra.mxu0 0.0
        %2082 = vmatprep.subr.mxu0 0.0
        %2083 = vmatpush2.msra.mxu0 0.0
        %2084 = vmatprep.subr.mxu0 0.0
        %2085 = vmatpush2.msra.mxu0 0.0
        %2086 = vmatprep.subr.mxu0 0.0
        %2087 = vmatpush2.msra.mxu0 0.0
        %2088 = vmatprep.subr.mxu0 0.0
        %2089 = vmatpush2.msra.mxu0 0.0
        %2090 = vmatprep.subr.mxu0 0.0
        %2091 = vmatpush2.msra.mxu0 0.0
        %2092 = vmatprep.subr.mxu0 0.0
        %2093 = vmatpush2.msra.mxu0 0.0
        %2094 = vmatprep.subr.mxu0 0.0
        %2095 = vmatpush2.msra.mxu0 0.0
        %2096 = vmatprep.subr.mxu0 0.0
        %2097 = vmatpush2.msra.mxu0 0.0
        %2098 = vmatprep.subr.mxu0 0.0
        %2099 = vmatpush2.msra.mxu0 0.0
        %2100 = vmatprep.subr.mxu0 0.0
        %2101 = vmatpush2.msra.mxu0 0.0
        %2102 = vmatprep.mubr.f32.mxu0 0.0
        %2103 = vmatmul.mubr.f32.gmra.mxu0 %v2035
        %v2104 = vpop.f32.mrf.mxu0
        %v2105 = vadd.f32 0.0, %v2104
        %v2106 = vpop.f32.mrf.mxu0
        %2107 = vdwg.mxu0
        %v2108 = vadd.f32 %v2037, %v2105
        %v2109 = vtanh.pop %v2108
        %2110 = vst [vmem:[%s2036] sm:$0xff] %v2109
        %s2111 = sadd.s32 %s578, 18
        %p2112 = scmp.lt.s32.totalorder %s2111, 48
        %s2113 = scalar_select %p2112, 1, 0
        %v2114 = vstv %s2113
        %vm2115 = vcmp.eq.s32.totalorder %v2114, 1
        %v2116 = vsel %vm2115, %v2109, %v2035
        %s2117 = scalar_lea.vmem %s274, 152 [#allocation4]
        %v2118 = vld [vmem:[%s2117] sm:$0xff]
        %2119 = vmatprep.subr.mxu0 0.0
        %2120 = vmatpush1.msra.mxu0 %v577
        %2121 = vmatprep.subr.mxu0 0.0
        %2122 = vmatpush1.msra.mxu0 %v576
        %2123 = vmatprep.subr.mxu0 0.0
        %2124 = vmatpush1.msra.mxu0 %v575
        %2125 = vmatprep.subr.mxu0 0.0
        %2126 = vmatpush1.msra.mxu0 %v574
        %2127 = vmatprep.subr.mxu0 0.0
        %2128 = vmatpush1.msra.mxu0 %v573
        %2129 = vmatprep.subr.mxu0 0.0
        %2130 = vmatpush1.msra.mxu0 %v572
        %2131 = vmatprep.subr.mxu0 0.0
        %2132 = vmatpush1.msra.mxu0 %v571
        %2133 = vmatprep.subr.mxu0 0.0
        %2134 = vmatpush1.msra.mxu0 %v570
        %2135 = vmatprep.subr.mxu0 0.0
        %2136 = vmatpush1.msra.mxu0 %v569
        %2137 = vmatprep.subr.mxu0 0.0
        %2138 = vmatpush1.msra.mxu0 %v568
        %2139 = vmatprep.subr.mxu0 0.0
        %2140 = vmatpush1.msra.mxu0 %v567
        %2141 = vmatprep.subr.mxu0 0.0
        %2142 = vmatpush1.msra.mxu0 %v566
        %2143 = vmatprep.subr.mxu0 0.0
        %2144 = vmatpush1.msra.mxu0 %v565
        %2145 = vmatprep.subr.mxu0 0.0
        %2146 = vmatpush1.msra.mxu0 %v564
        %2147 = vmatprep.subr.mxu0 0.0
        %2148 = vmatpush1.msra.mxu0 %v563
        %2149 = vmatprep.subr.mxu0 0.0
        %2150 = vmatpush1.msra.mxu0 %v562
        %2151 = vmatprep.subr.mxu0 0.0
        %2152 = vmatpush2.msra.mxu0 0.0
        %2153 = vmatprep.subr.mxu0 0.0
        %2154 = vmatpush2.msra.mxu0 0.0
        %2155 = vmatprep.subr.mxu0 0.0
        %2156 = vmatpush2.msra.mxu0 0.0
        %2157 = vmatprep.subr.mxu0 0.0
        %2158 = vmatpush2.msra.mxu0 0.0
        %2159 = vmatprep.subr.mxu0 0.0
        %2160 = vmatpush2.msra.mxu0 0.0
        %2161 = vmatprep.subr.mxu0 0.0
        %2162 = vmatpush2.msra.mxu0 0.0
        %2163 = vmatprep.subr.mxu0 0.0
        %2164 = vmatpush2.msra.mxu0 0.0
        %2165 = vmatprep.subr.mxu0 0.0
        %2166 = vmatpush2.msra.mxu0 0.0
        %2167 = vmatprep.subr.mxu0 0.0
        %2168 = vmatpush2.msra.mxu0 0.0
        %2169 = vmatprep.subr.mxu0 0.0
        %2170 = vmatpush2.msra.mxu0 0.0
        %2171 = vmatprep.subr.mxu0 0.0
        %2172 = vmatpush2.msra.mxu0 0.0
        %2173 = vmatprep.subr.mxu0 0.0
        %2174 = vmatpush2.msra.mxu0 0.0
        %2175 = vmatprep.subr.mxu0 0.0
        %2176 = vmatpush2.msra.mxu0 0.0
        %2177 = vmatprep.subr.mxu0 0.0
        %2178 = vmatpush2.msra.mxu0 0.0
        %2179 = vmatprep.subr.mxu0 0.0
        %2180 = vmatpush2.msra.mxu0 0.0
        %2181 = vmatprep.subr.mxu0 0.0
        %2182 = vmatpush2.msra.mxu0 0.0
        %2183 = vmatprep.mubr.f32.mxu0 0.0
        %2184 = vmatmul.mubr.f32.gmra.mxu0 %v2116
        %v2185 = vpop.f32.mrf.mxu0
        %v2186 = vadd.f32 0.0, %v2185
        %v2187 = vpop.f32.mrf.mxu0
        %2188 = vdwg.mxu0
        %v2189 = vadd.f32 %v2118, %v2186
        %v2190 = vtanh.pop %v2189
        %2191 = vst [vmem:[%s2117] sm:$0xff] %v2190
        %s2192 = sadd.s32 %s578, 19
        %p2193 = scmp.lt.s32.totalorder %s2192, 48
        %s2194 = scalar_select %p2193, 1, 0
        %v2195 = vstv %s2194
        %vm2196 = vcmp.eq.s32.totalorder %v2195, 1
        %v2197 = vsel %vm2196, %v2190, %v2116
        %2198 = vst [vmem:[#allocation2] sm:$0xff] %v2197
        %v2199 = vld [vmem:[%s274] sm:$0xff]
        %v2200 = vld [vmem:[%s274 + $0x8] sm:$0xff]
        %v2201 = vld [vmem:[%s274 + $0x10] sm:$0xff]
        %v2202 = vld [vmem:[%s274 + $0x18] sm:$0xff]
        %v2203 = vld [vmem:[%s274 + $0x20] sm:$0xff]
        %v2204 = vld [vmem:[%s274 + $0x28] sm:$0xff]
        %v2205 = vld [vmem:[%s274 + $0x30] sm:$0xff]
        %v2206 = vld [vmem:[%s274 + $0x38] sm:$0xff]
        %v2207 = vld [vmem:[%s274 + $0x40] sm:$0xff]
        %v2208 = vld [vmem:[%s274 + $0x48] sm:$0xff]
        %v2209 = vld [vmem:[%s274 + $0x50] sm:$0xff]
        %v2210 = vld [vmem:[%s274 + $0x58] sm:$0xff]
        %v2211 = vld [vmem:[%s274 + $0x60] sm:$0xff]
        %v2212 = vld [vmem:[%s274 + $0x68] sm:$0xff]
        %v2213 = vld [vmem:[%s274 + $0x70] sm:$0xff]
        %v2214 = vld [vmem:[%s274 + $0x78] sm:$0xff]
        %v2215 = vld [vmem:[%s274 + $0x80] sm:$0xff]
        %v2216 = vld [vmem:[%s274 + $0x88] sm:$0xff]
        %v2217 = vld [vmem:[%s274 + $0x90] sm:$0xff]
        %v2218 = vld [vmem:[%s274 + $0x98] sm:$0xff]
        %v2219 = vld [vmem:[%s5] sm:$0x1]
        %v2221 = vlaneseq
        %v2222 = vshrl.u32 %v2221, 7
        %v2223 = vsub.s32 0, %v2222
        %v2224 = vrot.slane %v2219, %v2223
        %v2226 = vmul.f32 %v2199, %v2224
        %v2227 = vmul.f32 %v2200, %v2224
        %v2228 = vmul.f32 %v2201, %v2224
        %v2229 = vmul.f32 %v2202, %v2224
        %v2230 = vmul.f32 %v2203, %v2224
        %v2231 = vmul.f32 %v2204, %v2224
        %v2232 = vmul.f32 %v2205, %v2224
        %v2233 = vmul.f32 %v2206, %v2224
        %v2234 = vmul.f32 %v2207, %v2224
        %v2235 = vmul.f32 %v2208, %v2224
        %v2236 = vmul.f32 %v2209, %v2224
        %v2237 = vmul.f32 %v2210, %v2224
        %v2238 = vmul.f32 %v2211, %v2224
        %v2239 = vmul.f32 %v2212, %v2224
        %v2240 = vmul.f32 %v2213, %v2224
        %v2241 = vmul.f32 %v2214, %v2224
        %v2242 = vmul.f32 %v2215, %v2224
        %v2243 = vmul.f32 %v2216, %v2224
        %v2244 = vmul.f32 %v2217, %v2224
        %v2245 = vmul.f32 %v2218, %v2224
        %2246 = vadd.xlane.f32.xlu0 %v2226
        %v2247 = vpop.xlane.xlu0 %2246
        %2248 = vadd.xlane.f32.xlu0 %v2227
        %v2249 = vpop.xlane.xlu0 %2248
        %2250 = vadd.xlane.f32.xlu0 %v2228
        %v2251 = vpop.xlane.xlu0 %2250
        %2252 = vadd.xlane.f32.xlu0 %v2229
        %v2253 = vpop.xlane.xlu0 %2252
        %2254 = vadd.xlane.f32.xlu0 %v2230
        %v2255 = vpop.xlane.xlu0 %2254
        %2256 = vadd.xlane.f32.xlu0 %v2231
        %v2257 = vpop.xlane.xlu0 %2256
        %2258 = vadd.xlane.f32.xlu0 %v2232
        %v2259 = vpop.xlane.xlu0 %2258
        %2260 = vadd.xlane.f32.xlu0 %v2233
        %v2261 = vpop.xlane.xlu0 %2260
        %2262 = vadd.xlane.f32.xlu0 %v2234
        %v2263 = vpop.xlane.xlu0 %2262
        %2264 = vadd.xlane.f32.xlu0 %v2235
        %v2265 = vpop.xlane.xlu0 %2264
        %2266 = vadd.xlane.f32.xlu0 %v2236
        %v2267 = vpop.xlane.xlu0 %2266
        %2268 = vadd.xlane.f32.xlu0 %v2237
        %v2269 = vpop.xlane.xlu0 %2268
        %2270 = vadd.xlane.f32.xlu0 %v2238
        %v2271 = vpop.xlane.xlu0 %2270
        %2272 = vadd.xlane.f32.xlu0 %v2239
        %v2273 = vpop.xlane.xlu0 %2272
        %2274 = vadd.xlane.f32.xlu0 %v2240
        %v2275 = vpop.xlane.xlu0 %2274
        %2276 = vadd.xlane.f32.xlu0 %v2241
        %v2277 = vpop.xlane.xlu0 %2276
        %2278 = vadd.xlane.f32.xlu0 %v2242
        %v2279 = vpop.xlane.xlu0 %2278
        %2280 = vadd.xlane.f32.xlu0 %v2243
        %v2281 = vpop.xlane.xlu0 %2280
        %2282 = vadd.xlane.f32.xlu0 %v2244
        %v2283 = vpop.xlane.xlu0 %2282
        %2284 = vadd.xlane.f32.xlu0 %v2245
        %v2285 = vpop.xlane.xlu0 %2284
        %v2286 = vld [vmem:[#allocation3] sm:$0x1]
        %v2288 = vlaneseq
        %v2289 = vshrl.u32 %v2288, 7
        %v2290 = vsub.s32 0, %v2289
        %v2291 = vrot.slane %v2286, %v2290
        %v2293 = vadd.f32 %v2247, %v2291
        %v2294 = vadd.f32 %v2249, %v2291
        %v2295 = vadd.f32 %v2251, %v2291
        %v2296 = vadd.f32 %v2253, %v2291
        %v2297 = vadd.f32 %v2255, %v2291
        %v2298 = vadd.f32 %v2257, %v2291
        %v2299 = vadd.f32 %v2259, %v2291
        %v2300 = vadd.f32 %v2261, %v2291
        %v2301 = vadd.f32 %v2263, %v2291
        %v2302 = vadd.f32 %v2265, %v2291
        %v2303 = vadd.f32 %v2267, %v2291
        %v2304 = vadd.f32 %v2269, %v2291
        %v2305 = vadd.f32 %v2271, %v2291
        %v2306 = vadd.f32 %v2273, %v2291
        %v2307 = vadd.f32 %v2275, %v2291
        %v2308 = vadd.f32 %v2277, %v2291
        %v2309 = vadd.f32 %v2279, %v2291
        %v2310 = vadd.f32 %v2281, %v2291
        %v2311 = vadd.f32 %v2283, %v2291
        %v2312 = vadd.f32 %v2285, %v2291
        %v2313 = vxor.u32 %v2293, 2147483648
        %v2314 = vxor.u32 %v2294, 2147483648
        %v2315 = vxor.u32 %v2295, 2147483648
        %v2316 = vxor.u32 %v2296, 2147483648
        %v2317 = vxor.u32 %v2297, 2147483648
        %v2318 = vxor.u32 %v2298, 2147483648
        %v2319 = vxor.u32 %v2299, 2147483648
        %v2320 = vxor.u32 %v2300, 2147483648
        %v2321 = vxor.u32 %v2301, 2147483648
        %v2322 = vxor.u32 %v2302, 2147483648
        %v2323 = vxor.u32 %v2303, 2147483648
        %v2324 = vxor.u32 %v2304, 2147483648
        %v2325 = vxor.u32 %v2305, 2147483648
        %v2326 = vxor.u32 %v2306, 2147483648
        %v2327 = vxor.u32 %v2307, 2147483648
        %v2328 = vxor.u32 %v2308, 2147483648
        %v2329 = vxor.u32 %v2309, 2147483648
        %v2330 = vxor.u32 %v2310, 2147483648
        %v2331 = vxor.u32 %v2311, 2147483648
        %v2332 = vxor.u32 %v2312, 2147483648
        %v2333 = vmul.f32 %v2313, 1.442695
        %v2334 = vpow.pop %v2333
        %v2335 = vmul.f32 %v2314, 1.442695
        %v2336 = vpow.pop %v2335
        %v2337 = vmul.f32 %v2315, 1.442695
        %v2338 = vpow.pop %v2337
        %v2339 = vmul.f32 %v2316, 1.442695
        %v2340 = vpow.pop %v2339
        %v2341 = vmul.f32 %v2317, 1.442695
        %v2342 = vpow.pop %v2341
        %v2343 = vmul.f32 %v2318, 1.442695
        %v2344 = vpow.pop %v2343
        %v2345 = vmul.f32 %v2319, 1.442695
        %v2346 = vpow.pop %v2345
        %v2347 = vmul.f32 %v2320, 1.442695
        %v2348 = vpow.pop %v2347
        %v2349 = vmul.f32 %v2321, 1.442695
        %v2350 = vpow.pop %v2349
        %v2351 = vmul.f32 %v2322, 1.442695
        %v2352 = vpow.pop %v2351
        %v2353 = vmul.f32 %v2323, 1.442695
        %v2354 = vpow.pop %v2353
        %v2355 = vmul.f32 %v2324, 1.442695
        %v2356 = vpow.pop %v2355
        %v2357 = vmul.f32 %v2325, 1.442695
        %v2358 = vpow.pop %v2357
        %v2359 = vmul.f32 %v2326, 1.442695
        %v2360 = vpow.pop %v2359
        %v2361 = vmul.f32 %v2327, 1.442695
        %v2362 = vpow.pop %v2361
        %v2363 = vmul.f32 %v2328, 1.442695
        %v2364 = vpow.pop %v2363
        %v2365 = vmul.f32 %v2329, 1.442695
        %v2366 = vpow.pop %v2365
        %v2367 = vmul.f32 %v2330, 1.442695
        %v2368 = vpow.pop %v2367
        %v2369 = vmul.f32 %v2331, 1.442695
        %v2370 = vpow.pop %v2369
        %v2371 = vmul.f32 %v2332, 1.442695
        %v2372 = vpow.pop %v2371
        %v2373 = vadd.f32 %v2334, 1.0
        %v2374 = vadd.f32 %v2336, 1.0
        %v2375 = vadd.f32 %v2338, 1.0
        %v2376 = vadd.f32 %v2340, 1.0
        %v2377 = vadd.f32 %v2342, 1.0
        %v2378 = vadd.f32 %v2344, 1.0
        %v2379 = vadd.f32 %v2346, 1.0
        %v2380 = vadd.f32 %v2348, 1.0
        %v2381 = vadd.f32 %v2350, 1.0
        %v2382 = vadd.f32 %v2352, 1.0
        %v2383 = vadd.f32 %v2354, 1.0
        %v2384 = vadd.f32 %v2356, 1.0
        %v2385 = vadd.f32 %v2358, 1.0
        %v2386 = vadd.f32 %v2360, 1.0
        %v2387 = vadd.f32 %v2362, 1.0
        %v2388 = vadd.f32 %v2364, 1.0
        %v2389 = vadd.f32 %v2366, 1.0
        %v2390 = vadd.f32 %v2368, 1.0
        %v2391 = vadd.f32 %v2370, 1.0
        %v2392 = vadd.f32 %v2372, 1.0
        %v2393 = vrcp.pop %v2373
        %v2394 = vmul.f32 1.0, %v2393
        %v2395 = vrcp.pop %v2374
        %v2396 = vmul.f32 1.0, %v2395
        %v2397 = vrcp.pop %v2375
        %v2398 = vmul.f32 1.0, %v2397
        %v2399 = vrcp.pop %v2376
        %v2400 = vmul.f32 1.0, %v2399
        %v2401 = vrcp.pop %v2377
        %v2402 = vmul.f32 1.0, %v2401
        %v2403 = vrcp.pop %v2378
        %v2404 = vmul.f32 1.0, %v2403
        %v2405 = vrcp.pop %v2379
        %v2406 = vmul.f32 1.0, %v2405
        %v2407 = vrcp.pop %v2380
        %v2408 = vmul.f32 1.0, %v2407
        %v2409 = vrcp.pop %v2381
        %v2410 = vmul.f32 1.0, %v2409
        %v2411 = vrcp.pop %v2382
        %v2412 = vmul.f32 1.0, %v2411
        %v2413 = vrcp.pop %v2383
        %v2414 = vmul.f32 1.0, %v2413
        %v2415 = vrcp.pop %v2384
        %v2416 = vmul.f32 1.0, %v2415
        %v2417 = vrcp.pop %v2385
        %v2418 = vmul.f32 1.0, %v2417
        %v2419 = vrcp.pop %v2386
        %v2420 = vmul.f32 1.0, %v2419
        %v2421 = vrcp.pop %v2387
        %v2422 = vmul.f32 1.0, %v2421
        %v2423 = vrcp.pop %v2388
        %v2424 = vmul.f32 1.0, %v2423
        %v2425 = vrcp.pop %v2389
        %v2426 = vmul.f32 1.0, %v2425
        %v2427 = vrcp.pop %v2390
        %v2428 = vmul.f32 1.0, %v2427
        %v2429 = vrcp.pop %v2391
        %v2430 = vmul.f32 1.0, %v2429
        %v2431 = vrcp.pop %v2392
        %v2432 = vmul.f32 1.0, %v2431
        %v2433 = vlaneseq
        %v2434 = vand.u32 %v2433, 127
        %vm2435 = vcmp.eq.s32.totalorder %v2434, 64
        %2437 = vset.pattern.permute.xlu0 0
        %2438 = vperm.xlu0 %2437, %v2394
        %v2439 = vpop.permute.xlu0 %2438
        %2442 = vset.pattern.permute.xlu0 0
        %2443 = vperm.xlu0 %2442, %v2396
        %v2444 = vpop.permute.xlu0 %2443
        %2447 = vset.pattern.permute.xlu0 0
        %2448 = vperm.xlu0 %2447, %v2398
        %v2449 = vpop.permute.xlu0 %2448
        %2452 = vset.pattern.permute.xlu0 0
        %2453 = vperm.xlu0 %2452, %v2400
        %v2454 = vpop.permute.xlu0 %2453
        %2457 = vset.pattern.permute.xlu0 0
        %2458 = vperm.xlu0 %2457, %v2402
        %v2459 = vpop.permute.xlu0 %2458
        %2462 = vset.pattern.permute.xlu0 0
        %2463 = vperm.xlu0 %2462, %v2404
        %v2464 = vpop.permute.xlu0 %2463
        %2467 = vset.pattern.permute.xlu0 0
        %2468 = vperm.xlu0 %2467, %v2406
        %v2469 = vpop.permute.xlu0 %2468
        %2472 = vset.pattern.permute.xlu0 0
        %2473 = vperm.xlu0 %2472, %v2408
        %v2474 = vpop.permute.xlu0 %2473
        %2477 = vset.pattern.permute.xlu0 0
        %2478 = vperm.xlu0 %2477, %v2410
        %v2479 = vpop.permute.xlu0 %2478
        %2482 = vset.pattern.permute.xlu0 0
        %2483 = vperm.xlu0 %2482, %v2412
        %v2484 = vpop.permute.xlu0 %2483
        %2487 = vset.pattern.permute.xlu0 0
        %2488 = vperm.xlu0 %2487, %v2414
        %v2489 = vpop.permute.xlu0 %2488
        %2492 = vset.pattern.permute.xlu0 0
        %2493 = vperm.xlu0 %2492, %v2416
        %v2494 = vpop.permute.xlu0 %2493
        %2497 = vset.pattern.permute.xlu0 0
        %2498 = vperm.xlu0 %2497, %v2418
        %v2499 = vpop.permute.xlu0 %2498
        %2502 = vset.pattern.permute.xlu0 0
        %2503 = vperm.xlu0 %2502, %v2420
        %v2504 = vpop.permute.xlu0 %2503
        %2507 = vset.pattern.permute.xlu0 0
        %2508 = vperm.xlu0 %2507, %v2422
        %v2509 = vpop.permute.xlu0 %2508
        %2512 = vset.pattern.permute.xlu0 0
        %2513 = vperm.xlu0 %2512, %v2424
        %v2514 = vpop.permute.xlu0 %2513
        %2517 = vset.pattern.permute.xlu0 0
        %2518 = vperm.xlu0 %2517, %v2426
        %v2519 = vpop.permute.xlu0 %2518
        %2522 = vset.pattern.permute.xlu0 0
        %2523 = vperm.xlu0 %2522, %v2428
        %v2524 = vpop.permute.xlu0 %2523
        %2527 = vset.pattern.permute.xlu0 0
        %2528 = vperm.xlu0 %2527, %v2430
        %v2529 = vpop.permute.xlu0 %2528
        %2532 = vset.pattern.permute.xlu0 0
        %2533 = vperm.xlu0 %2532, %v2432
        %v2534 = vpop.permute.xlu0 %2533
        %v2536 = vsel %vm2435, %v2439, %v2199
        %v2537 = vsel %vm2435, %v2444, %v2200
        %v2538 = vsel %vm2435, %v2449, %v2201
        %v2539 = vsel %vm2435, %v2454, %v2202
        %v2540 = vsel %vm2435, %v2459, %v2203
        %v2541 = vsel %vm2435, %v2464, %v2204
        %v2542 = vsel %vm2435, %v2469, %v2205
        %v2543 = vsel %vm2435, %v2474, %v2206
        %v2544 = vsel %vm2435, %v2479, %v2207
        %v2545 = vsel %vm2435, %v2484, %v2208
        %v2546 = vsel %vm2435, %v2489, %v2209
        %v2547 = vsel %vm2435, %v2494, %v2210
        %v2548 = vsel %vm2435, %v2499, %v2211
        %v2549 = vsel %vm2435, %v2504, %v2212
        %v2550 = vsel %vm2435, %v2509, %v2213
        %v2551 = vsel %vm2435, %v2514, %v2214
        %v2552 = vsel %vm2435, %v2519, %v2215
        %v2553 = vsel %vm2435, %v2524, %v2216
        %v2554 = vsel %vm2435, %v2529, %v2217
        %v2555 = vsel %vm2435, %v2534, %v2218
        %2556 = vst [vmem:[%s274] sm:$0xff] %v2536
        %2557 = vst [vmem:[%s274 + $0x8] sm:$0xff] %v2537
        %2558 = vst [vmem:[%s274 + $0x10] sm:$0xff] %v2538
        %2559 = vst [vmem:[%s274 + $0x18] sm:$0xff] %v2539
        %2560 = vst [vmem:[%s274 + $0x20] sm:$0xff] %v2540
        %2561 = vst [vmem:[%s274 + $0x28] sm:$0xff] %v2541
        %2562 = vst [vmem:[%s274 + $0x30] sm:$0xff] %v2542
        %2563 = vst [vmem:[%s274 + $0x38] sm:$0xff] %v2543
        %2564 = vst [vmem:[%s274 + $0x40] sm:$0xff] %v2544
        %2565 = vst [vmem:[%s274 + $0x48] sm:$0xff] %v2545
        %2566 = vst [vmem:[%s274 + $0x50] sm:$0xff] %v2546
        %2567 = vst [vmem:[%s274 + $0x58] sm:$0xff] %v2547
        %2568 = vst [vmem:[%s274 + $0x60] sm:$0xff] %v2548
        %2569 = vst [vmem:[%s274 + $0x68] sm:$0xff] %v2549
        %2570 = vst [vmem:[%s274 + $0x70] sm:$0xff] %v2550
        %2571 = vst [vmem:[%s274 + $0x78] sm:$0xff] %v2551
        %2572 = vst [vmem:[%s274 + $0x80] sm:$0xff] %v2552
        %2573 = vst [vmem:[%s274 + $0x88] sm:$0xff] %v2553
        %2574 = vst [vmem:[%s274 + $0x90] sm:$0xff] %v2554
        %2575 = vst [vmem:[%s274 + $0x98] sm:$0xff] %v2555
        %s2576 = sand.u32 %s183, 1
        %s2577 = scalar_lea.sflag [#allocation5], %s2576
        %s2578 = sand.u32 %s183, 1
        %s2579 = smul.addr %s2578, 160
        %s2580 = scalar_lea.vmem [#allocation4], %s2579
        // Predicated region
        $region53: #{tpu_custom_call.1} parent=47 // pred_check
          %p2581 = pneg %p193
        $region54: #{tpu_custom_call.1} parent=47 // pred_check_branch
          %2583 = sbr.rel (%p2581) target = $region56
        $region55: #{tpu_custom_call.1} parent=47 // pred_region
          %s2584 = smul.u32 20, %s23
          %s2586 = ssub.s32 2560, 2560
          %2587 = vsyncadd %s2577, %s2586
          %s2588 = smul.addr %s2584, 128
          %s2589 = scalar_lea.hbm %s7, %s2588
          %s2590 = sshll.u32 %s2580, 4
          %s2591 = int_to_ptr.vmem [resolvable:$true] %s2590
          %2596 = dma.vmem_to_hbm [thread:$0]  %s2591, 2560, %s2589, %s2577, 128, 128, 8
        $region56: #{tpu_custom_call.1} parent=47 // pred_fallthru
          _
      $region48: #{tpu_custom_call.1} parent=5 // pred_fallthru
        _
      %p2597 = scmp.le.s32.totalorder 2, %s18
      // Predicated region
      $region57: #{tpu_custom_call.1} parent=5 // pred_check
        %p2598 = pneg %p2597
      $region58: #{tpu_custom_call.1} parent=5 // pred_check_branch
        %2600 = sbr.rel (%p2598) target = $region60
      $region59: #{tpu_custom_call.1} parent=5 // pred_region
        %s2601 = ssub.s32 %s18, 2
        // Predicated region
        $region61: #{tpu_custom_call.1} parent=59 // pred_check
          %p2602 = pneg %p199
        $region62: #{tpu_custom_call.1} parent=59 // pred_check_branch
          %2604 = sbr.rel (%p2602) target = $region64
        $region63: #{tpu_custom_call.1} parent=59 // pred_region
          %s2605 = sand.u32 %s184, 1
          %s2606 = scalar_lea.sflag [#allocation5], %s2605
          %s2607 = sand.u32 %s184, 1
          %s2608 = smul.addr %s2607, 160
          %s2609 = scalar_lea.vmem [#allocation4], %s2608
          %2610 = dma.done %s2606, 2560
        $region64: #{tpu_custom_call.1} parent=59 // pred_fallthru
          _
      $region60: #{tpu_custom_call.1} parent=5 // pred_fallthru
        _
    $region6: #{tpu_custom_call.1} parent=1 // loop_footer
      %s22 = sadd.s32 1, %s18
    $region7: #{tpu_custom_call.1} parent=1 // loop_footer_branch
      %17 = sbr.rel target = $region3
    $region8: #{tpu_custom_call.1} parent=1 // loop_exit
      _
    %2611 = vsyncpa [#allocation5], 1
    %s2612 = scalar_lea.sflag [#allocation5], 1
    %2613 = vsyncpa %s2612, 1

</llo_original>
